<compile_context>
chip_gen: v5e
topology: v5e:2x2
jax: 0.10.0
libtpu: 0.0.40
codegen_flags: <defaults>
</compile_context>

<pallas_src>
import jax
import jax.numpy as jnp
from jax.experimental import pallas as pl
from jax.experimental.pallas import tpu as pltpu

# ---------------- static model / problem config (small synthetic shapes) ----
IN_CHANNELS = 16
HIDDEN = 32
OUT_CHANNELS = 1
EDGE_DIM = 8
NUM_LAYERS = 2        # -> NUM_LAYERS - 1 = 1 extra atom GATConv/GRU block
NUM_TIMESTEPS = 2
# dropout = 0.0 at inference -> identity, not emitted

N_GRAPHS = 2
NODES_PER_GRAPH = 8
N_NODES = N_GRAPHS * NODES_PER_GRAPH
N_EDGES = 2 * N_NODES            # bidirectional ring inside each graph

# ---------------- packed-parameter slab layout -------------------------------
# w_slab [128, H]: every weight whose last dim is HIDDEN, row-stacked and padded
# to 8-row (sublane) boundaries so every in-kernel row slice is alignment-free.
ROW_LIN1W = 0        # lin1.weight^T   [IN, H]
ROW_LIN1B = 16       # lin1.bias       [1, H]
ROW_GW1E = 24        # gate_conv.lin1 (edge_attr part)  [ED, H]
ROW_GB = 32          # gate_conv.bias  [1, H]
ROW_AW = 40          # atom_conv.lin   [H, H]
ROW_AB = 72          # atom_conv.bias  [1, H]
ROW_MW = 80          # mol_conv.lin    [H, H]
ROW_MB = 112         # mol_conv.bias   [1, H]
ROW_LIN2B = 120      # lin2.bias       (scalar at lane 0)
W_SLAB_ROWS = 128

# gp_slab [H, 3*128]: GATEConv node-side projections packed per 128-lane slot,
# so the fused (src|dst) gather delivers everything in one matmul.
GP_W1X = 0           # lanes   0: 32   x @ lin1_x
GP_W2 = 128          # lanes 128:160   x @ lin2
GP_ATTR = 256        # lane  256       x @ att_r
GP_LANES = 384

# att_slab [H, 8]: narrow [H,1] projection vectors as columns.
ATT_A_SRC = 0        # atom_conv att_src
ATT_A_DST = 1        # atom_conv att_dst
ATT_G_L = 2          # gate_conv att_l
ATT_M_SRC = 3        # mol_conv att_src
ATT_M_WDST = 4       # pre-folded (mol_conv.lin @ att_dst)
ATT_LIN2W = 5        # lin2.weight^T [H,1]
ATT_LANES = 8

# gru_slab [3*80, 3*128]: 3 GRUCells (gate / atom / mol); gates (r,z,n) packed
# in 128-lane slots.  Per-GRU block rows: Wih 0:32, Whh 32:64, bih 64, bhh 72.
GRU_BLOCK = 2 * HIDDEN + 16      # 80 rows
GRU_GATE, GRU_ATOM, GRU_MOL = 0, 1, 2


# ---------------- in-kernel math helpers ------------------------------------
def _dot(a, b):
    return jnp.dot(a, b, preferred_element_type=jnp.float32)


def _leaky_relu(x, slope=0.01):
    return jnp.where(x > 0, x, slope * x)


def _elu(x):
    return jnp.where(x > 0, x, jnp.exp(x) - 1.0)


def _grouped_softmax(alpha, S, S_t):
    # Softmax of per-row logits alpha [R,1] grouped by one-hot assignment
    # S [R,G] (S_t == S.T).  Per-group max shift for numerical robustness,
    # built from VPU selects + XLU reduces (no transposes, no extra matmuls).
    neg = jnp.float32(-1e30)
    grp_max = jnp.max(jnp.where(S > 0, alpha, neg), axis=0, keepdims=True)  # [1,G]
    shift = jnp.max(jnp.where(S > 0, grp_max, neg), axis=1, keepdims=True)  # [R,1]
    e = jnp.exp(alpha - shift)                                              # [R,1]
    denom = _dot(S_t, e)                                                    # [G,1]
    return e / _dot(S, denom)                                               # [R,1]


def _gru(inp, hid, gru_ref, idx):
    # PyTorch GRUCell semantics with gate-fused weights: 2 MXU dots per call.
    H = HIDDEN
    r0 = idx * GRU_BLOCK
    gi = _dot(inp, gru_ref[r0:r0 + H, :]) + gru_ref[r0 + 2 * H:r0 + 2 * H + 1, :]
    gh = _dot(hid, gru_ref[r0 + H:r0 + 2 * H, :]) + gru_ref[r0 + 2 * H + 8:r0 + 2 * H + 9, :]
    r = jax.nn.sigmoid(gi[:, 0:H] + gh[:, 0:H])
    z = jax.nn.sigmoid(gi[:, 128:128 + H] + gh[:, 128:128 + H])
    n = jnp.tanh(gi[:, 256:256 + H] + r * gh[:, 256:256 + H])
    return (1.0 - z) * n + z * hid


# ---------------- the kernel -------------------------------------------------
def _attentive_fp_kernel(x0_ref, ea_ref, s2_ref, sdstT_ref, b_ref, bT_ref,
                         w_ref, gp_ref, att_ref, gru_ref, out_ref):
    H, E = HIDDEN, N_EDGES
    x0 = x0_ref[...]            # [N, IN]
    ea = ea_ref[...]            # [E, ED]
    s2 = s2_ref[...]            # [2E, N]: rows :E one-hot(src), E: one-hot(dst)
    s_src = s2[:E]
    s_dst = s2[E:]
    s_dst_t = sdstT_ref[...]    # [N, E]
    B = b_ref[...]              # [N, G]
    B_t = bT_ref[...]           # [G, N]

    # ---- atom embedding: x = leaky_relu(lin1(x)) ----
    x = _leaky_relu(_dot(x0, w_ref[ROW_LIN1W:ROW_LIN1W + IN_CHANNELS, :])
                    + w_ref[ROW_LIN1B:ROW_LIN1B + 1, :])                    # [N,H]

    # ---- GATEConv + GRU #1 (transform-before-gather, fused src|dst gather) ----
    xproj = _dot(x, gp_ref[...])                    # [N, 384]
    g2 = _dot(s2, xproj)                            # [2E, 384]
    xw1_j = g2[:E, GP_W1X:GP_W1X + H]               # lin1_x(x)[src]   [E,H]
    xw2_j = g2[:E, GP_W2:GP_W2 + H]                 # lin2(x)[src]     [E,H]
    att_i = g2[E:, GP_ATTR:GP_ATTR + 1]             # (x @ att_r)[dst] [E,1]
    m = _leaky_relu(xw1_j + _dot(ea, w_ref[ROW_GW1E:ROW_GW1E + EDGE_DIM, :]))
    alpha = _leaky_relu(_dot(m, att_ref[:, ATT_G_L:ATT_G_L + 1]) + att_i)   # [E,1]
    alpha = _grouped_softmax(alpha, s_dst, s_dst_t)
    h = _elu(_dot(s_dst_t, xw2_j * alpha) + w_ref[ROW_GB:ROW_GB + 1, :])    # [N,H]
    x = jnp.maximum(_gru(h, x, gru_ref, GRU_GATE), 0.0)

    # ---- atom GATConv + GRU (NUM_LAYERS - 1 == 1 for this config) ----
    xw = _dot(x, w_ref[ROW_AW:ROW_AW + H, :])                               # [N,H]
    a_sd = _dot(xw, att_ref[:, ATT_A_SRC:ATT_A_DST + 1])                    # [N,2]
    sd = _dot(s2, a_sd)                                                     # [2E,2]
    alpha = _leaky_relu(sd[:E, 0:1] + sd[E:, 1:2], 0.01)                    # [E,1]
    alpha = _grouped_softmax(alpha, s_dst, s_dst_t)
    msg = _dot(s_src, xw) * alpha                                           # [E,H]
    h = _elu(_dot(s_dst_t, msg) + w_ref[ROW_AB:ROW_AB + 1, :])              # [N,H]
    x = jnp.maximum(_gru(h, x, gru_ref, GRU_ATOM), 0.0)

    # ---- molecule embedding: global_add_pool + GATConv((x, out)) + GRU ----
    out = jnp.maximum(_dot(B_t, x), 0.0)                                    # [G,H]
    # loop-invariant readout work hoisted out of the timestep loop
    xw_m = _dot(x, w_ref[ROW_MW:ROW_MW + H, :])                             # [N,H]
    a_s = _dot(xw_m, att_ref[:, ATT_M_SRC:ATT_M_SRC + 1])                   # [N,1]
    m_bias = w_ref[ROW_MB:ROW_MB + 1, :]
    for _ in range(NUM_TIMESTEPS):
        a_d = _dot(out, att_ref[:, ATT_M_WDST:ATT_M_WDST + 1])              # [G,1]
        alpha = _leaky_relu(a_s + _dot(B, a_d), 0.01)                       # [N,1]
        alpha = _grouped_softmax(alpha, B, B_t)
        h = _elu(_dot(B_t, xw_m * alpha) + m_bias)                          # [G,H]
        out = jnp.maximum(_gru(h, out, gru_ref, GRU_MOL), 0.0)

    # ---- predictor: lin2(out) ----
    out_ref[...] = (_dot(out, att_ref[:, ATT_LIN2W:ATT_LIN2W + 1])
                    + w_ref[ROW_LIN2B:ROW_LIN2B + 1, 0:1])                  # [G,1]


# ---------------- wrapper ----------------------------------------------------
def attentive_fp_forward(x0, edge_attr, s_src, s_dst, B, packed):
    w_slab, gp_slab, att_slab, gru_slab = packed
    s2 = jnp.concatenate([s_src, s_dst], axis=0)   # fused (src|dst) gather matrix
    s_dst_t = s_dst.T
    B_t = B.T
    arrays = [x0, edge_attr, s2, s_dst_t, B, B_t,
              w_slab, gp_slab, att_slab, gru_slab]
    return pl.pallas_call(
        _attentive_fp_kernel,
        out_shape=jax.ShapeDtypeStruct((N_GRAPHS, OUT_CHANNELS), jnp.float32),
        in_specs=[pl.BlockSpec(memory_space=pltpu.MemorySpace.VMEM)] * len(arrays),
        out_specs=pl.BlockSpec(memory_space=pltpu.MemorySpace.VMEM),
    )(*arrays)


# ---------------- deterministic synthetic graph + parameters -----------------
# TODO(synk): at real molecule-batch scale, replace the dense one-hot scatter
# matrices with scalar-prefetch edge-index gathers and add a "parallel"
# graph-batch grid (v7x 2nd TensorCore / 64 MiB VMEM budget).
def build_graph():
    # two graphs of 8 nodes each; bidirectional ring edges inside each graph
    edges = []
    for g in range(N_GRAPHS):
        base = g * NODES_PER_GRAPH
        for i in range(NODES_PER_GRAPH):
            j = (i + 1) % NODES_PER_GRAPH
            edges.append((base + i, base + j))
            edges.append((base + j, base + i))
    src = jnp.array([e[0] for e in edges], dtype=jnp.int32)
    dst = jnp.array([e[1] for e in edges], dtype=jnp.int32)
    s_src = jax.nn.one_hot(src, N_NODES, dtype=jnp.float32)   # [E, N]
    s_dst = jax.nn.one_hot(dst, N_NODES, dtype=jnp.float32)   # [E, N]
    batch = jnp.repeat(jnp.arange(N_GRAPHS, dtype=jnp.int32), NODES_PER_GRAPH)
    B = jax.nn.one_hot(batch, N_GRAPHS, dtype=jnp.float32)    # [N, G]
    return s_src, s_dst, B, len(edges)


def make_params(key):
    H, I, ED, O = HIDDEN, IN_CHANNELS, EDGE_DIM, OUT_CHANNELS
    shapes = [
        (I, H), (1, H),                                    # lin1 (w, b)
        (H, H), (ED, H), (H, 1), (H, 1), (H, H), (1, H),   # GATEConv
        (3, H, H), (3, H, H), (3, 1, H), (3, 1, H),        # GRU #1
        (H, H), (H, 1), (H, 1), (1, H),                    # atom GATConv
        (3, H, H), (3, H, H), (3, 1, H), (3, 1, H),        # atom GRU
        (H, H), (H, 1), (H, 1), (1, H),                    # mol GATConv
        (3, H, H), (3, H, H), (3, 1, H), (3, 1, H),        # mol GRU
        (H, O), (1, O),                                    # lin2 (w, b)
    ]
    keys = jax.random.split(key, len(shapes))
    params = []
    for k, s in zip(keys, shapes):
        fan_in = max(s[-2], 1)
        params.append(jax.random.normal(k, s, dtype=jnp.float32)
                      / jnp.sqrt(float(fan_in)))
    return params


def _pack_gru_block(wih, whh, bih, bhh):
    blk = jnp.zeros((GRU_BLOCK, GP_LANES), jnp.float32)
    for g in range(3):
        c = g * 128
        blk = blk.at[0:HIDDEN, c:c + HIDDEN].set(wih[g])
        blk = blk.at[HIDDEN:2 * HIDDEN, c:c + HIDDEN].set(whh[g])
        blk = blk.at[2 * HIDDEN, c:c + HIDDEN].set(bih[g, 0])
        blk = blk.at[2 * HIDDEN + 8, c:c + HIDDEN].set(bhh[g, 0])
    return blk


def pack_params(params):
    (lin1_w, lin1_b,
     g_w1x, g_w1e, g_attl, g_attr, g_w2, g_b,
     gru1_wih, gru1_whh, gru1_bih, gru1_bhh,
     a_w, a_asrc, a_adst, a_b,
     agru_wih, agru_whh, agru_bih, agru_bhh,
     m_w, m_asrc, m_adst, m_b,
     mgru_wih, mgru_whh, mgru_bih, mgru_bhh,
     lin2_w, lin2_b) = params
    H = HIDDEN

    w = jnp.zeros((W_SLAB_ROWS, H), jnp.float32)
    w = w.at[ROW_LIN1W:ROW_LIN1W + IN_CHANNELS].set(lin1_w)
    w = w.at[ROW_LIN1B].set(lin1_b[0])
    w = w.at[ROW_GW1E:ROW_GW1E + EDGE_DIM].set(g_w1e)
    w = w.at[ROW_GB].set(g_b[0])
    w = w.at[ROW_AW:ROW_AW + H].set(a_w)
    w = w.at[ROW_AB].set(a_b[0])
    w = w.at[ROW_MW:ROW_MW + H].set(m_w)
    w = w.at[ROW_MB].set(m_b[0])
    w = w.at[ROW_LIN2B, 0].set(lin2_b[0, 0])

    gp = jnp.zeros((H, GP_LANES), jnp.float32)
    gp = gp.at[:, GP_W1X:GP_W1X + H].set(g_w1x)
    gp = gp.at[:, GP_W2:GP_W2 + H].set(g_w2)
    gp = gp.at[:, GP_ATTR:GP_ATTR + 1].set(g_attr)

    att = jnp.zeros((H, ATT_LANES), jnp.float32)
    att = att.at[:, ATT_A_SRC:ATT_A_SRC + 1].set(a_asrc)
    att = att.at[:, ATT_A_DST:ATT_A_DST + 1].set(a_adst)
    att = att.at[:, ATT_G_L:ATT_G_L + 1].set(g_attl)
    att = att.at[:, ATT_M_SRC:ATT_M_SRC + 1].set(m_asrc)
    att = att.at[:, ATT_M_WDST:ATT_M_WDST + 1].set(jnp.dot(m_w, m_adst))
    att = att.at[:, ATT_LIN2W:ATT_LIN2W + 1].set(lin2_w)

    gru = jnp.concatenate([
        _pack_gru_block(gru1_wih, gru1_whh, gru1_bih, gru1_bhh),
        _pack_gru_block(agru_wih, agru_whh, agru_bih, agru_bhh),
        _pack_gru_block(mgru_wih, mgru_whh, mgru_bih, mgru_bhh),
    ], axis=0)

    return w, gp, att, gru


if __name__ == "__main__":
    key = jax.random.PRNGKey(0)
    k_x, k_e, k_p = jax.random.split(key, 3)

    s_src, s_dst, B, n_edges = build_graph()
    assert n_edges == N_EDGES
    x0 = jax.random.normal(k_x, (N_NODES, IN_CHANNELS), dtype=jnp.float32)
    edge_attr = jax.random.normal(k_e, (N_EDGES, EDGE_DIM), dtype=jnp.float32)
    params = make_params(k_p)
    packed = pack_params(params)

    out = jax.jit(attentive_fp_forward)(x0, edge_attr, s_src, s_dst, B, packed)
    out = jax.block_until_ready(out)

    assert out.shape == (N_GRAPHS, OUT_CHANNELS)
    assert bool(jnp.all(jnp.isfinite(out)))
    print("KERNEL_OK")
</pallas_src>

<mosaic_0001>
module attributes {stable_mosaic.version = 11 : i64} {
  func.func @_attentive_fp_kernel(%arg0: memref<16x16xf32, #tpu.memory_space<vmem>>, %arg1: memref<32x8xf32, #tpu.memory_space<vmem>>, %arg2: memref<64x16xf32, #tpu.memory_space<vmem>>, %arg3: memref<16x32xf32, #tpu.memory_space<vmem>>, %arg4: memref<16x2xf32, #tpu.memory_space<vmem>>, %arg5: memref<2x16xf32, #tpu.memory_space<vmem>>, %arg6: memref<128x32xf32, #tpu.memory_space<vmem>>, %arg7: memref<32x384xf32, #tpu.memory_space<vmem>>, %arg8: memref<32x8xf32, #tpu.memory_space<vmem>>, %arg9: memref<240x384xf32, #tpu.memory_space<vmem>>, %arg10: memref<2x1xf32, #tpu.memory_space<vmem>>) attributes {dimension_semantics = [], scalar_prefetch = 0 : i64, scratch_operands = 0 : i64, tpu.core_type = #tpu.core_type<tc>} {
    %c0 = arith.constant 0 : index
    %c0_0 = arith.constant 0 : index
    %0 = vector.load %arg0[%c0, %c0_0] : memref<16x16xf32, #tpu.memory_space<vmem>>, vector<16x16xf32>
    %c0_1 = arith.constant 0 : index
    %c0_2 = arith.constant 0 : index
    %1 = vector.load %arg1[%c0_1, %c0_2] : memref<32x8xf32, #tpu.memory_space<vmem>>, vector<32x8xf32>
    %c0_3 = arith.constant 0 : index
    %c0_4 = arith.constant 0 : index
    %2 = vector.load %arg2[%c0_3, %c0_4] : memref<64x16xf32, #tpu.memory_space<vmem>>, vector<64x16xf32>
    %3 = vector.extract_strided_slice %2 {offsets = [0, 0], sizes = [32, 16], strides = [1, 1]} : vector<64x16xf32> to vector<32x16xf32>
    %4 = vector.extract_strided_slice %2 {offsets = [32, 0], sizes = [32, 16], strides = [1, 1]} : vector<64x16xf32> to vector<32x16xf32>
    %c0_5 = arith.constant 0 : index
    %c0_6 = arith.constant 0 : index
    %5 = vector.load %arg3[%c0_5, %c0_6] : memref<16x32xf32, #tpu.memory_space<vmem>>, vector<16x32xf32>
    %c0_7 = arith.constant 0 : index
    %c0_8 = arith.constant 0 : index
    %6 = vector.load %arg4[%c0_7, %c0_8] : memref<16x2xf32, #tpu.memory_space<vmem>>, vector<16x2xf32>
    %c0_9 = arith.constant 0 : index
    %c0_10 = arith.constant 0 : index
    %7 = vector.load %arg5[%c0_9, %c0_10] : memref<2x16xf32, #tpu.memory_space<vmem>>, vector<2x16xf32>
    %c0_11 = arith.constant 0 : index
    %c0_12 = arith.constant 0 : index
    %8 = vector.load %arg6[%c0_11, %c0_12] : memref<128x32xf32, #tpu.memory_space<vmem>>, vector<16x32xf32>
    %cst = arith.constant dense<0.000000e+00> : vector<16x32xf32>
    %9 = tpu.matmul %0, %8, %cst {dimension_numbers = #tpu.dot_dimension_numbers<[1], [0], [0], [1], [0, 0, 1, 1], [], []>} : vector<16x16xf32>, vector<16x32xf32>, vector<16x32xf32> -> vector<16x32xf32>
    %c16 = arith.constant 16 : index
    %c0_13 = arith.constant 0 : index
    %10 = vector.load %arg6[%c16, %c0_13] : memref<128x32xf32, #tpu.memory_space<vmem>>, vector<1x32xf32>
    %11 = vector.broadcast %10 : vector<1x32xf32> to vector<16x32xf32>
    %12 = arith.addf %9, %11 : vector<16x32xf32>
    %cst_14 = arith.constant 0.000000e+00 : f32
    %13 = vector.broadcast %cst_14 : f32 to vector<16x32xf32>
    %14 = arith.cmpf ogt, %12, %13 : vector<16x32xf32>
    %cst_15 = arith.constant 0.00999999977 : f32
    %15 = vector.broadcast %cst_15 : f32 to vector<16x32xf32>
    %16 = arith.mulf %15, %12 : vector<16x32xf32>
    %17 = arith.select %14, %12, %16 : vector<16x32xi1>, vector<16x32xf32>
    %c0_16 = arith.constant 0 : index
    %c0_17 = arith.constant 0 : index
    %18 = vector.load %arg7[%c0_16, %c0_17] : memref<32x384xf32, #tpu.memory_space<vmem>>, vector<32x384xf32>
    %cst_18 = arith.constant dense<0.000000e+00> : vector<16x384xf32>
    %19 = tpu.matmul %17, %18, %cst_18 {dimension_numbers = #tpu.dot_dimension_numbers<[1], [0], [0], [1], [0, 0, 1, 1], [], []>} : vector<16x32xf32>, vector<32x384xf32>, vector<16x384xf32> -> vector<16x384xf32>
    %cst_19 = arith.constant dense<0.000000e+00> : vector<64x384xf32>
    %20 = tpu.matmul %2, %19, %cst_19 {dimension_numbers = #tpu.dot_dimension_numbers<[1], [0], [0], [1], [0, 0, 1, 1], [], []>} : vector<64x16xf32>, vector<16x384xf32>, vector<64x384xf32> -> vector<64x384xf32>
    %21 = vector.extract_strided_slice %20 {offsets = [0, 0], sizes = [32, 32], strides = [1, 1]} : vector<64x384xf32> to vector<32x32xf32>
    %22 = vector.extract_strided_slice %20 {offsets = [0, 128], sizes = [32, 32], strides = [1, 1]} : vector<64x384xf32> to vector<32x32xf32>
    %23 = vector.extract_strided_slice %20 {offsets = [32, 256], sizes = [32, 1], strides = [1, 1]} : vector<64x384xf32> to vector<32x1xf32>
    %c24 = arith.constant 24 : index
    %c0_20 = arith.constant 0 : index
    %24 = vector.load %arg6[%c24, %c0_20] : memref<128x32xf32, #tpu.memory_space<vmem>>, vector<8x32xf32>
    %cst_21 = arith.constant dense<0.000000e+00> : vector<32x32xf32>
    %25 = tpu.matmul %1, %24, %cst_21 {dimension_numbers = #tpu.dot_dimension_numbers<[1], [0], [0], [1], [0, 0, 1, 1], [], []>} : vector<32x8xf32>, vector<8x32xf32>, vector<32x32xf32> -> vector<32x32xf32>
    %26 = arith.addf %21, %25 : vector<32x32xf32>
    %cst_22 = arith.constant 0.000000e+00 : f32
    %27 = vector.broadcast %cst_22 : f32 to vector<32x32xf32>
    %28 = arith.cmpf ogt, %26, %27 : vector<32x32xf32>
    %cst_23 = arith.constant 0.00999999977 : f32
    %29 = vector.broadcast %cst_23 : f32 to vector<32x32xf32>
    %30 = arith.mulf %29, %26 : vector<32x32xf32>
    %31 = arith.select %28, %26, %30 : vector<32x32xi1>, vector<32x32xf32>
    %c0_24 = arith.constant 0 : index
    %c2 = arith.constant 2 : index
    %32 = vector.load %arg8[%c0_24, %c2] : memref<32x8xf32, #tpu.memory_space<vmem>>, vector<32x1xf32>
    %cst_25 = arith.constant dense<0.000000e+00> : vector<32x1xf32>
    %33 = tpu.matmul %31, %32, %cst_25 {dimension_numbers = #tpu.dot_dimension_numbers<[1], [0], [0], [1], [0, 0, 1, 1], [], []>} : vector<32x32xf32>, vector<32x1xf32>, vector<32x1xf32> -> vector<32x1xf32>
    %34 = arith.addf %33, %23 : vector<32x1xf32>
    %cst_26 = arith.constant 0.000000e+00 : f32
    %35 = vector.broadcast %cst_26 : f32 to vector<32x1xf32>
    %36 = arith.cmpf ogt, %34, %35 : vector<32x1xf32>
    %cst_27 = arith.constant 0.00999999977 : f32
    %37 = vector.broadcast %cst_27 : f32 to vector<32x1xf32>
    %38 = arith.mulf %37, %34 : vector<32x1xf32>
    %39 = arith.select %36, %34, %38 : vector<32x1xi1>, vector<32x1xf32>
    %cst_28 = arith.constant 0.000000e+00 : f32
    %40 = vector.broadcast %cst_28 : f32 to vector<32x16xf32>
    %41 = arith.cmpf ogt, %4, %40 : vector<32x16xf32>
    %cst_29 = arith.constant -1.000000e+30 : f32
    %42 = vector.shape_cast %39 : vector<32x1xf32> to vector<32x1xf32>
    %43 = vector.broadcast %42 : vector<32x1xf32> to vector<32x16xf32>
    %44 = vector.broadcast %cst_29 : f32 to vector<32x16xf32>
    %45 = arith.select %41, %43, %44 : vector<32x16xi1>, vector<32x16xf32>
    %cst_30 = arith.constant dense<0xFF800000> : vector<16xf32>
    %46 = vector.multi_reduction <maximumf>, %45, %cst_30 [0] : vector<32x16xf32> to vector<16xf32>
    %47 = vector.shape_cast %46 : vector<16xf32> to vector<1x16xf32>
    %cst_31 = arith.constant 0.000000e+00 : f32
    %48 = vector.broadcast %cst_31 : f32 to vector<32x16xf32>
    %49 = arith.cmpf ogt, %4, %48 : vector<32x16xf32>
    %cst_32 = arith.constant -1.000000e+30 : f32
    %50 = vector.shape_cast %47 : vector<1x16xf32> to vector<1x16xf32>
    %51 = vector.broadcast %50 : vector<1x16xf32> to vector<32x16xf32>
    %52 = vector.broadcast %cst_32 : f32 to vector<32x16xf32>
    %53 = arith.select %49, %51, %52 : vector<32x16xi1>, vector<32x16xf32>
    %cst_33 = arith.constant dense<0xFF800000> : vector<32xf32>
    %54 = vector.multi_reduction <maximumf>, %53, %cst_33 [1] : vector<32x16xf32> to vector<32xf32>
    %55 = vector.shape_cast %54 : vector<32xf32> to vector<32x1xf32>
    %56 = arith.subf %39, %55 : vector<32x1xf32>
    %57 = math.exp %56 : vector<32x1xf32>
    %cst_34 = arith.constant dense<0.000000e+00> : vector<16x1xf32>
    %58 = tpu.matmul %5, %57, %cst_34 {dimension_numbers = #tpu.dot_dimension_numbers<[1], [0], [0], [1], [0, 0, 1, 1], [], []>} : vector<16x32xf32>, vector<32x1xf32>, vector<16x1xf32> -> vector<16x1xf32>
    %cst_35 = arith.constant dense<0.000000e+00> : vector<32x1xf32>
    %59 = tpu.matmul %4, %58, %cst_35 {dimension_numbers = #tpu.dot_dimension_numbers<[1], [0], [0], [1], [0, 0, 1, 1], [], []>} : vector<32x16xf32>, vector<16x1xf32>, vector<32x1xf32> -> vector<32x1xf32>
    %60 = arith.divf %57, %59 : vector<32x1xf32>
    %61 = vector.broadcast %60 : vector<32x1xf32> to vector<32x32xf32>
    %62 = arith.mulf %22, %61 : vector<32x32xf32>
    %cst_36 = arith.constant dense<0.000000e+00> : vector<16x32xf32>
    %63 = tpu.matmul %5, %62, %cst_36 {dimension_numbers = #tpu.dot_dimension_numbers<[1], [0], [0], [1], [0, 0, 1, 1], [], []>} : vector<16x32xf32>, vector<32x32xf32>, vector<16x32xf32> -> vector<16x32xf32>
    %c32 = arith.constant 32 : index
    %c0_37 = arith.constant 0 : index
    %64 = vector.load %arg6[%c32, %c0_37] : memref<128x32xf32, #tpu.memory_space<vmem>>, vector<1x32xf32>
    %65 = vector.broadcast %64 : vector<1x32xf32> to vector<16x32xf32>
    %66 = arith.addf %63, %65 : vector<16x32xf32>
    %cst_38 = arith.constant 0.000000e+00 : f32
    %67 = vector.broadcast %cst_38 : f32 to vector<16x32xf32>
    %68 = arith.cmpf ogt, %66, %67 : vector<16x32xf32>
    %69 = math.exp %66 : vector<16x32xf32>
    %cst_39 = arith.constant 1.000000e+00 : f32
    %70 = vector.broadcast %cst_39 : f32 to vector<16x32xf32>
    %71 = arith.subf %69, %70 : vector<16x32xf32>
    %72 = arith.select %68, %66, %71 : vector<16x32xi1>, vector<16x32xf32>
    %c0_40 = arith.constant 0 : index
    %c0_41 = arith.constant 0 : index
    %73 = vector.load %arg9[%c0_40, %c0_41] : memref<240x384xf32, #tpu.memory_space<vmem>>, vector<32x384xf32>
    %cst_42 = arith.constant dense<0.000000e+00> : vector<16x384xf32>
    %74 = tpu.matmul %72, %73, %cst_42 {dimension_numbers = #tpu.dot_dimension_numbers<[1], [0], [0], [1], [0, 0, 1, 1], [], []>} : vector<16x32xf32>, vector<32x384xf32>, vector<16x384xf32> -> vector<16x384xf32>
    %c64 = arith.constant 64 : index
    %c0_43 = arith.constant 0 : index
    %75 = vector.load %arg9[%c64, %c0_43] : memref<240x384xf32, #tpu.memory_space<vmem>>, vector<1x384xf32>
    %76 = vector.broadcast %75 : vector<1x384xf32> to vector<16x384xf32>
    %77 = arith.addf %74, %76 : vector<16x384xf32>
    %c32_44 = arith.constant 32 : index
    %c0_45 = arith.constant 0 : index
    %78 = vector.load %arg9[%c32_44, %c0_45] : memref<240x384xf32, #tpu.memory_space<vmem>>, vector<32x384xf32>
    %cst_46 = arith.constant dense<0.000000e+00> : vector<16x384xf32>
    %79 = tpu.matmul %17, %78, %cst_46 {dimension_numbers = #tpu.dot_dimension_numbers<[1], [0], [0], [1], [0, 0, 1, 1], [], []>} : vector<16x32xf32>, vector<32x384xf32>, vector<16x384xf32> -> vector<16x384xf32>
    %c72 = arith.constant 72 : index
    %c0_47 = arith.constant 0 : index
    %80 = vector.load %arg9[%c72, %c0_47] : memref<240x384xf32, #tpu.memory_space<vmem>>, vector<1x384xf32>
    %81 = vector.broadcast %80 : vector<1x384xf32> to vector<16x384xf32>
    %82 = arith.addf %79, %81 : vector<16x384xf32>
    %83 = vector.extract_strided_slice %77 {offsets = [0, 0], sizes = [16, 32], strides = [1, 1]} : vector<16x384xf32> to vector<16x32xf32>
    %84 = vector.extract_strided_slice %82 {offsets = [0, 0], sizes = [16, 32], strides = [1, 1]} : vector<16x384xf32> to vector<16x32xf32>
    %85 = arith.addf %83, %84 : vector<16x32xf32>
    %86 = arith.negf %85 : vector<16x32xf32>
    %87 = math.exp %86 : vector<16x32xf32>
    %cst_48 = arith.constant 1.000000e+00 : f32
    %88 = vector.broadcast %cst_48 : f32 to vector<16x32xf32>
    %89 = arith.addf %88, %87 : vector<16x32xf32>
    %90 = arith.divf %88, %89 : vector<16x32xf32>
    %91 = vector.extract_strided_slice %77 {offsets = [0, 128], sizes = [16, 32], strides = [1, 1]} : vector<16x384xf32> to vector<16x32xf32>
    %92 = vector.extract_strided_slice %82 {offsets = [0, 128], sizes = [16, 32], strides = [1, 1]} : vector<16x384xf32> to vector<16x32xf32>
    %93 = arith.addf %91, %92 : vector<16x32xf32>
    %94 = arith.negf %93 : vector<16x32xf32>
    %95 = math.exp %94 : vector<16x32xf32>
    %cst_49 = arith.constant 1.000000e+00 : f32
    %96 = vector.broadcast %cst_49 : f32 to vector<16x32xf32>
    %97 = arith.addf %96, %95 : vector<16x32xf32>
    %98 = arith.divf %96, %97 : vector<16x32xf32>
    %99 = vector.extract_strided_slice %77 {offsets = [0, 256], sizes = [16, 32], strides = [1, 1]} : vector<16x384xf32> to vector<16x32xf32>
    %100 = vector.extract_strided_slice %82 {offsets = [0, 256], sizes = [16, 32], strides = [1, 1]} : vector<16x384xf32> to vector<16x32xf32>
    %101 = arith.mulf %90, %100 : vector<16x32xf32>
    %102 = arith.addf %99, %101 : vector<16x32xf32>
    %103 = math.tanh %102 : vector<16x32xf32>
    %cst_50 = arith.constant 1.000000e+00 : f32
    %104 = vector.broadcast %cst_50 : f32 to vector<16x32xf32>
    %105 = arith.subf %104, %98 : vector<16x32xf32>
    %106 = arith.mulf %105, %103 : vector<16x32xf32>
    %107 = arith.mulf %98, %17 : vector<16x32xf32>
    %108 = arith.addf %106, %107 : vector<16x32xf32>
    %cst_51 = arith.constant 0.000000e+00 : f32
    %109 = vector.broadcast %cst_51 : f32 to vector<16x32xf32>
    %110 = arith.maximumf %108, %109 : vector<16x32xf32>
    %c40 = arith.constant 40 : index
    %c0_52 = arith.constant 0 : index
    %111 = vector.load %arg6[%c40, %c0_52] : memref<128x32xf32, #tpu.memory_space<vmem>>, vector<32x32xf32>
    %cst_53 = arith.constant dense<0.000000e+00> : vector<16x32xf32>
    %112 = tpu.matmul %110, %111, %cst_53 {dimension_numbers = #tpu.dot_dimension_numbers<[1], [0], [0], [1], [0, 0, 1, 1], [], []>} : vector<16x32xf32>, vector<32x32xf32>, vector<16x32xf32> -> vector<16x32xf32>
    %c0_54 = arith.constant 0 : index
    %c0_55 = arith.constant 0 : index
    %113 = vector.load %arg8[%c0_54, %c0_55] : memref<32x8xf32, #tpu.memory_space<vmem>>, vector<32x2xf32>
    %cst_56 = arith.constant dense<0.000000e+00> : vector<16x2xf32>
    %114 = tpu.matmul %112, %113, %cst_56 {dimension_numbers = #tpu.dot_dimension_numbers<[1], [0], [0], [1], [0, 0, 1, 1], [], []>} : vector<16x32xf32>, vector<32x2xf32>, vector<16x2xf32> -> vector<16x2xf32>
    %cst_57 = arith.constant dense<0.000000e+00> : vector<64x2xf32>
    %115 = tpu.matmul %2, %114, %cst_57 {dimension_numbers = #tpu.dot_dimension_numbers<[1], [0], [0], [1], [0, 0, 1, 1], [], []>} : vector<64x16xf32>, vector<16x2xf32>, vector<64x2xf32> -> vector<64x2xf32>
    %116 = vector.extract_strided_slice %115 {offsets = [0, 0], sizes = [32, 1], strides = [1, 1]} : vector<64x2xf32> to vector<32x1xf32>
    %117 = vector.extract_strided_slice %115 {offsets = [32, 1], sizes = [32, 1], strides = [1, 1]} : vector<64x2xf32> to vector<32x1xf32>
    %118 = arith.addf %116, %117 : vector<32x1xf32>
    %cst_58 = arith.constant 0.000000e+00 : f32
    %119 = vector.broadcast %cst_58 : f32 to vector<32x1xf32>
    %120 = arith.cmpf ogt, %118, %119 : vector<32x1xf32>
    %cst_59 = arith.constant 0.00999999977 : f32
    %121 = vector.broadcast %cst_59 : f32 to vector<32x1xf32>
    %122 = arith.mulf %121, %118 : vector<32x1xf32>
    %123 = arith.select %120, %118, %122 : vector<32x1xi1>, vector<32x1xf32>
    %cst_60 = arith.constant 0.000000e+00 : f32
    %124 = vector.broadcast %cst_60 : f32 to vector<32x16xf32>
    %125 = arith.cmpf ogt, %4, %124 : vector<32x16xf32>
    %cst_61 = arith.constant -1.000000e+30 : f32
    %126 = vector.shape_cast %123 : vector<32x1xf32> to vector<32x1xf32>
    %127 = vector.broadcast %126 : vector<32x1xf32> to vector<32x16xf32>
    %128 = vector.broadcast %cst_61 : f32 to vector<32x16xf32>
    %129 = arith.select %125, %127, %128 : vector<32x16xi1>, vector<32x16xf32>
    %cst_62 = arith.constant dense<0xFF800000> : vector<16xf32>
    %130 = vector.multi_reduction <maximumf>, %129, %cst_62 [0] : vector<32x16xf32> to vector<16xf32>
    %131 = vector.shape_cast %130 : vector<16xf32> to vector<1x16xf32>
    %cst_63 = arith.constant 0.000000e+00 : f32
    %132 = vector.broadcast %cst_63 : f32 to vector<32x16xf32>
    %133 = arith.cmpf ogt, %4, %132 : vector<32x16xf32>
    %cst_64 = arith.constant -1.000000e+30 : f32
    %134 = vector.shape_cast %131 : vector<1x16xf32> to vector<1x16xf32>
    %135 = vector.broadcast %134 : vector<1x16xf32> to vector<32x16xf32>
    %136 = vector.broadcast %cst_64 : f32 to vector<32x16xf32>
    %137 = arith.select %133, %135, %136 : vector<32x16xi1>, vector<32x16xf32>
    %cst_65 = arith.constant dense<0xFF800000> : vector<32xf32>
    %138 = vector.multi_reduction <maximumf>, %137, %cst_65 [1] : vector<32x16xf32> to vector<32xf32>
    %139 = vector.shape_cast %138 : vector<32xf32> to vector<32x1xf32>
    %140 = arith.subf %123, %139 : vector<32x1xf32>
    %141 = math.exp %140 : vector<32x1xf32>
    %cst_66 = arith.constant dense<0.000000e+00> : vector<16x1xf32>
    %142 = tpu.matmul %5, %141, %cst_66 {dimension_numbers = #tpu.dot_dimension_numbers<[1], [0], [0], [1], [0, 0, 1, 1], [], []>} : vector<16x32xf32>, vector<32x1xf32>, vector<16x1xf32> -> vector<16x1xf32>
    %cst_67 = arith.constant dense<0.000000e+00> : vector<32x1xf32>
    %143 = tpu.matmul %4, %142, %cst_67 {dimension_numbers = #tpu.dot_dimension_numbers<[1], [0], [0], [1], [0, 0, 1, 1], [], []>} : vector<32x16xf32>, vector<16x1xf32>, vector<32x1xf32> -> vector<32x1xf32>
    %144 = arith.divf %141, %143 : vector<32x1xf32>
    %cst_68 = arith.constant dense<0.000000e+00> : vector<32x32xf32>
    %145 = tpu.matmul %3, %112, %cst_68 {dimension_numbers = #tpu.dot_dimension_numbers<[1], [0], [0], [1], [0, 0, 1, 1], [], []>} : vector<32x16xf32>, vector<16x32xf32>, vector<32x32xf32> -> vector<32x32xf32>
    %146 = vector.broadcast %144 : vector<32x1xf32> to vector<32x32xf32>
    %147 = arith.mulf %145, %146 : vector<32x32xf32>
    %cst_69 = arith.constant dense<0.000000e+00> : vector<16x32xf32>
    %148 = tpu.matmul %5, %147, %cst_69 {dimension_numbers = #tpu.dot_dimension_numbers<[1], [0], [0], [1], [0, 0, 1, 1], [], []>} : vector<16x32xf32>, vector<32x32xf32>, vector<16x32xf32> -> vector<16x32xf32>
    %c72_70 = arith.constant 72 : index
    %c0_71 = arith.constant 0 : index
    %149 = vector.load %arg6[%c72_70, %c0_71] : memref<128x32xf32, #tpu.memory_space<vmem>>, vector<1x32xf32>
    %150 = vector.broadcast %149 : vector<1x32xf32> to vector<16x32xf32>
    %151 = arith.addf %148, %150 : vector<16x32xf32>
    %cst_72 = arith.constant 0.000000e+00 : f32
    %152 = vector.broadcast %cst_72 : f32 to vector<16x32xf32>
    %153 = arith.cmpf ogt, %151, %152 : vector<16x32xf32>
    %154 = math.exp %151 : vector<16x32xf32>
    %cst_73 = arith.constant 1.000000e+00 : f32
    %155 = vector.broadcast %cst_73 : f32 to vector<16x32xf32>
    %156 = arith.subf %154, %155 : vector<16x32xf32>
    %157 = arith.select %153, %151, %156 : vector<16x32xi1>, vector<16x32xf32>
    %c80 = arith.constant 80 : index
    %c0_74 = arith.constant 0 : index
    %158 = vector.load %arg9[%c80, %c0_74] : memref<240x384xf32, #tpu.memory_space<vmem>>, vector<32x384xf32>
    %cst_75 = arith.constant dense<0.000000e+00> : vector<16x384xf32>
    %159 = tpu.matmul %157, %158, %cst_75 {dimension_numbers = #tpu.dot_dimension_numbers<[1], [0], [0], [1], [0, 0, 1, 1], [], []>} : vector<16x32xf32>, vector<32x384xf32>, vector<16x384xf32> -> vector<16x384xf32>
    %c144 = arith.constant 144 : index
    %c0_76 = arith.constant 0 : index
    %160 = vector.load %arg9[%c144, %c0_76] : memref<240x384xf32, #tpu.memory_space<vmem>>, vector<1x384xf32>
    %161 = vector.broadcast %160 : vector<1x384xf32> to vector<16x384xf32>
    %162 = arith.addf %159, %161 : vector<16x384xf32>
    %c112 = arith.constant 112 : index
    %c0_77 = arith.constant 0 : index
    %163 = vector.load %arg9[%c112, %c0_77] : memref<240x384xf32, #tpu.memory_space<vmem>>, vector<32x384xf32>
    %cst_78 = arith.constant dense<0.000000e+00> : vector<16x384xf32>
    %164 = tpu.matmul %110, %163, %cst_78 {dimension_numbers = #tpu.dot_dimension_numbers<[1], [0], [0], [1], [0, 0, 1, 1], [], []>} : vector<16x32xf32>, vector<32x384xf32>, vector<16x384xf32> -> vector<16x384xf32>
    %c152 = arith.constant 152 : index
    %c0_79 = arith.constant 0 : index
    %165 = vector.load %arg9[%c152, %c0_79] : memref<240x384xf32, #tpu.memory_space<vmem>>, vector<1x384xf32>
    %166 = vector.broadcast %165 : vector<1x384xf32> to vector<16x384xf32>
    %167 = arith.addf %164, %166 : vector<16x384xf32>
    %168 = vector.extract_strided_slice %162 {offsets = [0, 0], sizes = [16, 32], strides = [1, 1]} : vector<16x384xf32> to vector<16x32xf32>
    %169 = vector.extract_strided_slice %167 {offsets = [0, 0], sizes = [16, 32], strides = [1, 1]} : vector<16x384xf32> to vector<16x32xf32>
    %170 = arith.addf %168, %169 : vector<16x32xf32>
    %171 = arith.negf %170 : vector<16x32xf32>
    %172 = math.exp %171 : vector<16x32xf32>
    %cst_80 = arith.constant 1.000000e+00 : f32
    %173 = vector.broadcast %cst_80 : f32 to vector<16x32xf32>
    %174 = arith.addf %173, %172 : vector<16x32xf32>
    %175 = arith.divf %173, %174 : vector<16x32xf32>
    %176 = vector.extract_strided_slice %162 {offsets = [0, 128], sizes = [16, 32], strides = [1, 1]} : vector<16x384xf32> to vector<16x32xf32>
    %177 = vector.extract_strided_slice %167 {offsets = [0, 128], sizes = [16, 32], strides = [1, 1]} : vector<16x384xf32> to vector<16x32xf32>
    %178 = arith.addf %176, %177 : vector<16x32xf32>
    %179 = arith.negf %178 : vector<16x32xf32>
    %180 = math.exp %179 : vector<16x32xf32>
    %cst_81 = arith.constant 1.000000e+00 : f32
    %181 = vector.broadcast %cst_81 : f32 to vector<16x32xf32>
    %182 = arith.addf %181, %180 : vector<16x32xf32>
    %183 = arith.divf %181, %182 : vector<16x32xf32>
    %184 = vector.extract_strided_slice %162 {offsets = [0, 256], sizes = [16, 32], strides = [1, 1]} : vector<16x384xf32> to vector<16x32xf32>
    %185 = vector.extract_strided_slice %167 {offsets = [0, 256], sizes = [16, 32], strides = [1, 1]} : vector<16x384xf32> to vector<16x32xf32>
    %186 = arith.mulf %175, %185 : vector<16x32xf32>
    %187 = arith.addf %184, %186 : vector<16x32xf32>
    %188 = math.tanh %187 : vector<16x32xf32>
    %cst_82 = arith.constant 1.000000e+00 : f32
    %189 = vector.broadcast %cst_82 : f32 to vector<16x32xf32>
    %190 = arith.subf %189, %183 : vector<16x32xf32>
    %191 = arith.mulf %190, %188 : vector<16x32xf32>
    %192 = arith.mulf %183, %110 : vector<16x32xf32>
    %193 = arith.addf %191, %192 : vector<16x32xf32>
    %cst_83 = arith.constant 0.000000e+00 : f32
    %194 = vector.broadcast %cst_83 : f32 to vector<16x32xf32>
    %195 = arith.maximumf %193, %194 : vector<16x32xf32>
    %cst_84 = arith.constant dense<0.000000e+00> : vector<2x32xf32>
    %196 = tpu.matmul %7, %195, %cst_84 {dimension_numbers = #tpu.dot_dimension_numbers<[1], [0], [0], [1], [0, 0, 1, 1], [], []>} : vector<2x16xf32>, vector<16x32xf32>, vector<2x32xf32> -> vector<2x32xf32>
    %cst_85 = arith.constant 0.000000e+00 : f32
    %197 = vector.broadcast %cst_85 : f32 to vector<2x32xf32>
    %198 = arith.maximumf %196, %197 : vector<2x32xf32>
    %c80_86 = arith.constant 80 : index
    %c0_87 = arith.constant 0 : index
    %199 = vector.load %arg6[%c80_86, %c0_87] : memref<128x32xf32, #tpu.memory_space<vmem>>, vector<32x32xf32>
    %cst_88 = arith.constant dense<0.000000e+00> : vector<16x32xf32>
    %200 = tpu.matmul %195, %199, %cst_88 {dimension_numbers = #tpu.dot_dimension_numbers<[1], [0], [0], [1], [0, 0, 1, 1], [], []>} : vector<16x32xf32>, vector<32x32xf32>, vector<16x32xf32> -> vector<16x32xf32>
    %c0_89 = arith.constant 0 : index
    %c3 = arith.constant 3 : index
    %201 = vector.load %arg8[%c0_89, %c3] : memref<32x8xf32, #tpu.memory_space<vmem>>, vector<32x1xf32>
    %cst_90 = arith.constant dense<0.000000e+00> : vector<16x1xf32>
    %202 = tpu.matmul %200, %201, %cst_90 {dimension_numbers = #tpu.dot_dimension_numbers<[1], [0], [0], [1], [0, 0, 1, 1], [], []>} : vector<16x32xf32>, vector<32x1xf32>, vector<16x1xf32> -> vector<16x1xf32>
    %c112_91 = arith.constant 112 : index
    %c0_92 = arith.constant 0 : index
    %203 = vector.load %arg6[%c112_91, %c0_92] : memref<128x32xf32, #tpu.memory_space<vmem>>, vector<1x32xf32>
    %c0_93 = arith.constant 0 : index
    %c4 = arith.constant 4 : index
    %204 = vector.load %arg8[%c0_93, %c4] : memref<32x8xf32, #tpu.memory_space<vmem>>, vector<32x1xf32>
    %cst_94 = arith.constant dense<0.000000e+00> : vector<2x1xf32>
    %205 = tpu.matmul %198, %204, %cst_94 {dimension_numbers = #tpu.dot_dimension_numbers<[1], [0], [0], [1], [0, 0, 1, 1], [], []>} : vector<2x32xf32>, vector<32x1xf32>, vector<2x1xf32> -> vector<2x1xf32>
    %cst_95 = arith.constant dense<0.000000e+00> : vector<16x1xf32>
    %206 = tpu.matmul %6, %205, %cst_95 {dimension_numbers = #tpu.dot_dimension_numbers<[1], [0], [0], [1], [0, 0, 1, 1], [], []>} : vector<16x2xf32>, vector<2x1xf32>, vector<16x1xf32> -> vector<16x1xf32>
    %207 = arith.addf %202, %206 : vector<16x1xf32>
    %cst_96 = arith.constant 0.000000e+00 : f32
    %208 = vector.broadcast %cst_96 : f32 to vector<16x1xf32>
    %209 = arith.cmpf ogt, %207, %208 : vector<16x1xf32>
    %cst_97 = arith.constant 0.00999999977 : f32
    %210 = vector.broadcast %cst_97 : f32 to vector<16x1xf32>
    %211 = arith.mulf %210, %207 : vector<16x1xf32>
    %212 = arith.select %209, %207, %211 : vector<16x1xi1>, vector<16x1xf32>
    %cst_98 = arith.constant 0.000000e+00 : f32
    %213 = vector.broadcast %cst_98 : f32 to vector<16x2xf32>
    %214 = arith.cmpf ogt, %6, %213 : vector<16x2xf32>
    %cst_99 = arith.constant -1.000000e+30 : f32
    %215 = vector.shape_cast %212 : vector<16x1xf32> to vector<16x1xf32>
    %216 = vector.broadcast %215 : vector<16x1xf32> to vector<16x2xf32>
    %217 = vector.broadcast %cst_99 : f32 to vector<16x2xf32>
    %218 = arith.select %214, %216, %217 : vector<16x2xi1>, vector<16x2xf32>
    %cst_100 = arith.constant dense<0xFF800000> : vector<2xf32>
    %219 = vector.multi_reduction <maximumf>, %218, %cst_100 [0] : vector<16x2xf32> to vector<2xf32>
    %220 = vector.shape_cast %219 : vector<2xf32> to vector<1x2xf32>
    %cst_101 = arith.constant 0.000000e+00 : f32
    %221 = vector.broadcast %cst_101 : f32 to vector<16x2xf32>
    %222 = arith.cmpf ogt, %6, %221 : vector<16x2xf32>
    %cst_102 = arith.constant -1.000000e+30 : f32
    %223 = vector.shape_cast %220 : vector<1x2xf32> to vector<1x2xf32>
    %224 = vector.broadcast %223 : vector<1x2xf32> to vector<16x2xf32>
    %225 = vector.broadcast %cst_102 : f32 to vector<16x2xf32>
    %226 = arith.select %222, %224, %225 : vector<16x2xi1>, vector<16x2xf32>
    %cst_103 = arith.constant dense<0xFF800000> : vector<16xf32>
    %227 = vector.multi_reduction <maximumf>, %226, %cst_103 [1] : vector<16x2xf32> to vector<16xf32>
    %228 = vector.shape_cast %227 : vector<16xf32> to vector<16x1xf32>
    %229 = arith.subf %212, %228 : vector<16x1xf32>
    %230 = math.exp %229 : vector<16x1xf32>
    %cst_104 = arith.constant dense<0.000000e+00> : vector<2x1xf32>
    %231 = tpu.matmul %7, %230, %cst_104 {dimension_numbers = #tpu.dot_dimension_numbers<[1], [0], [0], [1], [0, 0, 1, 1], [], []>} : vector<2x16xf32>, vector<16x1xf32>, vector<2x1xf32> -> vector<2x1xf32>
    %cst_105 = arith.constant dense<0.000000e+00> : vector<16x1xf32>
    %232 = tpu.matmul %6, %231, %cst_105 {dimension_numbers = #tpu.dot_dimension_numbers<[1], [0], [0], [1], [0, 0, 1, 1], [], []>} : vector<16x2xf32>, vector<2x1xf32>, vector<16x1xf32> -> vector<16x1xf32>
    %233 = arith.divf %230, %232 : vector<16x1xf32>
    %234 = vector.broadcast %233 : vector<16x1xf32> to vector<16x32xf32>
    %235 = arith.mulf %200, %234 : vector<16x32xf32>
    %cst_106 = arith.constant dense<0.000000e+00> : vector<2x32xf32>
    %236 = tpu.matmul %7, %235, %cst_106 {dimension_numbers = #tpu.dot_dimension_numbers<[1], [0], [0], [1], [0, 0, 1, 1], [], []>} : vector<2x16xf32>, vector<16x32xf32>, vector<2x32xf32> -> vector<2x32xf32>
    %237 = vector.broadcast %203 : vector<1x32xf32> to vector<2x32xf32>
    %238 = arith.addf %236, %237 : vector<2x32xf32>
    %cst_107 = arith.constant 0.000000e+00 : f32
    %239 = vector.broadcast %cst_107 : f32 to vector<2x32xf32>
    %240 = arith.cmpf ogt, %238, %239 : vector<2x32xf32>
    %241 = math.exp %238 : vector<2x32xf32>
    %cst_108 = arith.constant 1.000000e+00 : f32
    %242 = vector.broadcast %cst_108 : f32 to vector<2x32xf32>
    %243 = arith.subf %241, %242 : vector<2x32xf32>
    %244 = arith.select %240, %238, %243 : vector<2x32xi1>, vector<2x32xf32>
    %c160 = arith.constant 160 : index
    %c0_109 = arith.constant 0 : index
    %245 = vector.load %arg9[%c160, %c0_109] : memref<240x384xf32, #tpu.memory_space<vmem>>, vector<32x384xf32>
    %cst_110 = arith.constant dense<0.000000e+00> : vector<2x384xf32>
    %246 = tpu.matmul %244, %245, %cst_110 {dimension_numbers = #tpu.dot_dimension_numbers<[1], [0], [0], [1], [0, 0, 1, 1], [], []>} : vector<2x32xf32>, vector<32x384xf32>, vector<2x384xf32> -> vector<2x384xf32>
    %c224 = arith.constant 224 : index
    %c0_111 = arith.constant 0 : index
    %247 = vector.load %arg9[%c224, %c0_111] : memref<240x384xf32, #tpu.memory_space<vmem>>, vector<1x384xf32>
    %248 = vector.broadcast %247 : vector<1x384xf32> to vector<2x384xf32>
    %249 = arith.addf %246, %248 : vector<2x384xf32>
    %c192 = arith.constant 192 : index
    %c0_112 = arith.constant 0 : index
    %250 = vector.load %arg9[%c192, %c0_112] : memref<240x384xf32, #tpu.memory_space<vmem>>, vector<32x384xf32>
    %cst_113 = arith.constant dense<0.000000e+00> : vector<2x384xf32>
    %251 = tpu.matmul %198, %250, %cst_113 {dimension_numbers = #tpu.dot_dimension_numbers<[1], [0], [0], [1], [0, 0, 1, 1], [], []>} : vector<2x32xf32>, vector<32x384xf32>, vector<2x384xf32> -> vector<2x384xf32>
    %c232 = arith.constant 232 : index
    %c0_114 = arith.constant 0 : index
    %252 = vector.load %arg9[%c232, %c0_114] : memref<240x384xf32, #tpu.memory_space<vmem>>, vector<1x384xf32>
    %253 = vector.broadcast %252 : vector<1x384xf32> to vector<2x384xf32>
    %254 = arith.addf %251, %253 : vector<2x384xf32>
    %255 = vector.extract_strided_slice %249 {offsets = [0, 0], sizes = [2, 32], strides = [1, 1]} : vector<2x384xf32> to vector<2x32xf32>
    %256 = vector.extract_strided_slice %254 {offsets = [0, 0], sizes = [2, 32], strides = [1, 1]} : vector<2x384xf32> to vector<2x32xf32>
    %257 = arith.addf %255, %256 : vector<2x32xf32>
    %258 = arith.negf %257 : vector<2x32xf32>
    %259 = math.exp %258 : vector<2x32xf32>
    %cst_115 = arith.constant 1.000000e+00 : f32
    %260 = vector.broadcast %cst_115 : f32 to vector<2x32xf32>
    %261 = arith.addf %260, %259 : vector<2x32xf32>
    %262 = arith.divf %260, %261 : vector<2x32xf32>
    %263 = vector.extract_strided_slice %249 {offsets = [0, 128], sizes = [2, 32], strides = [1, 1]} : vector<2x384xf32> to vector<2x32xf32>
    %264 = vector.extract_strided_slice %254 {offsets = [0, 128], sizes = [2, 32], strides = [1, 1]} : vector<2x384xf32> to vector<2x32xf32>
    %265 = arith.addf %263, %264 : vector<2x32xf32>
    %266 = arith.negf %265 : vector<2x32xf32>
    %267 = math.exp %266 : vector<2x32xf32>
    %cst_116 = arith.constant 1.000000e+00 : f32
    %268 = vector.broadcast %cst_116 : f32 to vector<2x32xf32>
    %269 = arith.addf %268, %267 : vector<2x32xf32>
    %270 = arith.divf %268, %269 : vector<2x32xf32>
    %271 = vector.extract_strided_slice %249 {offsets = [0, 256], sizes = [2, 32], strides = [1, 1]} : vector<2x384xf32> to vector<2x32xf32>
    %272 = vector.extract_strided_slice %254 {offsets = [0, 256], sizes = [2, 32], strides = [1, 1]} : vector<2x384xf32> to vector<2x32xf32>
    %273 = arith.mulf %262, %272 : vector<2x32xf32>
    %274 = arith.addf %271, %273 : vector<2x32xf32>
    %275 = math.tanh %274 : vector<2x32xf32>
    %cst_117 = arith.constant 1.000000e+00 : f32
    %276 = vector.broadcast %cst_117 : f32 to vector<2x32xf32>
    %277 = arith.subf %276, %270 : vector<2x32xf32>
    %278 = arith.mulf %277, %275 : vector<2x32xf32>
    %279 = arith.mulf %270, %198 : vector<2x32xf32>
    %280 = arith.addf %278, %279 : vector<2x32xf32>
    %cst_118 = arith.constant 0.000000e+00 : f32
    %281 = vector.broadcast %cst_118 : f32 to vector<2x32xf32>
    %282 = arith.maximumf %280, %281 : vector<2x32xf32>
    %c0_119 = arith.constant 0 : index
    %c4_120 = arith.constant 4 : index
    %283 = vector.load %arg8[%c0_119, %c4_120] : memref<32x8xf32, #tpu.memory_space<vmem>>, vector<32x1xf32>
    %cst_121 = arith.constant dense<0.000000e+00> : vector<2x1xf32>
    %284 = tpu.matmul %282, %283, %cst_121 {dimension_numbers = #tpu.dot_dimension_numbers<[1], [0], [0], [1], [0, 0, 1, 1], [], []>} : vector<2x32xf32>, vector<32x1xf32>, vector<2x1xf32> -> vector<2x1xf32>
    %cst_122 = arith.constant dense<0.000000e+00> : vector<16x1xf32>
    %285 = tpu.matmul %6, %284, %cst_122 {dimension_numbers = #tpu.dot_dimension_numbers<[1], [0], [0], [1], [0, 0, 1, 1], [], []>} : vector<16x2xf32>, vector<2x1xf32>, vector<16x1xf32> -> vector<16x1xf32>
    %286 = arith.addf %202, %285 : vector<16x1xf32>
    %cst_123 = arith.constant 0.000000e+00 : f32
    %287 = vector.broadcast %cst_123 : f32 to vector<16x1xf32>
    %288 = arith.cmpf ogt, %286, %287 : vector<16x1xf32>
    %cst_124 = arith.constant 0.00999999977 : f32
    %289 = vector.broadcast %cst_124 : f32 to vector<16x1xf32>
    %290 = arith.mulf %289, %286 : vector<16x1xf32>
    %291 = arith.select %288, %286, %290 : vector<16x1xi1>, vector<16x1xf32>
    %cst_125 = arith.constant 0.000000e+00 : f32
    %292 = vector.broadcast %cst_125 : f32 to vector<16x2xf32>
    %293 = arith.cmpf ogt, %6, %292 : vector<16x2xf32>
    %cst_126 = arith.constant -1.000000e+30 : f32
    %294 = vector.shape_cast %291 : vector<16x1xf32> to vector<16x1xf32>
    %295 = vector.broadcast %294 : vector<16x1xf32> to vector<16x2xf32>
    %296 = vector.broadcast %cst_126 : f32 to vector<16x2xf32>
    %297 = arith.select %293, %295, %296 : vector<16x2xi1>, vector<16x2xf32>
    %cst_127 = arith.constant dense<0xFF800000> : vector<2xf32>
    %298 = vector.multi_reduction <maximumf>, %297, %cst_127 [0] : vector<16x2xf32> to vector<2xf32>
    %299 = vector.shape_cast %298 : vector<2xf32> to vector<1x2xf32>
    %cst_128 = arith.constant 0.000000e+00 : f32
    %300 = vector.broadcast %cst_128 : f32 to vector<16x2xf32>
    %301 = arith.cmpf ogt, %6, %300 : vector<16x2xf32>
    %cst_129 = arith.constant -1.000000e+30 : f32
    %302 = vector.shape_cast %299 : vector<1x2xf32> to vector<1x2xf32>
    %303 = vector.broadcast %302 : vector<1x2xf32> to vector<16x2xf32>
    %304 = vector.broadcast %cst_129 : f32 to vector<16x2xf32>
    %305 = arith.select %301, %303, %304 : vector<16x2xi1>, vector<16x2xf32>
    %cst_130 = arith.constant dense<0xFF800000> : vector<16xf32>
    %306 = vector.multi_reduction <maximumf>, %305, %cst_130 [1] : vector<16x2xf32> to vector<16xf32>
    %307 = vector.shape_cast %306 : vector<16xf32> to vector<16x1xf32>
    %308 = arith.subf %291, %307 : vector<16x1xf32>
    %309 = math.exp %308 : vector<16x1xf32>
    %cst_131 = arith.constant dense<0.000000e+00> : vector<2x1xf32>
    %310 = tpu.matmul %7, %309, %cst_131 {dimension_numbers = #tpu.dot_dimension_numbers<[1], [0], [0], [1], [0, 0, 1, 1], [], []>} : vector<2x16xf32>, vector<16x1xf32>, vector<2x1xf32> -> vector<2x1xf32>
    %cst_132 = arith.constant dense<0.000000e+00> : vector<16x1xf32>
    %311 = tpu.matmul %6, %310, %cst_132 {dimension_numbers = #tpu.dot_dimension_numbers<[1], [0], [0], [1], [0, 0, 1, 1], [], []>} : vector<16x2xf32>, vector<2x1xf32>, vector<16x1xf32> -> vector<16x1xf32>
    %312 = arith.divf %309, %311 : vector<16x1xf32>
    %313 = vector.broadcast %312 : vector<16x1xf32> to vector<16x32xf32>
    %314 = arith.mulf %200, %313 : vector<16x32xf32>
    %cst_133 = arith.constant dense<0.000000e+00> : vector<2x32xf32>
    %315 = tpu.matmul %7, %314, %cst_133 {dimension_numbers = #tpu.dot_dimension_numbers<[1], [0], [0], [1], [0, 0, 1, 1], [], []>} : vector<2x16xf32>, vector<16x32xf32>, vector<2x32xf32> -> vector<2x32xf32>
    %316 = vector.broadcast %203 : vector<1x32xf32> to vector<2x32xf32>
    %317 = arith.addf %315, %316 : vector<2x32xf32>
    %cst_134 = arith.constant 0.000000e+00 : f32
    %318 = vector.broadcast %cst_134 : f32 to vector<2x32xf32>
    %319 = arith.cmpf ogt, %317, %318 : vector<2x32xf32>
    %320 = math.exp %317 : vector<2x32xf32>
    %cst_135 = arith.constant 1.000000e+00 : f32
    %321 = vector.broadcast %cst_135 : f32 to vector<2x32xf32>
    %322 = arith.subf %320, %321 : vector<2x32xf32>
    %323 = arith.select %319, %317, %322 : vector<2x32xi1>, vector<2x32xf32>
    %c160_136 = arith.constant 160 : index
    %c0_137 = arith.constant 0 : index
    %324 = vector.load %arg9[%c160_136, %c0_137] : memref<240x384xf32, #tpu.memory_space<vmem>>, vector<32x384xf32>
    %cst_138 = arith.constant dense<0.000000e+00> : vector<2x384xf32>
    %325 = tpu.matmul %323, %324, %cst_138 {dimension_numbers = #tpu.dot_dimension_numbers<[1], [0], [0], [1], [0, 0, 1, 1], [], []>} : vector<2x32xf32>, vector<32x384xf32>, vector<2x384xf32> -> vector<2x384xf32>
    %c224_139 = arith.constant 224 : index
    %c0_140 = arith.constant 0 : index
    %326 = vector.load %arg9[%c224_139, %c0_140] : memref<240x384xf32, #tpu.memory_space<vmem>>, vector<1x384xf32>
    %327 = vector.broadcast %326 : vector<1x384xf32> to vector<2x384xf32>
    %328 = arith.addf %325, %327 : vector<2x384xf32>
    %c192_141 = arith.constant 192 : index
    %c0_142 = arith.constant 0 : index
    %329 = vector.load %arg9[%c192_141, %c0_142] : memref<240x384xf32, #tpu.memory_space<vmem>>, vector<32x384xf32>
    %cst_143 = arith.constant dense<0.000000e+00> : vector<2x384xf32>
    %330 = tpu.matmul %282, %329, %cst_143 {dimension_numbers = #tpu.dot_dimension_numbers<[1], [0], [0], [1], [0, 0, 1, 1], [], []>} : vector<2x32xf32>, vector<32x384xf32>, vector<2x384xf32> -> vector<2x384xf32>
    %c232_144 = arith.constant 232 : index
    %c0_145 = arith.constant 0 : index
    %331 = vector.load %arg9[%c232_144, %c0_145] : memref<240x384xf32, #tpu.memory_space<vmem>>, vector<1x384xf32>
    %332 = vector.broadcast %331 : vector<1x384xf32> to vector<2x384xf32>
    %333 = arith.addf %330, %332 : vector<2x384xf32>
    %334 = vector.extract_strided_slice %328 {offsets = [0, 0], sizes = [2, 32], strides = [1, 1]} : vector<2x384xf32> to vector<2x32xf32>
    %335 = vector.extract_strided_slice %333 {offsets = [0, 0], sizes = [2, 32], strides = [1, 1]} : vector<2x384xf32> to vector<2x32xf32>
    %336 = arith.addf %334, %335 : vector<2x32xf32>
    %337 = arith.negf %336 : vector<2x32xf32>
    %338 = math.exp %337 : vector<2x32xf32>
    %cst_146 = arith.constant 1.000000e+00 : f32
    %339 = vector.broadcast %cst_146 : f32 to vector<2x32xf32>
    %340 = arith.addf %339, %338 : vector<2x32xf32>
    %341 = arith.divf %339, %340 : vector<2x32xf32>
    %342 = vector.extract_strided_slice %328 {offsets = [0, 128], sizes = [2, 32], strides = [1, 1]} : vector<2x384xf32> to vector<2x32xf32>
    %343 = vector.extract_strided_slice %333 {offsets = [0, 128], sizes = [2, 32], strides = [1, 1]} : vector<2x384xf32> to vector<2x32xf32>
    %344 = arith.addf %342, %343 : vector<2x32xf32>
    %345 = arith.negf %344 : vector<2x32xf32>
    %346 = math.exp %345 : vector<2x32xf32>
    %cst_147 = arith.constant 1.000000e+00 : f32
    %347 = vector.broadcast %cst_147 : f32 to vector<2x32xf32>
    %348 = arith.addf %347, %346 : vector<2x32xf32>
    %349 = arith.divf %347, %348 : vector<2x32xf32>
    %350 = vector.extract_strided_slice %328 {offsets = [0, 256], sizes = [2, 32], strides = [1, 1]} : vector<2x384xf32> to vector<2x32xf32>
    %351 = vector.extract_strided_slice %333 {offsets = [0, 256], sizes = [2, 32], strides = [1, 1]} : vector<2x384xf32> to vector<2x32xf32>
    %352 = arith.mulf %341, %351 : vector<2x32xf32>
    %353 = arith.addf %350, %352 : vector<2x32xf32>
    %354 = math.tanh %353 : vector<2x32xf32>
    %cst_148 = arith.constant 1.000000e+00 : f32
    %355 = vector.broadcast %cst_148 : f32 to vector<2x32xf32>
    %356 = arith.subf %355, %349 : vector<2x32xf32>
    %357 = arith.mulf %356, %354 : vector<2x32xf32>
    %358 = arith.mulf %349, %282 : vector<2x32xf32>
    %359 = arith.addf %357, %358 : vector<2x32xf32>
    %cst_149 = arith.constant 0.000000e+00 : f32
    %360 = vector.broadcast %cst_149 : f32 to vector<2x32xf32>
    %361 = arith.maximumf %359, %360 : vector<2x32xf32>
    %c0_150 = arith.constant 0 : index
    %c5 = arith.constant 5 : index
    %362 = vector.load %arg8[%c0_150, %c5] : memref<32x8xf32, #tpu.memory_space<vmem>>, vector<32x1xf32>
    %cst_151 = arith.constant dense<0.000000e+00> : vector<2x1xf32>
    %363 = tpu.matmul %361, %362, %cst_151 {dimension_numbers = #tpu.dot_dimension_numbers<[1], [0], [0], [1], [0, 0, 1, 1], [], []>} : vector<2x32xf32>, vector<32x1xf32>, vector<2x1xf32> -> vector<2x1xf32>
    %c120 = arith.constant 120 : index
    %c0_152 = arith.constant 0 : index
    %364 = vector.load %arg6[%c120, %c0_152] : memref<128x32xf32, #tpu.memory_space<vmem>>, vector<1x1xf32>
    %365 = vector.broadcast %364 : vector<1x1xf32> to vector<2x1xf32>
    %366 = arith.addf %363, %365 : vector<2x1xf32>
    %c0_153 = arith.constant 0 : index
    %c0_154 = arith.constant 0 : index
    %367 = vector.load %arg10[%c0_153, %c0_154] : memref<2x1xf32, #tpu.memory_space<vmem>>, vector<2x1xf32>
    tpu.vector_store %arg10[%c0_153, %c0_154], %366 {strides = array<i32>} : memref<2x1xf32, #tpu.memory_space<vmem>>, vector<2x1xf32>,
    return
  }
}

</mosaic_0001>

<llo_original>
// kernel: attentive_fp_forward.1
$region0: #{attentive_fp_forward.1}
  #allocation0 [shape = 'u32[]', space=smem, size = 0x4, offset = 0x4, fixed_abs, tag = 'smem constant byte address 0x4 - core index']
  #allocation1 [shape = 'u32[72,128]{1,0:T(1,128)}', space=vmem, size = 0x9000, scoped, tag = 'internal scratch']
  %s0 = inlined_call_operand.vmem [shape: f32[16,16], index: 0, kind: input, shape index: {}]
  %s1 = inlined_call_operand.vmem [shape: f32[32,8], index: 1, kind: input, shape index: {}]
  %s2 = inlined_call_operand.vmem [shape: f32[64,16], index: 2, kind: input, shape index: {}]
  %s3 = inlined_call_operand.vmem [shape: f32[16,32], index: 3, kind: input, shape index: {}]
  %s4 = inlined_call_operand.vmem [shape: f32[16,2], index: 4, kind: input, shape index: {}]
  %s5 = inlined_call_operand.vmem [shape: f32[2,16], index: 5, kind: input, shape index: {}]
  %s6 = inlined_call_operand.vmem [shape: f32[128,32], index: 6, kind: input, shape index: {}]
  %s7 = inlined_call_operand.vmem [shape: f32[32,384], index: 7, kind: input, shape index: {}]
  %s8 = inlined_call_operand.vmem [shape: f32[32,8], index: 8, kind: input, shape index: {}]
  %s9 = inlined_call_operand.hbm [shape: f32[240,384], index: 9, kind: input, shape index: {}]
  %s10 = inlined_call_operand.vmem [shape: f32[2,1], index: 10, kind: output, shape index: {}]
  %s11 = sld [smem:[#allocation0]]
  $region54: #{attentive_fp_forward.1} parent=0
    _
  %s13 = ssub.s32 1, %s11
  %s14 = scalar_select 0, %s13, %s11
  $region1: #{attentive_fp_forward.1} parent=0
    #allocation2 [shape = 'u8[368640]{0}', space=vmem, size = 0x5a000, scoped, tag = 'input window, operand 9, single buffered']
    #allocation3 [shape = 's32[1]{0}', space=sflag, size = 0x4, scoped, tag = 'scoped memory for attentive_fp_forward.1']
    %15 = vsyncpa [#allocation3], 0
    // Predicated region
    $region2: #{attentive_fp_forward.1} parent=1 // pred_check
      _
    $region3: #{attentive_fp_forward.1} parent=1 // pred_check_branch
      %17 = sbr.rel (0) target = $region5
    $region4: #{attentive_fp_forward.1} parent=1 // pred_region
      _
    $region5: #{attentive_fp_forward.1} parent=1 // pred_fallthru
      _
    // Predicated region
    $region6: #{attentive_fp_forward.1} parent=1 // pred_check
      _
    $region7: #{attentive_fp_forward.1} parent=1 // pred_check_branch
      %19 = sbr.rel (0) target = $region9
    $region8: #{attentive_fp_forward.1} parent=1 // pred_region
      _
    $region9: #{attentive_fp_forward.1} parent=1 // pred_fallthru
      _
    // Predicated region
    $region10: #{attentive_fp_forward.1} parent=1 // pred_check
      _
    $region11: #{attentive_fp_forward.1} parent=1 // pred_check_branch
      %21 = sbr.rel (0) target = $region13
    $region12: #{attentive_fp_forward.1} parent=1 // pred_region
      _
    $region13: #{attentive_fp_forward.1} parent=1 // pred_fallthru
      _
    // Predicated region
    $region14: #{attentive_fp_forward.1} parent=1 // pred_check
      _
    $region15: #{attentive_fp_forward.1} parent=1 // pred_check_branch
      %23 = sbr.rel (0) target = $region17
    $region16: #{attentive_fp_forward.1} parent=1 // pred_region
      _
    $region17: #{attentive_fp_forward.1} parent=1 // pred_fallthru
      _
    // Predicated region
    $region18: #{attentive_fp_forward.1} parent=1 // pred_check
      _
    $region19: #{attentive_fp_forward.1} parent=1 // pred_check_branch
      %25 = sbr.rel (0) target = $region21
    $region20: #{attentive_fp_forward.1} parent=1 // pred_region
      _
    $region21: #{attentive_fp_forward.1} parent=1 // pred_fallthru
      _
    // Predicated region
    $region22: #{attentive_fp_forward.1} parent=1 // pred_check
      _
    $region23: #{attentive_fp_forward.1} parent=1 // pred_check_branch
      %27 = sbr.rel (0) target = $region25
    $region24: #{attentive_fp_forward.1} parent=1 // pred_region
      _
    $region25: #{attentive_fp_forward.1} parent=1 // pred_fallthru
      _
    // Predicated region
    $region26: #{attentive_fp_forward.1} parent=1 // pred_check
      _
    $region27: #{attentive_fp_forward.1} parent=1 // pred_check_branch
      %29 = sbr.rel (0) target = $region29
    $region28: #{attentive_fp_forward.1} parent=1 // pred_region
      _
    $region29: #{attentive_fp_forward.1} parent=1 // pred_fallthru
      _
    // Predicated region
    $region30: #{attentive_fp_forward.1} parent=1 // pred_check
      _
    $region31: #{attentive_fp_forward.1} parent=1 // pred_check_branch
      %31 = sbr.rel (0) target = $region33
    $region32: #{attentive_fp_forward.1} parent=1 // pred_region
      _
    $region33: #{attentive_fp_forward.1} parent=1 // pred_fallthru
      _
    // Predicated region
    $region34: #{attentive_fp_forward.1} parent=1 // pred_check
      _
    $region35: #{attentive_fp_forward.1} parent=1 // pred_check_branch
      %33 = sbr.rel (0) target = $region37
    $region36: #{attentive_fp_forward.1} parent=1 // pred_region
      _
    $region37: #{attentive_fp_forward.1} parent=1 // pred_fallthru
      _
    // Predicated region
    $region38: #{attentive_fp_forward.1} parent=1 // pred_check
      _
    $region39: #{attentive_fp_forward.1} parent=1 // pred_check_branch
      %35 = sbr.rel (0) target = $region41
    $region40: #{attentive_fp_forward.1} parent=1 // pred_region
      %37 = vsyncadd [#allocation3], 0
      %s38 = sshll.u32 %s9, 4
      %s39 = int_to_ptr.hbm [resolvable:$true] %s38
      %s40 = sshll.u32 [#allocation2], 4
      %s41 = int_to_ptr.vmem [resolvable:$true] %s40
      %46 = dma.hbm_to_vmem [thread:$0]  %s39, 11520, %s41, [#allocation3], 384, 384, 24
    $region41: #{attentive_fp_forward.1} parent=1 // pred_fallthru
      _
    // Predicated region
    $region42: #{attentive_fp_forward.1} parent=1 // pred_check
      _
    $region43: #{attentive_fp_forward.1} parent=1 // pred_check_branch
      %48 = sbr.rel (0) target = $region45
    $region44: #{attentive_fp_forward.1} parent=1 // pred_region
      %50 = dma.done [#allocation3], 11520
    $region45: #{attentive_fp_forward.1} parent=1 // pred_fallthru
      _
    %v51 = vld [vmem:[%s0] sm:$0xff]
    %v52 = vld [vmem:[%s0 + $0x8] sm:$0xff]
    %v53 = vld [vmem:[%s1] sm:$0xff]
    %v54 = vld [vmem:[%s1 + $0x8] sm:$0xff]
    %v55 = vld [vmem:[%s1 + $0x10] sm:$0xff]
    %v56 = vld [vmem:[%s1 + $0x18] sm:$0xff]
    %v57 = vld [vmem:[%s2] sm:$0xff]
    %v58 = vld [vmem:[%s2 + $0x8] sm:$0xff]
    %v59 = vld [vmem:[%s2 + $0x10] sm:$0xff]
    %v60 = vld [vmem:[%s2 + $0x18] sm:$0xff]
    %v61 = vld [vmem:[%s2 + $0x20] sm:$0xff]
    %v62 = vld [vmem:[%s2 + $0x28] sm:$0xff]
    %v63 = vld [vmem:[%s2 + $0x30] sm:$0xff]
    %v64 = vld [vmem:[%s2 + $0x38] sm:$0xff]
    %v65 = vld [vmem:[%s3] sm:$0xff]
    %v66 = vld [vmem:[%s3 + $0x8] sm:$0xff]
    %v67 = vld [vmem:[%s4] sm:$0xff]
    %v68 = vld [vmem:[%s4 + $0x8] sm:$0xff]
    %v69 = vld [vmem:[%s5] sm:$0x3]
    %v70 = vld [vmem:[%s6] sm:$0xff]
    %v71 = vld [vmem:[%s6 + $0x8] sm:$0xff]
    %v72 = vld [vmem:[%s6 + $0x10] sm:$0x1]
    %v73 = vperm.slane %v72, 0
    %vm74 = vcmask 130048
    %v76 = vsel %vm74, %v51, 0
    %v79 = vsel %vm74, %v52, 0
    %81 = vmatpush.msra.mxu0 0.0
    %82 = vmatpush.msra.mxu0 0.0
    %83 = vmatpush.msra.mxu0 0.0
    %84 = vmatpush.msra.mxu0 0.0
    %85 = vmatpush.msra.mxu0 0.0
    %86 = vmatpush.msra.mxu0 0.0
    %87 = vmatpush.msra.mxu0 0.0
    %88 = vmatpush.msra.mxu0 0.0
    %89 = vmatpush.msra.mxu0 0.0
    %90 = vmatpush.msra.mxu0 0.0
    %91 = vmatpush.msra.mxu0 0.0
    %92 = vmatpush.msra.mxu0 0.0
    %93 = vmatpush.msra.mxu0 0.0
    %94 = vmatpush.msra.mxu0 0.0
    %95 = vmatpush.msra.mxu0 %v71
    %96 = vmatpush.msra.mxu0 %v70
    %97 = vmatmul.f32.gmra.mxu0 %v76
    %v98 = vpop.f32.mrf.mxu0
    %v99 = vadd.f32 %v73, %v98
    %100 = vmatmul.f32.gmra.mxu0 %v79
    %v101 = vpop.f32.mrf.mxu0
    %v102 = vadd.f32 %v73, %v101
    %103 = vdwg.mxu0
    %vm104 = vcmp.gt.f32.partialorder %v99, 0.0
    %vm105 = vcmp.gt.f32.partialorder %v102, 0.0
    %v106 = vmul.f32 %v99, 0.01
    %v107 = vmul.f32 %v102, 0.01
    %v108 = vsel %vm104, %v99, %v106
    %v109 = vsel %vm105, %v102, %v107
    %v110 = vld [vmem:[%s7] sm:$0xff]
    %v111 = vld [vmem:[%s7 + $0x8] sm:$0xff]
    %v112 = vld [vmem:[%s7 + $0x10] sm:$0xff]
    %v113 = vld [vmem:[%s7 + $0x18] sm:$0xff]
    %v114 = vld [vmem:[%s7 + $0x20] sm:$0xff]
    %v115 = vld [vmem:[%s7 + $0x28] sm:$0xff]
    %v116 = vld [vmem:[%s7 + $0x30] sm:$0xff]
    %v117 = vld [vmem:[%s7 + $0x38] sm:$0xff]
    %v118 = vld [vmem:[%s7 + $0x40] sm:$0xff]
    %v119 = vld [vmem:[%s7 + $0x48] sm:$0xff]
    %v120 = vld [vmem:[%s7 + $0x50] sm:$0xff]
    %v121 = vld [vmem:[%s7 + $0x58] sm:$0xff]
    %vm122 = vcmask 261120
    %v124 = vsel %vm122, %v108, 0
    %v127 = vsel %vm122, %v109, 0
    %129 = vmatpush.msra.mxu0 0.0
    %130 = vmatpush.msra.mxu0 0.0
    %131 = vmatpush.msra.mxu0 0.0
    %132 = vmatpush.msra.mxu0 0.0
    %133 = vmatpush.msra.mxu0 0.0
    %134 = vmatpush.msra.mxu0 0.0
    %135 = vmatpush.msra.mxu0 0.0
    %136 = vmatpush.msra.mxu0 0.0
    %137 = vmatpush.msra.mxu0 0.0
    %138 = vmatpush.msra.mxu0 0.0
    %139 = vmatpush.msra.mxu0 0.0
    %140 = vmatpush.msra.mxu0 0.0
    %141 = vmatpush.msra.mxu0 %v119
    %142 = vmatpush.msra.mxu0 %v116
    %143 = vmatpush.msra.mxu0 %v113
    %144 = vmatpush.msra.mxu0 %v110
    %145 = vmatmul.f32.gmra.mxu0 %v124
    %v146 = vpop.f32.mrf.mxu0
    %v147 = vadd.f32 0.0, %v146
    %148 = vmatmul.f32.gmra.mxu0 %v127
    %v149 = vpop.f32.mrf.mxu0
    %v150 = vadd.f32 0.0, %v149
    %151 = vdwg.mxu0
    %152 = vmatpush.msra.mxu0 0.0
    %153 = vmatpush.msra.mxu0 0.0
    %154 = vmatpush.msra.mxu0 0.0
    %155 = vmatpush.msra.mxu0 0.0
    %156 = vmatpush.msra.mxu0 0.0
    %157 = vmatpush.msra.mxu0 0.0
    %158 = vmatpush.msra.mxu0 0.0
    %159 = vmatpush.msra.mxu0 0.0
    %160 = vmatpush.msra.mxu0 0.0
    %161 = vmatpush.msra.mxu0 0.0
    %162 = vmatpush.msra.mxu0 0.0
    %163 = vmatpush.msra.mxu0 0.0
    %164 = vmatpush.msra.mxu0 %v120
    %165 = vmatpush.msra.mxu0 %v117
    %166 = vmatpush.msra.mxu0 %v114
    %167 = vmatpush.msra.mxu0 %v111
    %168 = vmatmul.f32.gmra.mxu0 %v124
    %v169 = vpop.f32.mrf.mxu0
    %v170 = vadd.f32 0.0, %v169
    %171 = vmatmul.f32.gmra.mxu0 %v127
    %v172 = vpop.f32.mrf.mxu0
    %v173 = vadd.f32 0.0, %v172
    %174 = vdwg.mxu0
    %175 = vmatpush.msra.mxu0 0.0
    %176 = vmatpush.msra.mxu0 0.0
    %177 = vmatpush.msra.mxu0 0.0
    %178 = vmatpush.msra.mxu0 0.0
    %179 = vmatpush.msra.mxu0 0.0
    %180 = vmatpush.msra.mxu0 0.0
    %181 = vmatpush.msra.mxu0 0.0
    %182 = vmatpush.msra.mxu0 0.0
    %183 = vmatpush.msra.mxu0 0.0
    %184 = vmatpush.msra.mxu0 0.0
    %185 = vmatpush.msra.mxu0 0.0
    %186 = vmatpush.msra.mxu0 0.0
    %187 = vmatpush.msra.mxu0 %v121
    %188 = vmatpush.msra.mxu0 %v118
    %189 = vmatpush.msra.mxu0 %v115
    %190 = vmatpush.msra.mxu0 %v112
    %191 = vmatmul.f32.gmra.mxu0 %v124
    %v192 = vpop.f32.mrf.mxu0
    %v193 = vadd.f32 0.0, %v192
    %194 = vmatmul.f32.gmra.mxu0 %v127
    %v195 = vpop.f32.mrf.mxu0
    %v196 = vadd.f32 0.0, %v195
    %197 = vdwg.mxu0
    %v199 = vsel %vm74, %v57, 0
    %v202 = vsel %vm74, %v58, 0
    %v205 = vsel %vm74, %v59, 0
    %v208 = vsel %vm74, %v60, 0
    %v211 = vsel %vm74, %v61, 0
    %v214 = vsel %vm74, %v62, 0
    %v217 = vsel %vm74, %v63, 0
    %v220 = vsel %vm74, %v64, 0
    %222 = vmatpush.msra.mxu0 0.0
    %223 = vmatpush.msra.mxu0 0.0
    %224 = vmatpush.msra.mxu0 0.0
    %225 = vmatpush.msra.mxu0 0.0
    %226 = vmatpush.msra.mxu0 0.0
    %227 = vmatpush.msra.mxu0 0.0
    %228 = vmatpush.msra.mxu0 0.0
    %229 = vmatpush.msra.mxu0 0.0
    %230 = vmatpush.msra.mxu0 0.0
    %231 = vmatpush.msra.mxu0 0.0
    %232 = vmatpush.msra.mxu0 0.0
    %233 = vmatpush.msra.mxu0 0.0
    %234 = vmatpush.msra.mxu0 0.0
    %235 = vmatpush.msra.mxu0 0.0
    %236 = vmatpush.msra.mxu0 %v150
    %237 = vmatpush.msra.mxu0 %v147
    %238 = vmatmul.f32.gmra.mxu0 %v199
    %v239 = vpop.f32.mrf.mxu0
    %v240 = vadd.f32 0.0, %v239
    %241 = vmatmul.f32.gmra.mxu0 %v202
    %v242 = vpop.f32.mrf.mxu0
    %v243 = vadd.f32 0.0, %v242
    %244 = vmatmul.f32.gmra.mxu0 %v205
    %v245 = vpop.f32.mrf.mxu0
    %v246 = vadd.f32 0.0, %v245
    %247 = vmatmul.f32.gmra.mxu0 %v208
    %v248 = vpop.f32.mrf.mxu0
    %v249 = vadd.f32 0.0, %v248
    %250 = vmatmul.f32.gmra.mxu0 %v211
    %v251 = vpop.f32.mrf.mxu0
    %252 = vmatmul.f32.gmra.mxu0 %v214
    %v253 = vpop.f32.mrf.mxu0
    %254 = vmatmul.f32.gmra.mxu0 %v217
    %v255 = vpop.f32.mrf.mxu0
    %256 = vmatmul.f32.gmra.mxu0 %v220
    %v257 = vpop.f32.mrf.mxu0
    %258 = vdwg.mxu0
    %259 = vmatpush.msra.mxu0 0.0
    %260 = vmatpush.msra.mxu0 0.0
    %261 = vmatpush.msra.mxu0 0.0
    %262 = vmatpush.msra.mxu0 0.0
    %263 = vmatpush.msra.mxu0 0.0
    %264 = vmatpush.msra.mxu0 0.0
    %265 = vmatpush.msra.mxu0 0.0
    %266 = vmatpush.msra.mxu0 0.0
    %267 = vmatpush.msra.mxu0 0.0
    %268 = vmatpush.msra.mxu0 0.0
    %269 = vmatpush.msra.mxu0 0.0
    %270 = vmatpush.msra.mxu0 0.0
    %271 = vmatpush.msra.mxu0 0.0
    %272 = vmatpush.msra.mxu0 0.0
    %273 = vmatpush.msra.mxu0 %v173
    %274 = vmatpush.msra.mxu0 %v170
    %275 = vmatmul.f32.gmra.mxu0 %v199
    %v276 = vpop.f32.mrf.mxu0
    %v277 = vadd.f32 0.0, %v276
    %278 = vmatmul.f32.gmra.mxu0 %v202
    %v279 = vpop.f32.mrf.mxu0
    %v280 = vadd.f32 0.0, %v279
    %281 = vmatmul.f32.gmra.mxu0 %v205
    %v282 = vpop.f32.mrf.mxu0
    %v283 = vadd.f32 0.0, %v282
    %284 = vmatmul.f32.gmra.mxu0 %v208
    %v285 = vpop.f32.mrf.mxu0
    %v286 = vadd.f32 0.0, %v285
    %287 = vmatmul.f32.gmra.mxu0 %v211
    %v288 = vpop.f32.mrf.mxu0
    %289 = vmatmul.f32.gmra.mxu0 %v214
    %v290 = vpop.f32.mrf.mxu0
    %291 = vmatmul.f32.gmra.mxu0 %v217
    %v292 = vpop.f32.mrf.mxu0
    %293 = vmatmul.f32.gmra.mxu0 %v220
    %v294 = vpop.f32.mrf.mxu0
    %295 = vdwg.mxu0
    %296 = vmatpush.msra.mxu0 0.0
    %297 = vmatpush.msra.mxu0 0.0
    %298 = vmatpush.msra.mxu0 0.0
    %299 = vmatpush.msra.mxu0 0.0
    %300 = vmatpush.msra.mxu0 0.0
    %301 = vmatpush.msra.mxu0 0.0
    %302 = vmatpush.msra.mxu0 0.0
    %303 = vmatpush.msra.mxu0 0.0
    %304 = vmatpush.msra.mxu0 0.0
    %305 = vmatpush.msra.mxu0 0.0
    %306 = vmatpush.msra.mxu0 0.0
    %307 = vmatpush.msra.mxu0 0.0
    %308 = vmatpush.msra.mxu0 0.0
    %309 = vmatpush.msra.mxu0 0.0
    %310 = vmatpush.msra.mxu0 %v196
    %311 = vmatpush.msra.mxu0 %v193
    %312 = vmatmul.f32.gmra.mxu0 %v199
    %v313 = vpop.f32.mrf.mxu0
    %314 = vmatmul.f32.gmra.mxu0 %v202
    %v315 = vpop.f32.mrf.mxu0
    %316 = vmatmul.f32.gmra.mxu0 %v205
    %v317 = vpop.f32.mrf.mxu0
    %318 = vmatmul.f32.gmra.mxu0 %v208
    %v319 = vpop.f32.mrf.mxu0
    %320 = vmatmul.f32.gmra.mxu0 %v211
    %v321 = vpop.f32.mrf.mxu0
    %v322 = vadd.f32 0.0, %v321
    %323 = vmatmul.f32.gmra.mxu0 %v214
    %v324 = vpop.f32.mrf.mxu0
    %v325 = vadd.f32 0.0, %v324
    %326 = vmatmul.f32.gmra.mxu0 %v217
    %v327 = vpop.f32.mrf.mxu0
    %v328 = vadd.f32 0.0, %v327
    %329 = vmatmul.f32.gmra.mxu0 %v220
    %v330 = vpop.f32.mrf.mxu0
    %v331 = vadd.f32 0.0, %v330
    %332 = vdwg.mxu0
    %v333 = vld [vmem:[%s6 + $0x18] sm:$0xff]
    %vm334 = vcmask 64512
    %v336 = vsel %vm334, %v53, 0
    %v339 = vsel %vm334, %v54, 0
    %v342 = vsel %vm334, %v55, 0
    %v345 = vsel %vm334, %v56, 0
    %347 = vmatpush.msra.mxu0 0.0
    %348 = vmatpush.msra.mxu0 0.0
    %349 = vmatpush.msra.mxu0 0.0
    %350 = vmatpush.msra.mxu0 0.0
    %351 = vmatpush.msra.mxu0 0.0
    %352 = vmatpush.msra.mxu0 0.0
    %353 = vmatpush.msra.mxu0 0.0
    %354 = vmatpush.msra.mxu0 0.0
    %355 = vmatpush.msra.mxu0 0.0
    %356 = vmatpush.msra.mxu0 0.0
    %357 = vmatpush.msra.mxu0 0.0
    %358 = vmatpush.msra.mxu0 0.0
    %359 = vmatpush.msra.mxu0 0.0
    %360 = vmatpush.msra.mxu0 0.0
    %361 = vmatpush.msra.mxu0 0.0
    %362 = vmatpush.msra.mxu0 %v333
    %363 = vmatmul.f32.gmra.mxu0 %v336
    %v364 = vpop.f32.mrf.mxu0
    %v365 = vadd.f32 0.0, %v364
    %366 = vmatmul.f32.gmra.mxu0 %v339
    %v367 = vpop.f32.mrf.mxu0
    %v368 = vadd.f32 0.0, %v367
    %369 = vmatmul.f32.gmra.mxu0 %v342
    %v370 = vpop.f32.mrf.mxu0
    %v371 = vadd.f32 0.0, %v370
    %372 = vmatmul.f32.gmra.mxu0 %v345
    %v373 = vpop.f32.mrf.mxu0
    %v374 = vadd.f32 0.0, %v373
    %375 = vdwg.mxu0
    %v376 = vadd.f32 %v240, %v365
    %v377 = vadd.f32 %v243, %v368
    %v378 = vadd.f32 %v246, %v371
    %v379 = vadd.f32 %v249, %v374
    %vm380 = vcmp.gt.f32.partialorder %v376, 0.0
    %vm381 = vcmp.gt.f32.partialorder %v377, 0.0
    %vm382 = vcmp.gt.f32.partialorder %v378, 0.0
    %vm383 = vcmp.gt.f32.partialorder %v379, 0.0
    %v384 = vmul.f32 %v376, 0.01
    %v385 = vmul.f32 %v377, 0.01
    %v386 = vmul.f32 %v378, 0.01
    %v387 = vmul.f32 %v379, 0.01
    %v388 = vsel %vm380, %v376, %v384
    %v389 = vsel %vm381, %v377, %v385
    %v390 = vsel %vm382, %v378, %v386
    %v391 = vsel %vm383, %v379, %v387
    %v392 = vld [vmem:[%s8] sm:$0xff]
    %v393 = vld [vmem:[%s8 + $0x8] sm:$0xff]
    %v394 = vld [vmem:[%s8 + $0x10] sm:$0xff]
    %v395 = vld [vmem:[%s8 + $0x18] sm:$0xff]
    %400 = vrot.lane.b32.xlu0 %v392, 126
    %v401 = vpop.permute.xlu0 %400
    %402 = vrot.lane.b32.xlu0 %v393, 126
    %v403 = vpop.permute.xlu0 %402
    %404 = vrot.lane.b32.xlu0 %v394, 126
    %v405 = vpop.permute.xlu0 %404
    %406 = vrot.lane.b32.xlu0 %v395, 126
    %v407 = vpop.permute.xlu0 %406
    %v413 = vsel %vm122, %v388, 0
    %v416 = vsel %vm122, %v389, 0
    %v419 = vsel %vm122, %v390, 0
    %v422 = vsel %vm122, %v391, 0
    %424 = vmatpush.msra.mxu0 0.0
    %425 = vmatpush.msra.mxu0 0.0
    %426 = vmatpush.msra.mxu0 0.0
    %427 = vmatpush.msra.mxu0 0.0
    %428 = vmatpush.msra.mxu0 0.0
    %429 = vmatpush.msra.mxu0 0.0
    %430 = vmatpush.msra.mxu0 0.0
    %431 = vmatpush.msra.mxu0 0.0
    %432 = vmatpush.msra.mxu0 0.0
    %433 = vmatpush.msra.mxu0 0.0
    %434 = vmatpush.msra.mxu0 0.0
    %435 = vmatpush.msra.mxu0 0.0
    %436 = vmatpush.msra.mxu0 %v407
    %437 = vmatpush.msra.mxu0 %v405
    %438 = vmatpush.msra.mxu0 %v403
    %439 = vmatpush.msra.mxu0 %v401
    %440 = vmatmul.f32.gmra.mxu0 %v413
    %v441 = vpop.f32.mrf.mxu0
    %v442 = vadd.f32 %v322, %v441
    %443 = vmatmul.f32.gmra.mxu0 %v416
    %v444 = vpop.f32.mrf.mxu0
    %v445 = vadd.f32 %v325, %v444
    %446 = vmatmul.f32.gmra.mxu0 %v419
    %v447 = vpop.f32.mrf.mxu0
    %v448 = vadd.f32 %v328, %v447
    %449 = vmatmul.f32.gmra.mxu0 %v422
    %v450 = vpop.f32.mrf.mxu0
    %v451 = vadd.f32 %v331, %v450
    %452 = vdwg.mxu0
    %vm453 = vcmp.gt.f32.partialorder %v442, 0.0
    %vm454 = vcmp.gt.f32.partialorder %v445, 0.0
    %vm455 = vcmp.gt.f32.partialorder %v448, 0.0
    %vm456 = vcmp.gt.f32.partialorder %v451, 0.0
    %v457 = vmul.f32 %v442, 0.01
    %v458 = vmul.f32 %v445, 0.01
    %v459 = vmul.f32 %v448, 0.01
    %v460 = vmul.f32 %v451, 0.01
    %v461 = vsel %vm453, %v442, %v457
    %v462 = vsel %vm454, %v445, %v458
    %v463 = vsel %vm455, %v448, %v459
    %v464 = vsel %vm456, %v451, %v460
    %vm465 = vcmp.gt.f32.partialorder %v61, 0.0
    %vm466 = vcmp.gt.f32.partialorder %v62, 0.0
    %vm467 = vcmp.gt.f32.partialorder %v63, 0.0
    %vm468 = vcmp.gt.f32.partialorder %v64, 0.0
    %470 = vset.pattern.permute.xlu0 0
    %471 = vperm.xlu0 %470, %v461
    %v472 = vpop.permute.xlu0 %471
    %475 = vset.pattern.permute.xlu0 0
    %476 = vperm.xlu0 %475, %v462
    %v477 = vpop.permute.xlu0 %476
    %480 = vset.pattern.permute.xlu0 0
    %481 = vperm.xlu0 %480, %v463
    %v482 = vpop.permute.xlu0 %481
    %485 = vset.pattern.permute.xlu0 0
    %486 = vperm.xlu0 %485, %v464
    %v487 = vpop.permute.xlu0 %486
    %v489 = vsel %vm465, %v472, -1e+30
    %v490 = vsel %vm466, %v477, -1e+30
    %v491 = vsel %vm467, %v482, -1e+30
    %v492 = vsel %vm468, %v487, -1e+30
    %v493 = vsel %vm74, %v489, -inf
    %v494 = vsel %vm74, %v490, -inf
    %v495 = vsel %vm74, %v491, -inf
    %v496 = vsel %vm74, %v492, -inf
    %v497 = vmax.f32 %v493, %v494
    %v498 = vmax.f32 %v495, %v496
    %v499 = vmax.f32 %v497, %v498
    %v500 = vrot.slane %v499, 4
    %v501 = vmax.f32 %v499, %v500
    %v502 = vrot.slane %v501, 2
    %v503 = vmax.f32 %v501, %v502
    %v504 = vrot.slane %v503, 1
    %v505 = vmax.f32 %v503, %v504
    %v506 = vsel %vm465, %v505, -1e+30
    %v507 = vsel %vm466, %v505, -1e+30
    %v508 = vsel %vm467, %v505, -1e+30
    %v509 = vsel %vm468, %v505, -1e+30
    %v510 = vsel %vm74, %v506, -inf
    %511 = vmax.xlane.f32.xlu0 %v510
    %v512 = vpop.xlane.xlu0 %511
    %v513 = vsel %vm74, %v507, -inf
    %514 = vmax.xlane.f32.xlu0 %v513
    %v515 = vpop.xlane.xlu0 %514
    %v516 = vsel %vm74, %v508, -inf
    %517 = vmax.xlane.f32.xlu0 %v516
    %v518 = vpop.xlane.xlu0 %517
    %v519 = vsel %vm74, %v509, -inf
    %520 = vmax.xlane.f32.xlu0 %v519
    %v521 = vpop.xlane.xlu0 %520
    %v522 = vsub.f32 %v461, %v512
    %v523 = vsub.f32 %v462, %v515
    %v524 = vsub.f32 %v463, %v518
    %v525 = vsub.f32 %v464, %v521
    %v526 = vmul.f32 %v522, 1.442695
    %v527 = vpow.pop %v526
    %v528 = vmul.f32 %v523, 1.442695
    %v529 = vpow.pop %v528
    %v530 = vmul.f32 %v524, 1.442695
    %v531 = vpow.pop %v530
    %v532 = vmul.f32 %v525, 1.442695
    %v533 = vpow.pop %v532
    %v535 = vsel %vm122, %v65, 0
    %v538 = vsel %vm122, %v66, 0
    %540 = vmatpush.msra.mxu0 0.0
    %541 = vmatpush.msra.mxu0 0.0
    %542 = vmatpush.msra.mxu0 0.0
    %543 = vmatpush.msra.mxu0 0.0
    %544 = vmatpush.msra.mxu0 0.0
    %545 = vmatpush.msra.mxu0 0.0
    %546 = vmatpush.msra.mxu0 0.0
    %547 = vmatpush.msra.mxu0 0.0
    %548 = vmatpush.msra.mxu0 0.0
    %549 = vmatpush.msra.mxu0 0.0
    %550 = vmatpush.msra.mxu0 0.0
    %551 = vmatpush.msra.mxu0 0.0
    %552 = vmatpush.msra.mxu0 %v533
    %553 = vmatpush.msra.mxu0 %v531
    %554 = vmatpush.msra.mxu0 %v529
    %555 = vmatpush.msra.mxu0 %v527
    %556 = vmatmul.f32.gmra.mxu0 %v535
    %v557 = vpop.f32.mrf.mxu0
    %v558 = vadd.f32 0.0, %v557
    %559 = vmatmul.f32.gmra.mxu0 %v538
    %v560 = vpop.f32.mrf.mxu0
    %v561 = vadd.f32 0.0, %v560
    %562 = vdwg.mxu0
    %563 = vmatpush.msra.mxu0 0.0
    %564 = vmatpush.msra.mxu0 0.0
    %565 = vmatpush.msra.mxu0 0.0
    %566 = vmatpush.msra.mxu0 0.0
    %567 = vmatpush.msra.mxu0 0.0
    %568 = vmatpush.msra.mxu0 0.0
    %569 = vmatpush.msra.mxu0 0.0
    %570 = vmatpush.msra.mxu0 0.0
    %571 = vmatpush.msra.mxu0 0.0
    %572 = vmatpush.msra.mxu0 0.0
    %573 = vmatpush.msra.mxu0 0.0
    %574 = vmatpush.msra.mxu0 0.0
    %575 = vmatpush.msra.mxu0 0.0
    %576 = vmatpush.msra.mxu0 0.0
    %577 = vmatpush.msra.mxu0 %v561
    %578 = vmatpush.msra.mxu0 %v558
    %579 = vmatmul.f32.gmra.mxu0 %v211
    %v580 = vpop.f32.mrf.mxu0
    %v581 = vadd.f32 0.0, %v580
    %582 = vmatmul.f32.gmra.mxu0 %v214
    %v583 = vpop.f32.mrf.mxu0
    %v584 = vadd.f32 0.0, %v583
    %585 = vmatmul.f32.gmra.mxu0 %v217
    %v586 = vpop.f32.mrf.mxu0
    %v587 = vadd.f32 0.0, %v586
    %588 = vmatmul.f32.gmra.mxu0 %v220
    %v589 = vpop.f32.mrf.mxu0
    %v590 = vadd.f32 0.0, %v589
    %591 = vdwg.mxu0
    %v592 = vrcp.pop %v581
    %v593 = vmul.f32 %v581, %v592
    %v594 = vsub.f32 1.0, %v593
    %v595 = vmul.f32 %v592, %v594
    %v596 = vadd.f32 %v592, %v595
    %vm597 = vweird.f32 %v581
    %vm598 = vweird.f32 %v592
    %vm599 = vmor %vm597, %vm598
    %v600 = vsel %vm599, %v592, %v596
    %v601 = vand.u32 2147483647, %v581
    %vm602 = vcmp.eq.f32.partialorder %v601, 8.507059e+37
    %v603 = vand.u32 %v581, 2147483648
    %v604 = vor.u32 1.1754944e-38, %v603
    %v605 = vsel %vm602, %v604, %v600
    %v606 = vmul.f32 %v527, %v605
    %v607 = vrcp.pop %v584
    %v608 = vmul.f32 %v584, %v607
    %v609 = vsub.f32 1.0, %v608
    %v610 = vmul.f32 %v607, %v609
    %v611 = vadd.f32 %v607, %v610
    %vm612 = vweird.f32 %v584
    %vm613 = vweird.f32 %v607
    %vm614 = vmor %vm612, %vm613
    %v615 = vsel %vm614, %v607, %v611
    %v616 = vand.u32 2147483647, %v584
    %vm617 = vcmp.eq.f32.partialorder %v616, 8.507059e+37
    %v618 = vand.u32 %v584, 2147483648
    %v619 = vor.u32 1.1754944e-38, %v618
    %v620 = vsel %vm617, %v619, %v615
    %v621 = vmul.f32 %v529, %v620
    %v622 = vrcp.pop %v587
    %v623 = vmul.f32 %v587, %v622
    %v624 = vsub.f32 1.0, %v623
    %v625 = vmul.f32 %v622, %v624
    %v626 = vadd.f32 %v622, %v625
    %vm627 = vweird.f32 %v587
    %vm628 = vweird.f32 %v622
    %vm629 = vmor %vm627, %vm628
    %v630 = vsel %vm629, %v622, %v626
    %v631 = vand.u32 2147483647, %v587
    %vm632 = vcmp.eq.f32.partialorder %v631, 8.507059e+37
    %v633 = vand.u32 %v587, 2147483648
    %v634 = vor.u32 1.1754944e-38, %v633
    %v635 = vsel %vm632, %v634, %v630
    %v636 = vmul.f32 %v531, %v635
    %v637 = vrcp.pop %v590
    %v638 = vmul.f32 %v590, %v637
    %v639 = vsub.f32 1.0, %v638
    %v640 = vmul.f32 %v637, %v639
    %v641 = vadd.f32 %v637, %v640
    %vm642 = vweird.f32 %v590
    %vm643 = vweird.f32 %v637
    %vm644 = vmor %vm642, %vm643
    %v645 = vsel %vm644, %v637, %v641
    %v646 = vand.u32 2147483647, %v590
    %vm647 = vcmp.eq.f32.partialorder %v646, 8.507059e+37
    %v648 = vand.u32 %v590, 2147483648
    %v649 = vor.u32 1.1754944e-38, %v648
    %v650 = vsel %vm647, %v649, %v645
    %v651 = vmul.f32 %v533, %v650
    %653 = vset.pattern.permute.xlu0 0
    %654 = vperm.xlu0 %653, %v606
    %v655 = vpop.permute.xlu0 %654
    %658 = vset.pattern.permute.xlu0 0
    %659 = vperm.xlu0 %658, %v621
    %v660 = vpop.permute.xlu0 %659
    %663 = vset.pattern.permute.xlu0 0
    %664 = vperm.xlu0 %663, %v636
    %v665 = vpop.permute.xlu0 %664
    %668 = vset.pattern.permute.xlu0 0
    %669 = vperm.xlu0 %668, %v651
    %v670 = vpop.permute.xlu0 %669
    %v672 = vmul.f32 %v277, %v655
    %v673 = vmul.f32 %v280, %v660
    %v674 = vmul.f32 %v283, %v665
    %v675 = vmul.f32 %v286, %v670
    %v676 = vld [vmem:[%s6 + $0x20] sm:$0x1]
    %v677 = vperm.slane %v676, 0
    %678 = vmatpush.msra.mxu0 0.0
    %679 = vmatpush.msra.mxu0 0.0
    %680 = vmatpush.msra.mxu0 0.0
    %681 = vmatpush.msra.mxu0 0.0
    %682 = vmatpush.msra.mxu0 0.0
    %683 = vmatpush.msra.mxu0 0.0
    %684 = vmatpush.msra.mxu0 0.0
    %685 = vmatpush.msra.mxu0 0.0
    %686 = vmatpush.msra.mxu0 0.0
    %687 = vmatpush.msra.mxu0 0.0
    %688 = vmatpush.msra.mxu0 0.0
    %689 = vmatpush.msra.mxu0 0.0
    %690 = vmatpush.msra.mxu0 %v675
    %691 = vmatpush.msra.mxu0 %v674
    %692 = vmatpush.msra.mxu0 %v673
    %693 = vmatpush.msra.mxu0 %v672
    %694 = vmatmul.f32.gmra.mxu0 %v535
    %v695 = vpop.f32.mrf.mxu0
    %v696 = vadd.f32 %v677, %v695
    %697 = vmatmul.f32.gmra.mxu0 %v538
    %v698 = vpop.f32.mrf.mxu0
    %v699 = vadd.f32 %v677, %v698
    %700 = vdwg.mxu0
    %vm701 = vcmp.gt.f32.partialorder %v696, 0.0
    %vm702 = vcmp.gt.f32.partialorder %v699, 0.0
    %v703 = vmul.f32 %v696, 1.442695
    %v704 = vpow.pop %v703
    %v705 = vmul.f32 %v699, 1.442695
    %v706 = vpow.pop %v705
    %v707 = vsub.f32 %v704, 1.0
    %v708 = vsub.f32 %v706, 1.0
    %v709 = vsel %vm701, %v696, %v707
    %v710 = vsel %vm702, %v699, %v708
    %v711 = vld [vmem:[#allocation2] sm:$0xff]
    %v712 = vld [vmem:[#allocation2 + $0x8] sm:$0xff]
    %v713 = vld [vmem:[#allocation2 + $0x10] sm:$0xff]
    %v714 = vld [vmem:[#allocation2 + $0x18] sm:$0xff]
    %v715 = vld [vmem:[#allocation2 + $0x20] sm:$0xff]
    %v716 = vld [vmem:[#allocation2 + $0x28] sm:$0xff]
    %v717 = vld [vmem:[#allocation2 + $0x30] sm:$0xff]
    %v718 = vld [vmem:[#allocation2 + $0x38] sm:$0xff]
    %v719 = vld [vmem:[#allocation2 + $0x40] sm:$0xff]
    %v720 = vld [vmem:[#allocation2 + $0x48] sm:$0xff]
    %v721 = vld [vmem:[#allocation2 + $0x50] sm:$0xff]
    %v722 = vld [vmem:[#allocation2 + $0x58] sm:$0xff]
    %s723 = scalar_lea.vmem [#allocation2], 192
    %v724 = vld [vmem:[%s723] ss:$8 sm:$0x7]
    %v726 = vperm.slane %v724, 0
    %v727 = vperm.slane %v724, 1
    %v728 = vperm.slane %v724, 2
    %v733 = vsel %vm122, %v709, 0
    %v736 = vsel %vm122, %v710, 0
    %738 = vmatpush.msra.mxu0 0.0
    %739 = vmatpush.msra.mxu0 0.0
    %740 = vmatpush.msra.mxu0 0.0
    %741 = vmatpush.msra.mxu0 0.0
    %742 = vmatpush.msra.mxu0 0.0
    %743 = vmatpush.msra.mxu0 0.0
    %744 = vmatpush.msra.mxu0 0.0
    %745 = vmatpush.msra.mxu0 0.0
    %746 = vmatpush.msra.mxu0 0.0
    %747 = vmatpush.msra.mxu0 0.0
    %748 = vmatpush.msra.mxu0 0.0
    %749 = vmatpush.msra.mxu0 0.0
    %750 = vmatpush.msra.mxu0 %v720
    %751 = vmatpush.msra.mxu0 %v717
    %752 = vmatpush.msra.mxu0 %v714
    %753 = vmatpush.msra.mxu0 %v711
    %754 = vmatmul.f32.gmra.mxu0 %v733
    %v755 = vpop.f32.mrf.mxu0
    %v756 = vadd.f32 %v726, %v755
    %757 = vmatmul.f32.gmra.mxu0 %v736
    %v758 = vpop.f32.mrf.mxu0
    %v759 = vadd.f32 %v726, %v758
    %760 = vdwg.mxu0
    %761 = vmatpush.msra.mxu0 0.0
    %762 = vmatpush.msra.mxu0 0.0
    %763 = vmatpush.msra.mxu0 0.0
    %764 = vmatpush.msra.mxu0 0.0
    %765 = vmatpush.msra.mxu0 0.0
    %766 = vmatpush.msra.mxu0 0.0
    %767 = vmatpush.msra.mxu0 0.0
    %768 = vmatpush.msra.mxu0 0.0
    %769 = vmatpush.msra.mxu0 0.0
    %770 = vmatpush.msra.mxu0 0.0
    %771 = vmatpush.msra.mxu0 0.0
    %772 = vmatpush.msra.mxu0 0.0
    %773 = vmatpush.msra.mxu0 %v721
    %774 = vmatpush.msra.mxu0 %v718
    %775 = vmatpush.msra.mxu0 %v715
    %776 = vmatpush.msra.mxu0 %v712
    %777 = vmatmul.f32.gmra.mxu0 %v733
    %v778 = vpop.f32.mrf.mxu0
    %v779 = vadd.f32 %v727, %v778
    %780 = vmatmul.f32.gmra.mxu0 %v736
    %v781 = vpop.f32.mrf.mxu0
    %v782 = vadd.f32 %v727, %v781
    %783 = vdwg.mxu0
    %784 = vmatpush.msra.mxu0 0.0
    %785 = vmatpush.msra.mxu0 0.0
    %786 = vmatpush.msra.mxu0 0.0
    %787 = vmatpush.msra.mxu0 0.0
    %788 = vmatpush.msra.mxu0 0.0
    %789 = vmatpush.msra.mxu0 0.0
    %790 = vmatpush.msra.mxu0 0.0
    %791 = vmatpush.msra.mxu0 0.0
    %792 = vmatpush.msra.mxu0 0.0
    %793 = vmatpush.msra.mxu0 0.0
    %794 = vmatpush.msra.mxu0 0.0
    %795 = vmatpush.msra.mxu0 0.0
    %796 = vmatpush.msra.mxu0 %v722
    %797 = vmatpush.msra.mxu0 %v719
    %798 = vmatpush.msra.mxu0 %v716
    %799 = vmatpush.msra.mxu0 %v713
    %800 = vmatmul.f32.gmra.mxu0 %v733
    %v801 = vpop.f32.mrf.mxu0
    %v802 = vadd.f32 %v728, %v801
    %803 = vmatmul.f32.gmra.mxu0 %v736
    %v804 = vpop.f32.mrf.mxu0
    %v805 = vadd.f32 %v728, %v804
    %806 = vdwg.mxu0
    %v807 = vld [vmem:[#allocation2 + $0x60] sm:$0xff]
    %v808 = vld [vmem:[#allocation2 + $0x68] sm:$0xff]
    %v809 = vld [vmem:[#allocation2 + $0x70] sm:$0xff]
    %v810 = vld [vmem:[#allocation2 + $0x78] sm:$0xff]
    %v811 = vld [vmem:[#allocation2 + $0x80] sm:$0xff]
    %v812 = vld [vmem:[#allocation2 + $0x88] sm:$0xff]
    %v813 = vld [vmem:[#allocation2 + $0x90] sm:$0xff]
    %v814 = vld [vmem:[#allocation2 + $0x98] sm:$0xff]
    %v815 = vld [vmem:[#allocation2 + $0xa0] sm:$0xff]
    %v816 = vld [vmem:[#allocation2 + $0xa8] sm:$0xff]
    %v817 = vld [vmem:[#allocation2 + $0xb0] sm:$0xff]
    %v818 = vld [vmem:[#allocation2 + $0xb8] sm:$0xff]
    %s819 = scalar_lea.vmem [#allocation2], 216
    %v820 = vld [vmem:[%s819] ss:$8 sm:$0x7]
    %v822 = vperm.slane %v820, 0
    %v823 = vperm.slane %v820, 1
    %v824 = vperm.slane %v820, 2
    %828 = vmatpush.msra.mxu0 0.0
    %829 = vmatpush.msra.mxu0 0.0
    %830 = vmatpush.msra.mxu0 0.0
    %831 = vmatpush.msra.mxu0 0.0
    %832 = vmatpush.msra.mxu0 0.0
    %833 = vmatpush.msra.mxu0 0.0
    %834 = vmatpush.msra.mxu0 0.0
    %835 = vmatpush.msra.mxu0 0.0
    %836 = vmatpush.msra.mxu0 0.0
    %837 = vmatpush.msra.mxu0 0.0
    %838 = vmatpush.msra.mxu0 0.0
    %839 = vmatpush.msra.mxu0 0.0
    %840 = vmatpush.msra.mxu0 %v816
    %841 = vmatpush.msra.mxu0 %v813
    %842 = vmatpush.msra.mxu0 %v810
    %843 = vmatpush.msra.mxu0 %v807
    %844 = vmatmul.f32.gmra.mxu0 %v124
    %v845 = vpop.f32.mrf.mxu0
    %v846 = vadd.f32 %v822, %v845
    %847 = vmatmul.f32.gmra.mxu0 %v127
    %v848 = vpop.f32.mrf.mxu0
    %v849 = vadd.f32 %v822, %v848
    %850 = vdwg.mxu0
    %851 = vmatpush.msra.mxu0 0.0
    %852 = vmatpush.msra.mxu0 0.0
    %853 = vmatpush.msra.mxu0 0.0
    %854 = vmatpush.msra.mxu0 0.0
    %855 = vmatpush.msra.mxu0 0.0
    %856 = vmatpush.msra.mxu0 0.0
    %857 = vmatpush.msra.mxu0 0.0
    %858 = vmatpush.msra.mxu0 0.0
    %859 = vmatpush.msra.mxu0 0.0
    %860 = vmatpush.msra.mxu0 0.0
    %861 = vmatpush.msra.mxu0 0.0
    %862 = vmatpush.msra.mxu0 0.0
    %863 = vmatpush.msra.mxu0 %v817
    %864 = vmatpush.msra.mxu0 %v814
    %865 = vmatpush.msra.mxu0 %v811
    %866 = vmatpush.msra.mxu0 %v808
    %867 = vmatmul.f32.gmra.mxu0 %v124
    %v868 = vpop.f32.mrf.mxu0
    %v869 = vadd.f32 %v823, %v868
    %870 = vmatmul.f32.gmra.mxu0 %v127
    %v871 = vpop.f32.mrf.mxu0
    %v872 = vadd.f32 %v823, %v871
    %873 = vdwg.mxu0
    %874 = vmatpush.msra.mxu0 0.0
    %875 = vmatpush.msra.mxu0 0.0
    %876 = vmatpush.msra.mxu0 0.0
    %877 = vmatpush.msra.mxu0 0.0
    %878 = vmatpush.msra.mxu0 0.0
    %879 = vmatpush.msra.mxu0 0.0
    %880 = vmatpush.msra.mxu0 0.0
    %881 = vmatpush.msra.mxu0 0.0
    %882 = vmatpush.msra.mxu0 0.0
    %883 = vmatpush.msra.mxu0 0.0
    %884 = vmatpush.msra.mxu0 0.0
    %885 = vmatpush.msra.mxu0 0.0
    %886 = vmatpush.msra.mxu0 %v818
    %887 = vmatpush.msra.mxu0 %v815
    %888 = vmatpush.msra.mxu0 %v812
    %889 = vmatpush.msra.mxu0 %v809
    %890 = vmatmul.f32.gmra.mxu0 %v124
    %v891 = vpop.f32.mrf.mxu0
    %v892 = vadd.f32 %v824, %v891
    %893 = vmatmul.f32.gmra.mxu0 %v127
    %v894 = vpop.f32.mrf.mxu0
    %v895 = vadd.f32 %v824, %v894
    %896 = vdwg.mxu0
    %v897 = vadd.f32 %v756, %v846
    %v898 = vadd.f32 %v759, %v849
    %v899 = vxor.u32 %v897, 2147483648
    %v900 = vxor.u32 %v898, 2147483648
    %v901 = vmul.f32 %v899, 1.442695
    %v902 = vpow.pop %v901
    %v903 = vmul.f32 %v900, 1.442695
    %v904 = vpow.pop %v903
    %v905 = vadd.f32 %v902, 1.0
    %v906 = vadd.f32 %v904, 1.0
    %v907 = vrcp.pop %v905
    %v908 = vmul.f32 %v905, %v907
    %v909 = vsub.f32 1.0, %v908
    %v910 = vmul.f32 %v907, %v909
    %v911 = vadd.f32 %v907, %v910
    %vm912 = vweird.f32 %v905
    %vm913 = vweird.f32 %v907
    %vm914 = vmor %vm912, %vm913
    %v915 = vsel %vm914, %v907, %v911
    %v916 = vand.u32 2147483647, %v905
    %vm917 = vcmp.eq.f32.partialorder %v916, 8.507059e+37
    %v918 = vand.u32 %v905, 2147483648
    %v919 = vor.u32 1.1754944e-38, %v918
    %v920 = vsel %vm917, %v919, %v915
    %v921 = vmul.f32 1.0, %v920
    %v922 = vrcp.pop %v906
    %v923 = vmul.f32 %v906, %v922
    %v924 = vsub.f32 1.0, %v923
    %v925 = vmul.f32 %v922, %v924
    %v926 = vadd.f32 %v922, %v925
    %vm927 = vweird.f32 %v906
    %vm928 = vweird.f32 %v922
    %vm929 = vmor %vm927, %vm928
    %v930 = vsel %vm929, %v922, %v926
    %v931 = vand.u32 2147483647, %v906
    %vm932 = vcmp.eq.f32.partialorder %v931, 8.507059e+37
    %v933 = vand.u32 %v906, 2147483648
    %v934 = vor.u32 1.1754944e-38, %v933
    %v935 = vsel %vm932, %v934, %v930
    %v936 = vmul.f32 1.0, %v935
    %v937 = vadd.f32 %v779, %v869
    %v938 = vadd.f32 %v782, %v872
    %v939 = vxor.u32 %v937, 2147483648
    %v940 = vxor.u32 %v938, 2147483648
    %v941 = vmul.f32 %v939, 1.442695
    %v942 = vpow.pop %v941
    %v943 = vmul.f32 %v940, 1.442695
    %v944 = vpow.pop %v943
    %v945 = vadd.f32 %v942, 1.0
    %v946 = vadd.f32 %v944, 1.0
    %v947 = vrcp.pop %v945
    %v948 = vmul.f32 %v945, %v947
    %v949 = vsub.f32 1.0, %v948
    %v950 = vmul.f32 %v947, %v949
    %v951 = vadd.f32 %v947, %v950
    %vm952 = vweird.f32 %v945
    %vm953 = vweird.f32 %v947
    %vm954 = vmor %vm952, %vm953
    %v955 = vsel %vm954, %v947, %v951
    %v956 = vand.u32 2147483647, %v945
    %vm957 = vcmp.eq.f32.partialorder %v956, 8.507059e+37
    %v958 = vand.u32 %v945, 2147483648
    %v959 = vor.u32 1.1754944e-38, %v958
    %v960 = vsel %vm957, %v959, %v955
    %v961 = vmul.f32 1.0, %v960
    %v962 = vrcp.pop %v946
    %v963 = vmul.f32 %v946, %v962
    %v964 = vsub.f32 1.0, %v963
    %v965 = vmul.f32 %v962, %v964
    %v966 = vadd.f32 %v962, %v965
    %vm967 = vweird.f32 %v946
    %vm968 = vweird.f32 %v962
    %vm969 = vmor %vm967, %vm968
    %v970 = vsel %vm969, %v962, %v966
    %v971 = vand.u32 2147483647, %v946
    %vm972 = vcmp.eq.f32.partialorder %v971, 8.507059e+37
    %v973 = vand.u32 %v946, 2147483648
    %v974 = vor.u32 1.1754944e-38, %v973
    %v975 = vsel %vm972, %v974, %v970
    %v976 = vmul.f32 1.0, %v975
    %v977 = vmul.f32 %v921, %v892
    %v978 = vmul.f32 %v936, %v895
    %v979 = vadd.f32 %v802, %v977
    %v980 = vadd.f32 %v805, %v978
    %v981 = vtanh.pop %v979
    %v982 = vtanh.pop %v980
    %v983 = vsub.f32 1.0, %v961
    %v984 = vsub.f32 1.0, %v976
    %v985 = vmul.f32 %v983, %v981
    %v986 = vmul.f32 %v984, %v982
    %v987 = vmul.f32 %v961, %v108
    %v988 = vmul.f32 %v976, %v109
    %v989 = vadd.f32 %v985, %v987
    %v990 = vadd.f32 %v986, %v988
    %v991 = vmax.f32 %v989, 0.0
    %v992 = vmax.f32 %v990, 0.0
    %v993 = vld [vmem:[%s6 + $0x28] sm:$0xff]
    %v994 = vld [vmem:[%s6 + $0x30] sm:$0xff]
    %v995 = vld [vmem:[%s6 + $0x38] sm:$0xff]
    %v996 = vld [vmem:[%s6 + $0x40] sm:$0xff]
    %v998 = vsel %vm122, %v991, 0
    %v1001 = vsel %vm122, %v992, 0
    %1003 = vmatpush.msra.mxu0 0.0
    %1004 = vmatpush.msra.mxu0 0.0
    %1005 = vmatpush.msra.mxu0 0.0
    %1006 = vmatpush.msra.mxu0 0.0
    %1007 = vmatpush.msra.mxu0 0.0
    %1008 = vmatpush.msra.mxu0 0.0
    %1009 = vmatpush.msra.mxu0 0.0
    %1010 = vmatpush.msra.mxu0 0.0
    %1011 = vmatpush.msra.mxu0 0.0
    %1012 = vmatpush.msra.mxu0 0.0
    %1013 = vmatpush.msra.mxu0 0.0
    %1014 = vmatpush.msra.mxu0 0.0
    %1015 = vmatpush.msra.mxu0 %v996
    %1016 = vmatpush.msra.mxu0 %v995
    %1017 = vmatpush.msra.mxu0 %v994
    %1018 = vmatpush.msra.mxu0 %v993
    %1019 = vmatmul.f32.gmra.mxu0 %v998
    %v1020 = vpop.f32.mrf.mxu0
    %v1021 = vadd.f32 0.0, %v1020
    %1022 = vmatmul.f32.gmra.mxu0 %v1001
    %v1023 = vpop.f32.mrf.mxu0
    %v1024 = vadd.f32 0.0, %v1023
    %1025 = vdwg.mxu0
    %v1027 = vsel %vm122, %v1021, 0
    %v1030 = vsel %vm122, %v1024, 0
    %1032 = vmatpush.msra.mxu0 0.0
    %1033 = vmatpush.msra.mxu0 0.0
    %1034 = vmatpush.msra.mxu0 0.0
    %1035 = vmatpush.msra.mxu0 0.0
    %1036 = vmatpush.msra.mxu0 0.0
    %1037 = vmatpush.msra.mxu0 0.0
    %1038 = vmatpush.msra.mxu0 0.0
    %1039 = vmatpush.msra.mxu0 0.0
    %1040 = vmatpush.msra.mxu0 0.0
    %1041 = vmatpush.msra.mxu0 0.0
    %1042 = vmatpush.msra.mxu0 0.0
    %1043 = vmatpush.msra.mxu0 0.0
    %1044 = vmatpush.msra.mxu0 %v395
    %1045 = vmatpush.msra.mxu0 %v394
    %1046 = vmatpush.msra.mxu0 %v393
    %1047 = vmatpush.msra.mxu0 %v392
    %1048 = vmatmul.f32.gmra.mxu0 %v1027
    %v1049 = vpop.f32.mrf.mxu0
    %v1050 = vadd.f32 0.0, %v1049
    %1051 = vmatmul.f32.gmra.mxu0 %v1030
    %v1052 = vpop.f32.mrf.mxu0
    %v1053 = vadd.f32 0.0, %v1052
    %1054 = vdwg.mxu0
    %1055 = vmatpush.msra.mxu0 0.0
    %1056 = vmatpush.msra.mxu0 0.0
    %1057 = vmatpush.msra.mxu0 0.0
    %1058 = vmatpush.msra.mxu0 0.0
    %1059 = vmatpush.msra.mxu0 0.0
    %1060 = vmatpush.msra.mxu0 0.0
    %1061 = vmatpush.msra.mxu0 0.0
    %1062 = vmatpush.msra.mxu0 0.0
    %1063 = vmatpush.msra.mxu0 0.0
    %1064 = vmatpush.msra.mxu0 0.0
    %1065 = vmatpush.msra.mxu0 0.0
    %1066 = vmatpush.msra.mxu0 0.0
    %1067 = vmatpush.msra.mxu0 0.0
    %1068 = vmatpush.msra.mxu0 0.0
    %1069 = vmatpush.msra.mxu0 %v1053
    %1070 = vmatpush.msra.mxu0 %v1050
    %1071 = vmatmul.f32.gmra.mxu0 %v199
    %v1072 = vpop.f32.mrf.mxu0
    %v1073 = vadd.f32 0.0, %v1072
    %1074 = vmatmul.f32.gmra.mxu0 %v202
    %v1075 = vpop.f32.mrf.mxu0
    %v1076 = vadd.f32 0.0, %v1075
    %1077 = vmatmul.f32.gmra.mxu0 %v205
    %v1078 = vpop.f32.mrf.mxu0
    %v1079 = vadd.f32 0.0, %v1078
    %1080 = vmatmul.f32.gmra.mxu0 %v208
    %v1081 = vpop.f32.mrf.mxu0
    %v1082 = vadd.f32 0.0, %v1081
    %1083 = vmatmul.f32.gmra.mxu0 %v211
    %v1084 = vpop.f32.mrf.mxu0
    %v1085 = vadd.f32 0.0, %v1084
    %1086 = vmatmul.f32.gmra.mxu0 %v214
    %v1087 = vpop.f32.mrf.mxu0
    %v1088 = vadd.f32 0.0, %v1087
    %1089 = vmatmul.f32.gmra.mxu0 %v217
    %v1090 = vpop.f32.mrf.mxu0
    %v1091 = vadd.f32 0.0, %v1090
    %1092 = vmatmul.f32.gmra.mxu0 %v220
    %v1093 = vpop.f32.mrf.mxu0
    %v1094 = vadd.f32 0.0, %v1093
    %1095 = vdwg.mxu0
    %1100 = vrot.lane.b32.xlu0 %v1085, 127
    %v1101 = vpop.permute.xlu0 %1100
    %1102 = vrot.lane.b32.xlu0 %v1088, 127
    %v1103 = vpop.permute.xlu0 %1102
    %1104 = vrot.lane.b32.xlu0 %v1091, 127
    %v1105 = vpop.permute.xlu0 %1104
    %1106 = vrot.lane.b32.xlu0 %v1094, 127
    %v1107 = vpop.permute.xlu0 %1106
    %v1112 = vadd.f32 %v1073, %v1101
    %v1113 = vadd.f32 %v1076, %v1103
    %v1114 = vadd.f32 %v1079, %v1105
    %v1115 = vadd.f32 %v1082, %v1107
    %vm1116 = vcmp.gt.f32.partialorder %v1112, 0.0
    %vm1117 = vcmp.gt.f32.partialorder %v1113, 0.0
    %vm1118 = vcmp.gt.f32.partialorder %v1114, 0.0
    %vm1119 = vcmp.gt.f32.partialorder %v1115, 0.0
    %v1120 = vmul.f32 %v1112, 0.01
    %v1121 = vmul.f32 %v1113, 0.01
    %v1122 = vmul.f32 %v1114, 0.01
    %v1123 = vmul.f32 %v1115, 0.01
    %v1124 = vsel %vm1116, %v1112, %v1120
    %v1125 = vsel %vm1117, %v1113, %v1121
    %v1126 = vsel %vm1118, %v1114, %v1122
    %v1127 = vsel %vm1119, %v1115, %v1123
    %1129 = vset.pattern.permute.xlu0 0
    %1130 = vperm.xlu0 %1129, %v1124
    %v1131 = vpop.permute.xlu0 %1130
    %1134 = vset.pattern.permute.xlu0 0
    %1135 = vperm.xlu0 %1134, %v1125
    %v1136 = vpop.permute.xlu0 %1135
    %1139 = vset.pattern.permute.xlu0 0
    %1140 = vperm.xlu0 %1139, %v1126
    %v1141 = vpop.permute.xlu0 %1140
    %1144 = vset.pattern.permute.xlu0 0
    %1145 = vperm.xlu0 %1144, %v1127
    %v1146 = vpop.permute.xlu0 %1145
    %v1148 = vsel %vm465, %v1131, -1e+30
    %v1149 = vsel %vm466, %v1136, -1e+30
    %v1150 = vsel %vm467, %v1141, -1e+30
    %v1151 = vsel %vm468, %v1146, -1e+30
    %v1152 = vsel %vm74, %v1148, -inf
    %v1153 = vsel %vm74, %v1149, -inf
    %v1154 = vsel %vm74, %v1150, -inf
    %v1155 = vsel %vm74, %v1151, -inf
    %v1156 = vmax.f32 %v1152, %v1153
    %v1157 = vmax.f32 %v1154, %v1155
    %v1158 = vmax.f32 %v1156, %v1157
    %v1159 = vrot.slane %v1158, 4
    %v1160 = vmax.f32 %v1158, %v1159
    %v1161 = vrot.slane %v1160, 2
    %v1162 = vmax.f32 %v1160, %v1161
    %v1163 = vrot.slane %v1162, 1
    %v1164 = vmax.f32 %v1162, %v1163
    %v1165 = vsel %vm465, %v1164, -1e+30
    %v1166 = vsel %vm466, %v1164, -1e+30
    %v1167 = vsel %vm467, %v1164, -1e+30
    %v1168 = vsel %vm468, %v1164, -1e+30
    %v1169 = vsel %vm74, %v1165, -inf
    %1170 = vmax.xlane.f32.xlu0 %v1169
    %v1171 = vpop.xlane.xlu0 %1170
    %v1172 = vsel %vm74, %v1166, -inf
    %1173 = vmax.xlane.f32.xlu0 %v1172
    %v1174 = vpop.xlane.xlu0 %1173
    %v1175 = vsel %vm74, %v1167, -inf
    %1176 = vmax.xlane.f32.xlu0 %v1175
    %v1177 = vpop.xlane.xlu0 %1176
    %v1178 = vsel %vm74, %v1168, -inf
    %1179 = vmax.xlane.f32.xlu0 %v1178
    %v1180 = vpop.xlane.xlu0 %1179
    %v1181 = vsub.f32 %v1124, %v1171
    %v1182 = vsub.f32 %v1125, %v1174
    %v1183 = vsub.f32 %v1126, %v1177
    %v1184 = vsub.f32 %v1127, %v1180
    %v1185 = vmul.f32 %v1181, 1.442695
    %v1186 = vpow.pop %v1185
    %v1187 = vmul.f32 %v1182, 1.442695
    %v1188 = vpow.pop %v1187
    %v1189 = vmul.f32 %v1183, 1.442695
    %v1190 = vpow.pop %v1189
    %v1191 = vmul.f32 %v1184, 1.442695
    %v1192 = vpow.pop %v1191
    %1193 = vmatpush.msra.mxu0 0.0
    %1194 = vmatpush.msra.mxu0 0.0
    %1195 = vmatpush.msra.mxu0 0.0
    %1196 = vmatpush.msra.mxu0 0.0
    %1197 = vmatpush.msra.mxu0 0.0
    %1198 = vmatpush.msra.mxu0 0.0
    %1199 = vmatpush.msra.mxu0 0.0
    %1200 = vmatpush.msra.mxu0 0.0
    %1201 = vmatpush.msra.mxu0 0.0
    %1202 = vmatpush.msra.mxu0 0.0
    %1203 = vmatpush.msra.mxu0 0.0
    %1204 = vmatpush.msra.mxu0 0.0
    %1205 = vmatpush.msra.mxu0 %v1192
    %1206 = vmatpush.msra.mxu0 %v1190
    %1207 = vmatpush.msra.mxu0 %v1188
    %1208 = vmatpush.msra.mxu0 %v1186
    %1209 = vmatmul.f32.gmra.mxu0 %v535
    %v1210 = vpop.f32.mrf.mxu0
    %v1211 = vadd.f32 0.0, %v1210
    %1212 = vmatmul.f32.gmra.mxu0 %v538
    %v1213 = vpop.f32.mrf.mxu0
    %v1214 = vadd.f32 0.0, %v1213
    %1215 = vdwg.mxu0
    %1216 = vmatpush.msra.mxu0 0.0
    %1217 = vmatpush.msra.mxu0 0.0
    %1218 = vmatpush.msra.mxu0 0.0
    %1219 = vmatpush.msra.mxu0 0.0
    %1220 = vmatpush.msra.mxu0 0.0
    %1221 = vmatpush.msra.mxu0 0.0
    %1222 = vmatpush.msra.mxu0 0.0
    %1223 = vmatpush.msra.mxu0 0.0
    %1224 = vmatpush.msra.mxu0 0.0
    %1225 = vmatpush.msra.mxu0 0.0
    %1226 = vmatpush.msra.mxu0 0.0
    %1227 = vmatpush.msra.mxu0 0.0
    %1228 = vmatpush.msra.mxu0 0.0
    %1229 = vmatpush.msra.mxu0 0.0
    %1230 = vmatpush.msra.mxu0 %v1214
    %1231 = vmatpush.msra.mxu0 %v1211
    %1232 = vmatmul.f32.gmra.mxu0 %v211
    %v1233 = vpop.f32.mrf.mxu0
    %v1234 = vadd.f32 0.0, %v1233
    %1235 = vmatmul.f32.gmra.mxu0 %v214
    %v1236 = vpop.f32.mrf.mxu0
    %v1237 = vadd.f32 0.0, %v1236
    %1238 = vmatmul.f32.gmra.mxu0 %v217
    %v1239 = vpop.f32.mrf.mxu0
    %v1240 = vadd.f32 0.0, %v1239
    %1241 = vmatmul.f32.gmra.mxu0 %v220
    %v1242 = vpop.f32.mrf.mxu0
    %v1243 = vadd.f32 0.0, %v1242
    %1244 = vdwg.mxu0
    %v1245 = vrcp.pop %v1234
    %v1246 = vmul.f32 %v1234, %v1245
    %v1247 = vsub.f32 1.0, %v1246
    %v1248 = vmul.f32 %v1245, %v1247
    %v1249 = vadd.f32 %v1245, %v1248
    %vm1250 = vweird.f32 %v1234
    %vm1251 = vweird.f32 %v1245
    %vm1252 = vmor %vm1250, %vm1251
    %v1253 = vsel %vm1252, %v1245, %v1249
    %v1254 = vand.u32 2147483647, %v1234
    %vm1255 = vcmp.eq.f32.partialorder %v1254, 8.507059e+37
    %v1256 = vand.u32 %v1234, 2147483648
    %v1257 = vor.u32 1.1754944e-38, %v1256
    %v1258 = vsel %vm1255, %v1257, %v1253
    %v1259 = vmul.f32 %v1186, %v1258
    %v1260 = vrcp.pop %v1237
    %v1261 = vmul.f32 %v1237, %v1260
    %v1262 = vsub.f32 1.0, %v1261
    %v1263 = vmul.f32 %v1260, %v1262
    %v1264 = vadd.f32 %v1260, %v1263
    %vm1265 = vweird.f32 %v1237
    %vm1266 = vweird.f32 %v1260
    %vm1267 = vmor %vm1265, %vm1266
    %v1268 = vsel %vm1267, %v1260, %v1264
    %v1269 = vand.u32 2147483647, %v1237
    %vm1270 = vcmp.eq.f32.partialorder %v1269, 8.507059e+37
    %v1271 = vand.u32 %v1237, 2147483648
    %v1272 = vor.u32 1.1754944e-38, %v1271
    %v1273 = vsel %vm1270, %v1272, %v1268
    %v1274 = vmul.f32 %v1188, %v1273
    %v1275 = vrcp.pop %v1240
    %v1276 = vmul.f32 %v1240, %v1275
    %v1277 = vsub.f32 1.0, %v1276
    %v1278 = vmul.f32 %v1275, %v1277
    %v1279 = vadd.f32 %v1275, %v1278
    %vm1280 = vweird.f32 %v1240
    %vm1281 = vweird.f32 %v1275
    %vm1282 = vmor %vm1280, %vm1281
    %v1283 = vsel %vm1282, %v1275, %v1279
    %v1284 = vand.u32 2147483647, %v1240
    %vm1285 = vcmp.eq.f32.partialorder %v1284, 8.507059e+37
    %v1286 = vand.u32 %v1240, 2147483648
    %v1287 = vor.u32 1.1754944e-38, %v1286
    %v1288 = vsel %vm1285, %v1287, %v1283
    %v1289 = vmul.f32 %v1190, %v1288
    %v1290 = vrcp.pop %v1243
    %v1291 = vmul.f32 %v1243, %v1290
    %v1292 = vsub.f32 1.0, %v1291
    %v1293 = vmul.f32 %v1290, %v1292
    %v1294 = vadd.f32 %v1290, %v1293
    %vm1295 = vweird.f32 %v1243
    %vm1296 = vweird.f32 %v1290
    %vm1297 = vmor %vm1295, %vm1296
    %v1298 = vsel %vm1297, %v1290, %v1294
    %v1299 = vand.u32 2147483647, %v1243
    %vm1300 = vcmp.eq.f32.partialorder %v1299, 8.507059e+37
    %v1301 = vand.u32 %v1243, 2147483648
    %v1302 = vor.u32 1.1754944e-38, %v1301
    %v1303 = vsel %vm1300, %v1302, %v1298
    %v1304 = vmul.f32 %v1192, %v1303
    %1305 = vmatpush.msra.mxu0 0.0
    %1306 = vmatpush.msra.mxu0 0.0
    %1307 = vmatpush.msra.mxu0 0.0
    %1308 = vmatpush.msra.mxu0 0.0
    %1309 = vmatpush.msra.mxu0 0.0
    %1310 = vmatpush.msra.mxu0 0.0
    %1311 = vmatpush.msra.mxu0 0.0
    %1312 = vmatpush.msra.mxu0 0.0
    %1313 = vmatpush.msra.mxu0 0.0
    %1314 = vmatpush.msra.mxu0 0.0
    %1315 = vmatpush.msra.mxu0 0.0
    %1316 = vmatpush.msra.mxu0 0.0
    %1317 = vmatpush.msra.mxu0 0.0
    %1318 = vmatpush.msra.mxu0 0.0
    %1319 = vmatpush.msra.mxu0 %v1024
    %1320 = vmatpush.msra.mxu0 %v1021
    %1321 = vmatmul.f32.gmra.mxu0 %v199
    %v1322 = vpop.f32.mrf.mxu0
    %v1323 = vadd.f32 0.0, %v1322
    %1324 = vmatmul.f32.gmra.mxu0 %v202
    %v1325 = vpop.f32.mrf.mxu0
    %v1326 = vadd.f32 0.0, %v1325
    %1327 = vmatmul.f32.gmra.mxu0 %v205
    %v1328 = vpop.f32.mrf.mxu0
    %v1329 = vadd.f32 0.0, %v1328
    %1330 = vmatmul.f32.gmra.mxu0 %v208
    %v1331 = vpop.f32.mrf.mxu0
    %v1332 = vadd.f32 0.0, %v1331
    %1333 = vdwg.mxu0
    %1335 = vset.pattern.permute.xlu0 0
    %1336 = vperm.xlu0 %1335, %v1259
    %v1337 = vpop.permute.xlu0 %1336
    %1340 = vset.pattern.permute.xlu0 0
    %1341 = vperm.xlu0 %1340, %v1274
    %v1342 = vpop.permute.xlu0 %1341
    %1345 = vset.pattern.permute.xlu0 0
    %1346 = vperm.xlu0 %1345, %v1289
    %v1347 = vpop.permute.xlu0 %1346
    %1350 = vset.pattern.permute.xlu0 0
    %1351 = vperm.xlu0 %1350, %v1304
    %v1352 = vpop.permute.xlu0 %1351
    %v1354 = vmul.f32 %v1323, %v1337
    %v1355 = vmul.f32 %v1326, %v1342
    %v1356 = vmul.f32 %v1329, %v1347
    %v1357 = vmul.f32 %v1332, %v1352
    %v1358 = vld [vmem:[%s6 + $0x48] sm:$0x1]
    %v1359 = vperm.slane %v1358, 0
    %1360 = vmatpush.msra.mxu0 0.0
    %1361 = vmatpush.msra.mxu0 0.0
    %1362 = vmatpush.msra.mxu0 0.0
    %1363 = vmatpush.msra.mxu0 0.0
    %1364 = vmatpush.msra.mxu0 0.0
    %1365 = vmatpush.msra.mxu0 0.0
    %1366 = vmatpush.msra.mxu0 0.0
    %1367 = vmatpush.msra.mxu0 0.0
    %1368 = vmatpush.msra.mxu0 0.0
    %1369 = vmatpush.msra.mxu0 0.0
    %1370 = vmatpush.msra.mxu0 0.0
    %1371 = vmatpush.msra.mxu0 0.0
    %1372 = vmatpush.msra.mxu0 %v1357
    %1373 = vmatpush.msra.mxu0 %v1356
    %1374 = vmatpush.msra.mxu0 %v1355
    %1375 = vmatpush.msra.mxu0 %v1354
    %1376 = vmatmul.f32.gmra.mxu0 %v535
    %v1377 = vpop.f32.mrf.mxu0
    %v1378 = vadd.f32 %v1359, %v1377
    %1379 = vmatmul.f32.gmra.mxu0 %v538
    %v1380 = vpop.f32.mrf.mxu0
    %v1381 = vadd.f32 %v1359, %v1380
    %1382 = vdwg.mxu0
    %vm1383 = vcmp.gt.f32.partialorder %v1378, 0.0
    %vm1384 = vcmp.gt.f32.partialorder %v1381, 0.0
    %v1385 = vmul.f32 %v1378, 1.442695
    %v1386 = vpow.pop %v1385
    %v1387 = vmul.f32 %v1381, 1.442695
    %v1388 = vpow.pop %v1387
    %v1389 = vsub.f32 %v1386, 1.0
    %v1390 = vsub.f32 %v1388, 1.0
    %v1391 = vsel %vm1383, %v1378, %v1389
    %v1392 = vsel %vm1384, %v1381, %v1390
    %v1393 = vld [vmem:[#allocation2 + $0xf0] sm:$0xff]
    %v1394 = vld [vmem:[#allocation2 + $0xf8] sm:$0xff]
    %v1395 = vld [vmem:[#allocation2 + $0x100] sm:$0xff]
    %v1396 = vld [vmem:[#allocation2 + $0x108] sm:$0xff]
    %v1397 = vld [vmem:[#allocation2 + $0x110] sm:$0xff]
    %v1398 = vld [vmem:[#allocation2 + $0x118] sm:$0xff]
    %v1399 = vld [vmem:[#allocation2 + $0x120] sm:$0xff]
    %v1400 = vld [vmem:[#allocation2 + $0x128] sm:$0xff]
    %v1401 = vld [vmem:[#allocation2 + $0x130] sm:$0xff]
    %v1402 = vld [vmem:[#allocation2 + $0x138] sm:$0xff]
    %v1403 = vld [vmem:[#allocation2 + $0x140] sm:$0xff]
    %v1404 = vld [vmem:[#allocation2 + $0x148] sm:$0xff]
    %s1405 = scalar_lea.vmem [#allocation2], 432
    %v1406 = vld [vmem:[%s1405] ss:$8 sm:$0x7]
    %v1408 = vperm.slane %v1406, 0
    %v1409 = vperm.slane %v1406, 1
    %v1410 = vperm.slane %v1406, 2
    %v1415 = vsel %vm122, %v1391, 0
    %v1418 = vsel %vm122, %v1392, 0
    %1420 = vmatpush.msra.mxu0 0.0
    %1421 = vmatpush.msra.mxu0 0.0
    %1422 = vmatpush.msra.mxu0 0.0
    %1423 = vmatpush.msra.mxu0 0.0
    %1424 = vmatpush.msra.mxu0 0.0
    %1425 = vmatpush.msra.mxu0 0.0
    %1426 = vmatpush.msra.mxu0 0.0
    %1427 = vmatpush.msra.mxu0 0.0
    %1428 = vmatpush.msra.mxu0 0.0
    %1429 = vmatpush.msra.mxu0 0.0
    %1430 = vmatpush.msra.mxu0 0.0
    %1431 = vmatpush.msra.mxu0 0.0
    %1432 = vmatpush.msra.mxu0 %v1402
    %1433 = vmatpush.msra.mxu0 %v1399
    %1434 = vmatpush.msra.mxu0 %v1396
    %1435 = vmatpush.msra.mxu0 %v1393
    %1436 = vmatmul.f32.gmra.mxu0 %v1415
    %v1437 = vpop.f32.mrf.mxu0
    %v1438 = vadd.f32 %v1408, %v1437
    %1439 = vmatmul.f32.gmra.mxu0 %v1418
    %v1440 = vpop.f32.mrf.mxu0
    %v1441 = vadd.f32 %v1408, %v1440
    %1442 = vdwg.mxu0
    %1443 = vmatpush.msra.mxu0 0.0
    %1444 = vmatpush.msra.mxu0 0.0
    %1445 = vmatpush.msra.mxu0 0.0
    %1446 = vmatpush.msra.mxu0 0.0
    %1447 = vmatpush.msra.mxu0 0.0
    %1448 = vmatpush.msra.mxu0 0.0
    %1449 = vmatpush.msra.mxu0 0.0
    %1450 = vmatpush.msra.mxu0 0.0
    %1451 = vmatpush.msra.mxu0 0.0
    %1452 = vmatpush.msra.mxu0 0.0
    %1453 = vmatpush.msra.mxu0 0.0
    %1454 = vmatpush.msra.mxu0 0.0
    %1455 = vmatpush.msra.mxu0 %v1403
    %1456 = vmatpush.msra.mxu0 %v1400
    %1457 = vmatpush.msra.mxu0 %v1397
    %1458 = vmatpush.msra.mxu0 %v1394
    %1459 = vmatmul.f32.gmra.mxu0 %v1415
    %v1460 = vpop.f32.mrf.mxu0
    %v1461 = vadd.f32 %v1409, %v1460
    %1462 = vmatmul.f32.gmra.mxu0 %v1418
    %v1463 = vpop.f32.mrf.mxu0
    %v1464 = vadd.f32 %v1409, %v1463
    %1465 = vdwg.mxu0
    %1466 = vmatpush.msra.mxu0 0.0
    %1467 = vmatpush.msra.mxu0 0.0
    %1468 = vmatpush.msra.mxu0 0.0
    %1469 = vmatpush.msra.mxu0 0.0
    %1470 = vmatpush.msra.mxu0 0.0
    %1471 = vmatpush.msra.mxu0 0.0
    %1472 = vmatpush.msra.mxu0 0.0
    %1473 = vmatpush.msra.mxu0 0.0
    %1474 = vmatpush.msra.mxu0 0.0
    %1475 = vmatpush.msra.mxu0 0.0
    %1476 = vmatpush.msra.mxu0 0.0
    %1477 = vmatpush.msra.mxu0 0.0
    %1478 = vmatpush.msra.mxu0 %v1404
    %1479 = vmatpush.msra.mxu0 %v1401
    %1480 = vmatpush.msra.mxu0 %v1398
    %1481 = vmatpush.msra.mxu0 %v1395
    %1482 = vmatmul.f32.gmra.mxu0 %v1415
    %v1483 = vpop.f32.mrf.mxu0
    %v1484 = vadd.f32 %v1410, %v1483
    %1485 = vmatmul.f32.gmra.mxu0 %v1418
    %v1486 = vpop.f32.mrf.mxu0
    %v1487 = vadd.f32 %v1410, %v1486
    %1488 = vdwg.mxu0
    %v1489 = vld [vmem:[#allocation2 + $0x150] sm:$0xff]
    %v1490 = vld [vmem:[#allocation2 + $0x158] sm:$0xff]
    %v1491 = vld [vmem:[#allocation2 + $0x160] sm:$0xff]
    %v1492 = vld [vmem:[#allocation2 + $0x168] sm:$0xff]
    %v1493 = vld [vmem:[#allocation2 + $0x170] sm:$0xff]
    %v1494 = vld [vmem:[#allocation2 + $0x178] sm:$0xff]
    %v1495 = vld [vmem:[#allocation2 + $0x180] sm:$0xff]
    %v1496 = vld [vmem:[#allocation2 + $0x188] sm:$0xff]
    %v1497 = vld [vmem:[#allocation2 + $0x190] sm:$0xff]
    %v1498 = vld [vmem:[#allocation2 + $0x198] sm:$0xff]
    %v1499 = vld [vmem:[#allocation2 + $0x1a0] sm:$0xff]
    %v1500 = vld [vmem:[#allocation2 + $0x1a8] sm:$0xff]
    %s1501 = scalar_lea.vmem [#allocation2], 456
    %v1502 = vld [vmem:[%s1501] ss:$8 sm:$0x7]
    %v1504 = vperm.slane %v1502, 0
    %v1505 = vperm.slane %v1502, 1
    %v1506 = vperm.slane %v1502, 2
    %1510 = vmatpush.msra.mxu0 0.0
    %1511 = vmatpush.msra.mxu0 0.0
    %1512 = vmatpush.msra.mxu0 0.0
    %1513 = vmatpush.msra.mxu0 0.0
    %1514 = vmatpush.msra.mxu0 0.0
    %1515 = vmatpush.msra.mxu0 0.0
    %1516 = vmatpush.msra.mxu0 0.0
    %1517 = vmatpush.msra.mxu0 0.0
    %1518 = vmatpush.msra.mxu0 0.0
    %1519 = vmatpush.msra.mxu0 0.0
    %1520 = vmatpush.msra.mxu0 0.0
    %1521 = vmatpush.msra.mxu0 0.0
    %1522 = vmatpush.msra.mxu0 %v1498
    %1523 = vmatpush.msra.mxu0 %v1495
    %1524 = vmatpush.msra.mxu0 %v1492
    %1525 = vmatpush.msra.mxu0 %v1489
    %1526 = vmatmul.f32.gmra.mxu0 %v998
    %v1527 = vpop.f32.mrf.mxu0
    %v1528 = vadd.f32 %v1504, %v1527
    %1529 = vmatmul.f32.gmra.mxu0 %v1001
    %v1530 = vpop.f32.mrf.mxu0
    %v1531 = vadd.f32 %v1504, %v1530
    %1532 = vdwg.mxu0
    %1533 = vmatpush.msra.mxu0 0.0
    %1534 = vmatpush.msra.mxu0 0.0
    %1535 = vmatpush.msra.mxu0 0.0
    %1536 = vmatpush.msra.mxu0 0.0
    %1537 = vmatpush.msra.mxu0 0.0
    %1538 = vmatpush.msra.mxu0 0.0
    %1539 = vmatpush.msra.mxu0 0.0
    %1540 = vmatpush.msra.mxu0 0.0
    %1541 = vmatpush.msra.mxu0 0.0
    %1542 = vmatpush.msra.mxu0 0.0
    %1543 = vmatpush.msra.mxu0 0.0
    %1544 = vmatpush.msra.mxu0 0.0
    %1545 = vmatpush.msra.mxu0 %v1499
    %1546 = vmatpush.msra.mxu0 %v1496
    %1547 = vmatpush.msra.mxu0 %v1493
    %1548 = vmatpush.msra.mxu0 %v1490
    %1549 = vmatmul.f32.gmra.mxu0 %v998
    %v1550 = vpop.f32.mrf.mxu0
    %v1551 = vadd.f32 %v1505, %v1550
    %1552 = vmatmul.f32.gmra.mxu0 %v1001
    %v1553 = vpop.f32.mrf.mxu0
    %v1554 = vadd.f32 %v1505, %v1553
    %1555 = vdwg.mxu0
    %1556 = vmatpush.msra.mxu0 0.0
    %1557 = vmatpush.msra.mxu0 0.0
    %1558 = vmatpush.msra.mxu0 0.0
    %1559 = vmatpush.msra.mxu0 0.0
    %1560 = vmatpush.msra.mxu0 0.0
    %1561 = vmatpush.msra.mxu0 0.0
    %1562 = vmatpush.msra.mxu0 0.0
    %1563 = vmatpush.msra.mxu0 0.0
    %1564 = vmatpush.msra.mxu0 0.0
    %1565 = vmatpush.msra.mxu0 0.0
    %1566 = vmatpush.msra.mxu0 0.0
    %1567 = vmatpush.msra.mxu0 0.0
    %1568 = vmatpush.msra.mxu0 %v1500
    %1569 = vmatpush.msra.mxu0 %v1497
    %1570 = vmatpush.msra.mxu0 %v1494
    %1571 = vmatpush.msra.mxu0 %v1491
    %1572 = vmatmul.f32.gmra.mxu0 %v998
    %v1573 = vpop.f32.mrf.mxu0
    %v1574 = vadd.f32 %v1506, %v1573
    %1575 = vmatmul.f32.gmra.mxu0 %v1001
    %v1576 = vpop.f32.mrf.mxu0
    %v1577 = vadd.f32 %v1506, %v1576
    %1578 = vdwg.mxu0
    %v1579 = vadd.f32 %v1438, %v1528
    %v1580 = vadd.f32 %v1441, %v1531
    %v1581 = vxor.u32 %v1579, 2147483648
    %v1582 = vxor.u32 %v1580, 2147483648
    %v1583 = vmul.f32 %v1581, 1.442695
    %v1584 = vpow.pop %v1583
    %v1585 = vmul.f32 %v1582, 1.442695
    %v1586 = vpow.pop %v1585
    %v1587 = vadd.f32 %v1584, 1.0
    %v1588 = vadd.f32 %v1586, 1.0
    %v1589 = vrcp.pop %v1587
    %v1590 = vmul.f32 %v1587, %v1589
    %v1591 = vsub.f32 1.0, %v1590
    %v1592 = vmul.f32 %v1589, %v1591
    %v1593 = vadd.f32 %v1589, %v1592
    %vm1594 = vweird.f32 %v1587
    %vm1595 = vweird.f32 %v1589
    %vm1596 = vmor %vm1594, %vm1595
    %v1597 = vsel %vm1596, %v1589, %v1593
    %v1598 = vand.u32 2147483647, %v1587
    %vm1599 = vcmp.eq.f32.partialorder %v1598, 8.507059e+37
    %v1600 = vand.u32 %v1587, 2147483648
    %v1601 = vor.u32 1.1754944e-38, %v1600
    %v1602 = vsel %vm1599, %v1601, %v1597
    %v1603 = vmul.f32 1.0, %v1602
    %v1604 = vrcp.pop %v1588
    %v1605 = vmul.f32 %v1588, %v1604
    %v1606 = vsub.f32 1.0, %v1605
    %v1607 = vmul.f32 %v1604, %v1606
    %v1608 = vadd.f32 %v1604, %v1607
    %vm1609 = vweird.f32 %v1588
    %vm1610 = vweird.f32 %v1604
    %vm1611 = vmor %vm1609, %vm1610
    %v1612 = vsel %vm1611, %v1604, %v1608
    %v1613 = vand.u32 2147483647, %v1588
    %vm1614 = vcmp.eq.f32.partialorder %v1613, 8.507059e+37
    %v1615 = vand.u32 %v1588, 2147483648
    %v1616 = vor.u32 1.1754944e-38, %v1615
    %v1617 = vsel %vm1614, %v1616, %v1612
    %v1618 = vmul.f32 1.0, %v1617
    %v1619 = vadd.f32 %v1461, %v1551
    %v1620 = vadd.f32 %v1464, %v1554
    %v1621 = vxor.u32 %v1619, 2147483648
    %v1622 = vxor.u32 %v1620, 2147483648
    %v1623 = vmul.f32 %v1621, 1.442695
    %v1624 = vpow.pop %v1623
    %v1625 = vmul.f32 %v1622, 1.442695
    %v1626 = vpow.pop %v1625
    %v1627 = vadd.f32 %v1624, 1.0
    %v1628 = vadd.f32 %v1626, 1.0
    %v1629 = vrcp.pop %v1627
    %v1630 = vmul.f32 %v1627, %v1629
    %v1631 = vsub.f32 1.0, %v1630
    %v1632 = vmul.f32 %v1629, %v1631
    %v1633 = vadd.f32 %v1629, %v1632
    %vm1634 = vweird.f32 %v1627
    %vm1635 = vweird.f32 %v1629
    %vm1636 = vmor %vm1634, %vm1635
    %v1637 = vsel %vm1636, %v1629, %v1633
    %v1638 = vand.u32 2147483647, %v1627
    %vm1639 = vcmp.eq.f32.partialorder %v1638, 8.507059e+37
    %v1640 = vand.u32 %v1627, 2147483648
    %v1641 = vor.u32 1.1754944e-38, %v1640
    %v1642 = vsel %vm1639, %v1641, %v1637
    %v1643 = vmul.f32 1.0, %v1642
    %v1644 = vrcp.pop %v1628
    %v1645 = vmul.f32 %v1628, %v1644
    %v1646 = vsub.f32 1.0, %v1645
    %v1647 = vmul.f32 %v1644, %v1646
    %v1648 = vadd.f32 %v1644, %v1647
    %vm1649 = vweird.f32 %v1628
    %vm1650 = vweird.f32 %v1644
    %vm1651 = vmor %vm1649, %vm1650
    %v1652 = vsel %vm1651, %v1644, %v1648
    %v1653 = vand.u32 2147483647, %v1628
    %vm1654 = vcmp.eq.f32.partialorder %v1653, 8.507059e+37
    %v1655 = vand.u32 %v1628, 2147483648
    %v1656 = vor.u32 1.1754944e-38, %v1655
    %v1657 = vsel %vm1654, %v1656, %v1652
    %v1658 = vmul.f32 1.0, %v1657
    %v1659 = vmul.f32 %v1603, %v1574
    %v1660 = vmul.f32 %v1618, %v1577
    %v1661 = vadd.f32 %v1484, %v1659
    %v1662 = vadd.f32 %v1487, %v1660
    %v1663 = vtanh.pop %v1661
    %v1664 = vtanh.pop %v1662
    %v1665 = vsub.f32 1.0, %v1643
    %v1666 = vsub.f32 1.0, %v1658
    %v1667 = vmul.f32 %v1665, %v1663
    %v1668 = vmul.f32 %v1666, %v1664
    %v1669 = vmul.f32 %v1643, %v991
    %v1670 = vmul.f32 %v1658, %v992
    %v1671 = vadd.f32 %v1667, %v1669
    %v1672 = vadd.f32 %v1668, %v1670
    %v1673 = vmax.f32 %v1671, 0.0
    %v1674 = vmax.f32 %v1672, 0.0
    %v1676 = vsel %vm74, %v69, 0
    %1678 = vmatpush.msra.mxu0 0.0
    %1679 = vmatpush.msra.mxu0 0.0
    %1680 = vmatpush.msra.mxu0 0.0
    %1681 = vmatpush.msra.mxu0 0.0
    %1682 = vmatpush.msra.mxu0 0.0
    %1683 = vmatpush.msra.mxu0 0.0
    %1684 = vmatpush.msra.mxu0 0.0
    %1685 = vmatpush.msra.mxu0 0.0
    %1686 = vmatpush.msra.mxu0 0.0
    %1687 = vmatpush.msra.mxu0 0.0
    %1688 = vmatpush.msra.mxu0 0.0
    %1689 = vmatpush.msra.mxu0 0.0
    %1690 = vmatpush.msra.mxu0 0.0
    %1691 = vmatpush.msra.mxu0 0.0
    %1692 = vmatpush.msra.mxu0 %v1674
    %1693 = vmatpush.msra.mxu0 %v1673
    %1694 = vmatmul.f32.gmra.mxu0 %v1676
    %v1695 = vpop.f32.mrf.mxu0
    %v1696 = vadd.f32 0.0, %v1695
    %1697 = vdwg.mxu0
    %v1698 = vmax.f32 %v1696, 0.0
    %v1699 = vld [vmem:[%s6 + $0x50] sm:$0xff]
    %v1700 = vld [vmem:[%s6 + $0x58] sm:$0xff]
    %v1701 = vld [vmem:[%s6 + $0x60] sm:$0xff]
    %v1702 = vld [vmem:[%s6 + $0x68] sm:$0xff]
    %v1704 = vsel %vm122, %v1673, 0
    %v1707 = vsel %vm122, %v1674, 0
    %1709 = vmatpush.msra.mxu0 0.0
    %1710 = vmatpush.msra.mxu0 0.0
    %1711 = vmatpush.msra.mxu0 0.0
    %1712 = vmatpush.msra.mxu0 0.0
    %1713 = vmatpush.msra.mxu0 0.0
    %1714 = vmatpush.msra.mxu0 0.0
    %1715 = vmatpush.msra.mxu0 0.0
    %1716 = vmatpush.msra.mxu0 0.0
    %1717 = vmatpush.msra.mxu0 0.0
    %1718 = vmatpush.msra.mxu0 0.0
    %1719 = vmatpush.msra.mxu0 0.0
    %1720 = vmatpush.msra.mxu0 0.0
    %1721 = vmatpush.msra.mxu0 %v1702
    %1722 = vmatpush.msra.mxu0 %v1701
    %1723 = vmatpush.msra.mxu0 %v1700
    %1724 = vmatpush.msra.mxu0 %v1699
    %1725 = vmatmul.f32.gmra.mxu0 %v1704
    %v1726 = vpop.f32.mrf.mxu0
    %v1727 = vadd.f32 0.0, %v1726
    %1728 = vmatmul.f32.gmra.mxu0 %v1707
    %v1729 = vpop.f32.mrf.mxu0
    %v1730 = vadd.f32 0.0, %v1729
    %1731 = vdwg.mxu0
    %1732 = vrot.lane.b32.xlu0 %v392, 125
    %v1733 = vpop.permute.xlu0 %1732
    %1734 = vrot.lane.b32.xlu0 %v393, 125
    %v1735 = vpop.permute.xlu0 %1734
    %1736 = vrot.lane.b32.xlu0 %v394, 125
    %v1737 = vpop.permute.xlu0 %1736
    %1738 = vrot.lane.b32.xlu0 %v395, 125
    %v1739 = vpop.permute.xlu0 %1738
    %v1745 = vsel %vm122, %v1727, 0
    %v1748 = vsel %vm122, %v1730, 0
    %1750 = vmatpush.msra.mxu0 0.0
    %1751 = vmatpush.msra.mxu0 0.0
    %1752 = vmatpush.msra.mxu0 0.0
    %1753 = vmatpush.msra.mxu0 0.0
    %1754 = vmatpush.msra.mxu0 0.0
    %1755 = vmatpush.msra.mxu0 0.0
    %1756 = vmatpush.msra.mxu0 0.0
    %1757 = vmatpush.msra.mxu0 0.0
    %1758 = vmatpush.msra.mxu0 0.0
    %1759 = vmatpush.msra.mxu0 0.0
    %1760 = vmatpush.msra.mxu0 0.0
    %1761 = vmatpush.msra.mxu0 0.0
    %1762 = vmatpush.msra.mxu0 %v1739
    %1763 = vmatpush.msra.mxu0 %v1737
    %1764 = vmatpush.msra.mxu0 %v1735
    %1765 = vmatpush.msra.mxu0 %v1733
    %1766 = vmatmul.f32.gmra.mxu0 %v1745
    %v1767 = vpop.f32.mrf.mxu0
    %v1768 = vadd.f32 0.0, %v1767
    %1769 = vmatmul.f32.gmra.mxu0 %v1748
    %v1770 = vpop.f32.mrf.mxu0
    %v1771 = vadd.f32 0.0, %v1770
    %1772 = vdwg.mxu0
    %v1773 = vld [vmem:[%s6 + $0x70] sm:$0x1]
    %1774 = vrot.lane.b32.xlu0 %v392, 124
    %v1775 = vpop.permute.xlu0 %1774
    %1776 = vrot.lane.b32.xlu0 %v393, 124
    %v1777 = vpop.permute.xlu0 %1776
    %1778 = vrot.lane.b32.xlu0 %v394, 124
    %v1779 = vpop.permute.xlu0 %1778
    %1780 = vrot.lane.b32.xlu0 %v395, 124
    %v1781 = vpop.permute.xlu0 %1780
    %v1787 = vsel %vm122, %v1698, 0
    %1789 = vmatpush.msra.mxu0 0.0
    %1790 = vmatpush.msra.mxu0 0.0
    %1791 = vmatpush.msra.mxu0 0.0
    %1792 = vmatpush.msra.mxu0 0.0
    %1793 = vmatpush.msra.mxu0 0.0
    %1794 = vmatpush.msra.mxu0 0.0
    %1795 = vmatpush.msra.mxu0 0.0
    %1796 = vmatpush.msra.mxu0 0.0
    %1797 = vmatpush.msra.mxu0 0.0
    %1798 = vmatpush.msra.mxu0 0.0
    %1799 = vmatpush.msra.mxu0 0.0
    %1800 = vmatpush.msra.mxu0 0.0
    %1801 = vmatpush.msra.mxu0 %v1781
    %1802 = vmatpush.msra.mxu0 %v1779
    %1803 = vmatpush.msra.mxu0 %v1777
    %1804 = vmatpush.msra.mxu0 %v1775
    %1805 = vmatmul.f32.gmra.mxu0 %v1787
    %v1806 = vpop.f32.mrf.mxu0
    %v1807 = vadd.f32 0.0, %v1806
    %1808 = vdwg.mxu0
    %vm1809 = vcmask 15360
    %v1811 = vsel %vm1809, %v67, 0
    %v1814 = vsel %vm1809, %v68, 0
    %vm1816 = vcmask 1041408
    %v1818 = vsel %vm1816, %v1807, 0
    %1820 = vmatpush.msra.mxu0 0.0
    %1821 = vmatpush.msra.mxu0 0.0
    %1822 = vmatpush.msra.mxu0 0.0
    %1823 = vmatpush.msra.mxu0 0.0
    %1824 = vmatpush.msra.mxu0 0.0
    %1825 = vmatpush.msra.mxu0 0.0
    %1826 = vmatpush.msra.mxu0 0.0
    %1827 = vmatpush.msra.mxu0 0.0
    %1828 = vmatpush.msra.mxu0 0.0
    %1829 = vmatpush.msra.mxu0 0.0
    %1830 = vmatpush.msra.mxu0 0.0
    %1831 = vmatpush.msra.mxu0 0.0
    %1832 = vmatpush.msra.mxu0 0.0
    %1833 = vmatpush.msra.mxu0 0.0
    %1834 = vmatpush.msra.mxu0 0.0
    %1835 = vmatpush.msra.mxu0 %v1818
    %1836 = vmatmul.f32.gmra.mxu0 %v1811
    %v1837 = vpop.f32.mrf.mxu0
    %v1838 = vadd.f32 0.0, %v1837
    %1839 = vmatmul.f32.gmra.mxu0 %v1814
    %v1840 = vpop.f32.mrf.mxu0
    %v1841 = vadd.f32 0.0, %v1840
    %1842 = vdwg.mxu0
    %v1843 = vadd.f32 %v1768, %v1838
    %v1844 = vadd.f32 %v1771, %v1841
    %vm1845 = vcmp.gt.f32.partialorder %v1843, 0.0
    %vm1846 = vcmp.gt.f32.partialorder %v1844, 0.0
    %v1847 = vmul.f32 %v1843, 0.01
    %v1848 = vmul.f32 %v1844, 0.01
    %v1849 = vsel %vm1845, %v1843, %v1847
    %v1850 = vsel %vm1846, %v1844, %v1848
    %vm1851 = vcmp.gt.f32.partialorder %v67, 0.0
    %vm1852 = vcmp.gt.f32.partialorder %v68, 0.0
    %1854 = vset.pattern.permute.xlu0 0
    %1855 = vperm.xlu0 %1854, %v1849
    %v1856 = vpop.permute.xlu0 %1855
    %1859 = vset.pattern.permute.xlu0 0
    %1860 = vperm.xlu0 %1859, %v1850
    %v1861 = vpop.permute.xlu0 %1860
    %v1863 = vsel %vm1851, %v1856, -1e+30
    %v1864 = vsel %vm1852, %v1861, -1e+30
    %v1865 = vsel %vm1809, %v1863, -inf
    %v1866 = vsel %vm1809, %v1864, -inf
    %v1867 = vmax.f32 %v1865, %v1866
    %v1868 = vrot.slane %v1867, 4
    %v1869 = vmax.f32 %v1867, %v1868
    %v1870 = vrot.slane %v1869, 2
    %v1871 = vmax.f32 %v1869, %v1870
    %v1872 = vrot.slane %v1871, 1
    %v1873 = vmax.f32 %v1871, %v1872
    %v1874 = vsel %vm1851, %v1873, -1e+30
    %v1875 = vsel %vm1852, %v1873, -1e+30
    %v1876 = vsel %vm1809, %v1874, -inf
    %1877 = vmax.xlane.f32.xlu0 %v1876
    %v1878 = vpop.xlane.xlu0 %1877
    %v1879 = vsel %vm1809, %v1875, -inf
    %1880 = vmax.xlane.f32.xlu0 %v1879
    %v1881 = vpop.xlane.xlu0 %1880
    %v1882 = vsub.f32 %v1849, %v1878
    %v1883 = vsub.f32 %v1850, %v1881
    %v1884 = vmul.f32 %v1882, 1.442695
    %v1885 = vpow.pop %v1884
    %v1886 = vmul.f32 %v1883, 1.442695
    %v1887 = vpow.pop %v1886
    %1888 = vmatpush.msra.mxu0 0.0
    %1889 = vmatpush.msra.mxu0 0.0
    %1890 = vmatpush.msra.mxu0 0.0
    %1891 = vmatpush.msra.mxu0 0.0
    %1892 = vmatpush.msra.mxu0 0.0
    %1893 = vmatpush.msra.mxu0 0.0
    %1894 = vmatpush.msra.mxu0 0.0
    %1895 = vmatpush.msra.mxu0 0.0
    %1896 = vmatpush.msra.mxu0 0.0
    %1897 = vmatpush.msra.mxu0 0.0
    %1898 = vmatpush.msra.mxu0 0.0
    %1899 = vmatpush.msra.mxu0 0.0
    %1900 = vmatpush.msra.mxu0 0.0
    %1901 = vmatpush.msra.mxu0 0.0
    %1902 = vmatpush.msra.mxu0 %v1887
    %1903 = vmatpush.msra.mxu0 %v1885
    %1904 = vmatmul.f32.gmra.mxu0 %v1676
    %v1905 = vpop.f32.mrf.mxu0
    %v1906 = vadd.f32 0.0, %v1905
    %1907 = vdwg.mxu0
    %v1909 = vsel %vm1816, %v1906, 0
    %1911 = vmatpush.msra.mxu0 0.0
    %1912 = vmatpush.msra.mxu0 0.0
    %1913 = vmatpush.msra.mxu0 0.0
    %1914 = vmatpush.msra.mxu0 0.0
    %1915 = vmatpush.msra.mxu0 0.0
    %1916 = vmatpush.msra.mxu0 0.0
    %1917 = vmatpush.msra.mxu0 0.0
    %1918 = vmatpush.msra.mxu0 0.0
    %1919 = vmatpush.msra.mxu0 0.0
    %1920 = vmatpush.msra.mxu0 0.0
    %1921 = vmatpush.msra.mxu0 0.0
    %1922 = vmatpush.msra.mxu0 0.0
    %1923 = vmatpush.msra.mxu0 0.0
    %1924 = vmatpush.msra.mxu0 0.0
    %1925 = vmatpush.msra.mxu0 0.0
    %1926 = vmatpush.msra.mxu0 %v1909
    %1927 = vmatmul.f32.gmra.mxu0 %v1811
    %v1928 = vpop.f32.mrf.mxu0
    %v1929 = vadd.f32 0.0, %v1928
    %1930 = vmatmul.f32.gmra.mxu0 %v1814
    %v1931 = vpop.f32.mrf.mxu0
    %v1932 = vadd.f32 0.0, %v1931
    %1933 = vdwg.mxu0
    %v1934 = vrcp.pop %v1929
    %v1935 = vmul.f32 %v1929, %v1934
    %v1936 = vsub.f32 1.0, %v1935
    %v1937 = vmul.f32 %v1934, %v1936
    %v1938 = vadd.f32 %v1934, %v1937
    %vm1939 = vweird.f32 %v1929
    %vm1940 = vweird.f32 %v1934
    %vm1941 = vmor %vm1939, %vm1940
    %v1942 = vsel %vm1941, %v1934, %v1938
    %v1943 = vand.u32 2147483647, %v1929
    %vm1944 = vcmp.eq.f32.partialorder %v1943, 8.507059e+37
    %v1945 = vand.u32 %v1929, 2147483648
    %v1946 = vor.u32 1.1754944e-38, %v1945
    %v1947 = vsel %vm1944, %v1946, %v1942
    %v1948 = vmul.f32 %v1885, %v1947
    %v1949 = vrcp.pop %v1932
    %v1950 = vmul.f32 %v1932, %v1949
    %v1951 = vsub.f32 1.0, %v1950
    %v1952 = vmul.f32 %v1949, %v1951
    %v1953 = vadd.f32 %v1949, %v1952
    %vm1954 = vweird.f32 %v1932
    %vm1955 = vweird.f32 %v1949
    %vm1956 = vmor %vm1954, %vm1955
    %v1957 = vsel %vm1956, %v1949, %v1953
    %v1958 = vand.u32 2147483647, %v1932
    %vm1959 = vcmp.eq.f32.partialorder %v1958, 8.507059e+37
    %v1960 = vand.u32 %v1932, 2147483648
    %v1961 = vor.u32 1.1754944e-38, %v1960
    %v1962 = vsel %vm1959, %v1961, %v1957
    %v1963 = vmul.f32 %v1887, %v1962
    %1965 = vset.pattern.permute.xlu0 0
    %1966 = vperm.xlu0 %1965, %v1948
    %v1967 = vpop.permute.xlu0 %1966
    %1970 = vset.pattern.permute.xlu0 0
    %1971 = vperm.xlu0 %1970, %v1963
    %v1972 = vpop.permute.xlu0 %1971
    %v1974 = vmul.f32 %v1727, %v1967
    %v1975 = vmul.f32 %v1730, %v1972
    %v1976 = vperm.slane %v1773, 0
    %1977 = vmatpush.msra.mxu0 0.0
    %1978 = vmatpush.msra.mxu0 0.0
    %1979 = vmatpush.msra.mxu0 0.0
    %1980 = vmatpush.msra.mxu0 0.0
    %1981 = vmatpush.msra.mxu0 0.0
    %1982 = vmatpush.msra.mxu0 0.0
    %1983 = vmatpush.msra.mxu0 0.0
    %1984 = vmatpush.msra.mxu0 0.0
    %1985 = vmatpush.msra.mxu0 0.0
    %1986 = vmatpush.msra.mxu0 0.0
    %1987 = vmatpush.msra.mxu0 0.0
    %1988 = vmatpush.msra.mxu0 0.0
    %1989 = vmatpush.msra.mxu0 0.0
    %1990 = vmatpush.msra.mxu0 0.0
    %1991 = vmatpush.msra.mxu0 %v1975
    %1992 = vmatpush.msra.mxu0 %v1974
    %1993 = vmatmul.f32.gmra.mxu0 %v1676
    %v1994 = vpop.f32.mrf.mxu0
    %v1995 = vadd.f32 %v1976, %v1994
    %1996 = vdwg.mxu0
    %vm1997 = vcmp.gt.f32.partialorder %v1995, 0.0
    %v1998 = vmul.f32 %v1995, 1.442695
    %v1999 = vpow.pop %v1998
    %v2000 = vsub.f32 %v1999, 1.0
    %v2001 = vsel %vm1997, %v1995, %v2000
    %v2002 = vld [vmem:[#allocation2 + $0x1e0] sm:$0xff]
    %v2003 = vld [vmem:[#allocation2 + $0x1e8] sm:$0xff]
    %v2004 = vld [vmem:[#allocation2 + $0x1f0] sm:$0xff]
    %v2005 = vld [vmem:[#allocation2 + $0x1f8] sm:$0xff]
    %v2006 = vld [vmem:[#allocation2 + $0x200] sm:$0xff]
    %v2007 = vld [vmem:[#allocation2 + $0x208] sm:$0xff]
    %v2008 = vld [vmem:[#allocation2 + $0x210] sm:$0xff]
    %v2009 = vld [vmem:[#allocation2 + $0x218] sm:$0xff]
    %v2010 = vld [vmem:[#allocation2 + $0x220] sm:$0xff]
    %v2011 = vld [vmem:[#allocation2 + $0x228] sm:$0xff]
    %v2012 = vld [vmem:[#allocation2 + $0x230] sm:$0xff]
    %v2013 = vld [vmem:[#allocation2 + $0x238] sm:$0xff]
    %s2014 = scalar_lea.vmem [#allocation2], 672
    %v2015 = vld [vmem:[%s2014] ss:$8 sm:$0x7]
    %v2017 = vperm.slane %v2015, 0
    %v2018 = vperm.slane %v2015, 1
    %v2019 = vperm.slane %v2015, 2
    %v2024 = vsel %vm122, %v2001, 0
    %2026 = vmatpush.msra.mxu0 0.0
    %2027 = vmatpush.msra.mxu0 0.0
    %2028 = vmatpush.msra.mxu0 0.0
    %2029 = vmatpush.msra.mxu0 0.0
    %2030 = vmatpush.msra.mxu0 0.0
    %2031 = vmatpush.msra.mxu0 0.0
    %2032 = vmatpush.msra.mxu0 0.0
    %2033 = vmatpush.msra.mxu0 0.0
    %2034 = vmatpush.msra.mxu0 0.0
    %2035 = vmatpush.msra.mxu0 0.0
    %2036 = vmatpush.msra.mxu0 0.0
    %2037 = vmatpush.msra.mxu0 0.0
    %2038 = vmatpush.msra.mxu0 %v2011
    %2039 = vmatpush.msra.mxu0 %v2008
    %2040 = vmatpush.msra.mxu0 %v2005
    %2041 = vmatpush.msra.mxu0 %v2002
    %2042 = vmatmul.f32.gmra.mxu0 %v2024
    %v2043 = vpop.f32.mrf.mxu0
    %v2044 = vadd.f32 %v2017, %v2043
    %2045 = vdwg.mxu0
    %2046 = vmatpush.msra.mxu0 0.0
    %2047 = vmatpush.msra.mxu0 0.0
    %2048 = vmatpush.msra.mxu0 0.0
    %2049 = vmatpush.msra.mxu0 0.0
    %2050 = vmatpush.msra.mxu0 0.0
    %2051 = vmatpush.msra.mxu0 0.0
    %2052 = vmatpush.msra.mxu0 0.0
    %2053 = vmatpush.msra.mxu0 0.0
    %2054 = vmatpush.msra.mxu0 0.0
    %2055 = vmatpush.msra.mxu0 0.0
    %2056 = vmatpush.msra.mxu0 0.0
    %2057 = vmatpush.msra.mxu0 0.0
    %2058 = vmatpush.msra.mxu0 %v2012
    %2059 = vmatpush.msra.mxu0 %v2009
    %2060 = vmatpush.msra.mxu0 %v2006
    %2061 = vmatpush.msra.mxu0 %v2003
    %2062 = vmatmul.f32.gmra.mxu0 %v2024
    %v2063 = vpop.f32.mrf.mxu0
    %v2064 = vadd.f32 %v2018, %v2063
    %2065 = vdwg.mxu0
    %2066 = vmatpush.msra.mxu0 0.0
    %2067 = vmatpush.msra.mxu0 0.0
    %2068 = vmatpush.msra.mxu0 0.0
    %2069 = vmatpush.msra.mxu0 0.0
    %2070 = vmatpush.msra.mxu0 0.0
    %2071 = vmatpush.msra.mxu0 0.0
    %2072 = vmatpush.msra.mxu0 0.0
    %2073 = vmatpush.msra.mxu0 0.0
    %2074 = vmatpush.msra.mxu0 0.0
    %2075 = vmatpush.msra.mxu0 0.0
    %2076 = vmatpush.msra.mxu0 0.0
    %2077 = vmatpush.msra.mxu0 0.0
    %2078 = vmatpush.msra.mxu0 %v2013
    %2079 = vmatpush.msra.mxu0 %v2010
    %2080 = vmatpush.msra.mxu0 %v2007
    %2081 = vmatpush.msra.mxu0 %v2004
    %2082 = vmatmul.f32.gmra.mxu0 %v2024
    %v2083 = vpop.f32.mrf.mxu0
    %v2084 = vadd.f32 %v2019, %v2083
    %2085 = vdwg.mxu0
    %v2086 = vld [vmem:[#allocation2 + $0x240] sm:$0xff]
    %v2087 = vld [vmem:[#allocation2 + $0x248] sm:$0xff]
    %v2088 = vld [vmem:[#allocation2 + $0x250] sm:$0xff]
    %v2089 = vld [vmem:[#allocation2 + $0x258] sm:$0xff]
    %v2090 = vld [vmem:[#allocation2 + $0x260] sm:$0xff]
    %v2091 = vld [vmem:[#allocation2 + $0x268] sm:$0xff]
    %v2092 = vld [vmem:[#allocation2 + $0x270] sm:$0xff]
    %v2093 = vld [vmem:[#allocation2 + $0x278] sm:$0xff]
    %v2094 = vld [vmem:[#allocation2 + $0x280] sm:$0xff]
    %v2095 = vld [vmem:[#allocation2 + $0x288] sm:$0xff]
    %v2096 = vld [vmem:[#allocation2 + $0x290] sm:$0xff]
    %v2097 = vld [vmem:[#allocation2 + $0x298] sm:$0xff]
    %s2098 = scalar_lea.vmem [#allocation2], 696
    %v2099 = vld [vmem:[%s2098] ss:$8 sm:$0x7]
    %v2101 = vperm.slane %v2099, 0
    %v2102 = vperm.slane %v2099, 1
    %v2103 = vperm.slane %v2099, 2
    %2107 = vmatpush.msra.mxu0 0.0
    %2108 = vmatpush.msra.mxu0 0.0
    %2109 = vmatpush.msra.mxu0 0.0
    %2110 = vmatpush.msra.mxu0 0.0
    %2111 = vmatpush.msra.mxu0 0.0
    %2112 = vmatpush.msra.mxu0 0.0
    %2113 = vmatpush.msra.mxu0 0.0
    %2114 = vmatpush.msra.mxu0 0.0
    %2115 = vmatpush.msra.mxu0 0.0
    %2116 = vmatpush.msra.mxu0 0.0
    %2117 = vmatpush.msra.mxu0 0.0
    %2118 = vmatpush.msra.mxu0 0.0
    %2119 = vmatpush.msra.mxu0 %v2095
    %2120 = vmatpush.msra.mxu0 %v2092
    %2121 = vmatpush.msra.mxu0 %v2089
    %2122 = vmatpush.msra.mxu0 %v2086
    %2123 = vmatmul.f32.gmra.mxu0 %v1787
    %v2124 = vpop.f32.mrf.mxu0
    %v2125 = vadd.f32 %v2101, %v2124
    %2126 = vdwg.mxu0
    %2127 = vmatpush.msra.mxu0 0.0
    %2128 = vmatpush.msra.mxu0 0.0
    %2129 = vmatpush.msra.mxu0 0.0
    %2130 = vmatpush.msra.mxu0 0.0
    %2131 = vmatpush.msra.mxu0 0.0
    %2132 = vmatpush.msra.mxu0 0.0
    %2133 = vmatpush.msra.mxu0 0.0
    %2134 = vmatpush.msra.mxu0 0.0
    %2135 = vmatpush.msra.mxu0 0.0
    %2136 = vmatpush.msra.mxu0 0.0
    %2137 = vmatpush.msra.mxu0 0.0
    %2138 = vmatpush.msra.mxu0 0.0
    %2139 = vmatpush.msra.mxu0 %v2096
    %2140 = vmatpush.msra.mxu0 %v2093
    %2141 = vmatpush.msra.mxu0 %v2090
    %2142 = vmatpush.msra.mxu0 %v2087
    %2143 = vmatmul.f32.gmra.mxu0 %v1787
    %v2144 = vpop.f32.mrf.mxu0
    %v2145 = vadd.f32 %v2102, %v2144
    %2146 = vdwg.mxu0
    %2147 = vmatpush.msra.mxu0 0.0
    %2148 = vmatpush.msra.mxu0 0.0
    %2149 = vmatpush.msra.mxu0 0.0
    %2150 = vmatpush.msra.mxu0 0.0
    %2151 = vmatpush.msra.mxu0 0.0
    %2152 = vmatpush.msra.mxu0 0.0
    %2153 = vmatpush.msra.mxu0 0.0
    %2154 = vmatpush.msra.mxu0 0.0
    %2155 = vmatpush.msra.mxu0 0.0
    %2156 = vmatpush.msra.mxu0 0.0
    %2157 = vmatpush.msra.mxu0 0.0
    %2158 = vmatpush.msra.mxu0 0.0
    %2159 = vmatpush.msra.mxu0 %v2097
    %2160 = vmatpush.msra.mxu0 %v2094
    %2161 = vmatpush.msra.mxu0 %v2091
    %2162 = vmatpush.msra.mxu0 %v2088
    %2163 = vmatmul.f32.gmra.mxu0 %v1787
    %v2164 = vpop.f32.mrf.mxu0
    %v2165 = vadd.f32 %v2103, %v2164
    %2166 = vdwg.mxu0
    %v2167 = vadd.f32 %v2044, %v2125
    %v2168 = vxor.u32 %v2167, 2147483648
    %v2169 = vmul.f32 %v2168, 1.442695
    %v2170 = vpow.pop %v2169
    %v2171 = vadd.f32 %v2170, 1.0
    %v2172 = vrcp.pop %v2171
    %v2173 = vmul.f32 %v2171, %v2172
    %v2174 = vsub.f32 1.0, %v2173
    %v2175 = vmul.f32 %v2172, %v2174
    %v2176 = vadd.f32 %v2172, %v2175
    %vm2177 = vweird.f32 %v2171
    %vm2178 = vweird.f32 %v2172
    %vm2179 = vmor %vm2177, %vm2178
    %v2180 = vsel %vm2179, %v2172, %v2176
    %v2181 = vand.u32 2147483647, %v2171
    %vm2182 = vcmp.eq.f32.partialorder %v2181, 8.507059e+37
    %v2183 = vand.u32 %v2171, 2147483648
    %v2184 = vor.u32 1.1754944e-38, %v2183
    %v2185 = vsel %vm2182, %v2184, %v2180
    %v2186 = vmul.f32 1.0, %v2185
    %v2187 = vadd.f32 %v2064, %v2145
    %v2188 = vxor.u32 %v2187, 2147483648
    %v2189 = vmul.f32 %v2188, 1.442695
    %v2190 = vpow.pop %v2189
    %v2191 = vadd.f32 %v2190, 1.0
    %v2192 = vrcp.pop %v2191
    %v2193 = vmul.f32 %v2191, %v2192
    %v2194 = vsub.f32 1.0, %v2193
    %v2195 = vmul.f32 %v2192, %v2194
    %v2196 = vadd.f32 %v2192, %v2195
    %vm2197 = vweird.f32 %v2191
    %vm2198 = vweird.f32 %v2192
    %vm2199 = vmor %vm2197, %vm2198
    %v2200 = vsel %vm2199, %v2192, %v2196
    %v2201 = vand.u32 2147483647, %v2191
    %vm2202 = vcmp.eq.f32.partialorder %v2201, 8.507059e+37
    %v2203 = vand.u32 %v2191, 2147483648
    %v2204 = vor.u32 1.1754944e-38, %v2203
    %v2205 = vsel %vm2202, %v2204, %v2200
    %v2206 = vmul.f32 1.0, %v2205
    %v2207 = vmul.f32 %v2186, %v2165
    %v2208 = vadd.f32 %v2084, %v2207
    %v2209 = vtanh.pop %v2208
    %v2210 = vsub.f32 1.0, %v2206
    %v2211 = vmul.f32 %v2210, %v2209
    %v2212 = vmul.f32 %v2206, %v1698
    %v2213 = vadd.f32 %v2211, %v2212
    %v2214 = vmax.f32 %v2213, 0.0
    %v2216 = vsel %vm122, %v2214, 0
    %2218 = vmatpush.msra.mxu0 0.0
    %2219 = vmatpush.msra.mxu0 0.0
    %2220 = vmatpush.msra.mxu0 0.0
    %2221 = vmatpush.msra.mxu0 0.0
    %2222 = vmatpush.msra.mxu0 0.0
    %2223 = vmatpush.msra.mxu0 0.0
    %2224 = vmatpush.msra.mxu0 0.0
    %2225 = vmatpush.msra.mxu0 0.0
    %2226 = vmatpush.msra.mxu0 0.0
    %2227 = vmatpush.msra.mxu0 0.0
    %2228 = vmatpush.msra.mxu0 0.0
    %2229 = vmatpush.msra.mxu0 0.0
    %2230 = vmatpush.msra.mxu0 %v1781
    %2231 = vmatpush.msra.mxu0 %v1779
    %2232 = vmatpush.msra.mxu0 %v1777
    %2233 = vmatpush.msra.mxu0 %v1775
    %2234 = vmatmul.f32.gmra.mxu0 %v2216
    %v2235 = vpop.f32.mrf.mxu0
    %v2236 = vadd.f32 0.0, %v2235
    %2237 = vdwg.mxu0
    %v2239 = vsel %vm1816, %v2236, 0
    %2241 = vmatpush.msra.mxu0 0.0
    %2242 = vmatpush.msra.mxu0 0.0
    %2243 = vmatpush.msra.mxu0 0.0
    %2244 = vmatpush.msra.mxu0 0.0
    %2245 = vmatpush.msra.mxu0 0.0
    %2246 = vmatpush.msra.mxu0 0.0
    %2247 = vmatpush.msra.mxu0 0.0
    %2248 = vmatpush.msra.mxu0 0.0
    %2249 = vmatpush.msra.mxu0 0.0
    %2250 = vmatpush.msra.mxu0 0.0
    %2251 = vmatpush.msra.mxu0 0.0
    %2252 = vmatpush.msra.mxu0 0.0
    %2253 = vmatpush.msra.mxu0 0.0
    %2254 = vmatpush.msra.mxu0 0.0
    %2255 = vmatpush.msra.mxu0 0.0
    %2256 = vmatpush.msra.mxu0 %v2239
    %2257 = vmatmul.f32.gmra.mxu0 %v1811
    %v2258 = vpop.f32.mrf.mxu0
    %v2259 = vadd.f32 0.0, %v2258
    %2260 = vmatmul.f32.gmra.mxu0 %v1814
    %v2261 = vpop.f32.mrf.mxu0
    %v2262 = vadd.f32 0.0, %v2261
    %2263 = vdwg.mxu0
    %v2264 = vadd.f32 %v1768, %v2259
    %v2265 = vadd.f32 %v1771, %v2262
    %vm2266 = vcmp.gt.f32.partialorder %v2264, 0.0
    %vm2267 = vcmp.gt.f32.partialorder %v2265, 0.0
    %v2268 = vmul.f32 %v2264, 0.01
    %v2269 = vmul.f32 %v2265, 0.01
    %v2270 = vsel %vm2266, %v2264, %v2268
    %v2271 = vsel %vm2267, %v2265, %v2269
    %2273 = vset.pattern.permute.xlu0 0
    %2274 = vperm.xlu0 %2273, %v2270
    %v2275 = vpop.permute.xlu0 %2274
    %2278 = vset.pattern.permute.xlu0 0
    %2279 = vperm.xlu0 %2278, %v2271
    %v2280 = vpop.permute.xlu0 %2279
    %v2282 = vsel %vm1851, %v2275, -1e+30
    %v2283 = vsel %vm1852, %v2280, -1e+30
    %v2284 = vsel %vm1809, %v2282, -inf
    %v2285 = vsel %vm1809, %v2283, -inf
    %v2286 = vmax.f32 %v2284, %v2285
    %v2287 = vrot.slane %v2286, 4
    %v2288 = vmax.f32 %v2286, %v2287
    %v2289 = vrot.slane %v2288, 2
    %v2290 = vmax.f32 %v2288, %v2289
    %v2291 = vrot.slane %v2290, 1
    %v2292 = vmax.f32 %v2290, %v2291
    %v2293 = vsel %vm1851, %v2292, -1e+30
    %v2294 = vsel %vm1852, %v2292, -1e+30
    %v2295 = vsel %vm1809, %v2293, -inf
    %2296 = vmax.xlane.f32.xlu0 %v2295
    %v2297 = vpop.xlane.xlu0 %2296
    %v2298 = vsel %vm1809, %v2294, -inf
    %2299 = vmax.xlane.f32.xlu0 %v2298
    %v2300 = vpop.xlane.xlu0 %2299
    %v2301 = vsub.f32 %v2270, %v2297
    %v2302 = vsub.f32 %v2271, %v2300
    %v2303 = vmul.f32 %v2301, 1.442695
    %v2304 = vpow.pop %v2303
    %v2305 = vmul.f32 %v2302, 1.442695
    %v2306 = vpow.pop %v2305
    %2307 = vmatpush.msra.mxu0 0.0
    %2308 = vmatpush.msra.mxu0 0.0
    %2309 = vmatpush.msra.mxu0 0.0
    %2310 = vmatpush.msra.mxu0 0.0
    %2311 = vmatpush.msra.mxu0 0.0
    %2312 = vmatpush.msra.mxu0 0.0
    %2313 = vmatpush.msra.mxu0 0.0
    %2314 = vmatpush.msra.mxu0 0.0
    %2315 = vmatpush.msra.mxu0 0.0
    %2316 = vmatpush.msra.mxu0 0.0
    %2317 = vmatpush.msra.mxu0 0.0
    %2318 = vmatpush.msra.mxu0 0.0
    %2319 = vmatpush.msra.mxu0 0.0
    %2320 = vmatpush.msra.mxu0 0.0
    %2321 = vmatpush.msra.mxu0 %v2306
    %2322 = vmatpush.msra.mxu0 %v2304
    %2323 = vmatmul.f32.gmra.mxu0 %v1676
    %v2324 = vpop.f32.mrf.mxu0
    %v2325 = vadd.f32 0.0, %v2324
    %2326 = vdwg.mxu0
    %v2328 = vsel %vm1816, %v2325, 0
    %2330 = vmatpush.msra.mxu0 0.0
    %2331 = vmatpush.msra.mxu0 0.0
    %2332 = vmatpush.msra.mxu0 0.0
    %2333 = vmatpush.msra.mxu0 0.0
    %2334 = vmatpush.msra.mxu0 0.0
    %2335 = vmatpush.msra.mxu0 0.0
    %2336 = vmatpush.msra.mxu0 0.0
    %2337 = vmatpush.msra.mxu0 0.0
    %2338 = vmatpush.msra.mxu0 0.0
    %2339 = vmatpush.msra.mxu0 0.0
    %2340 = vmatpush.msra.mxu0 0.0
    %2341 = vmatpush.msra.mxu0 0.0
    %2342 = vmatpush.msra.mxu0 0.0
    %2343 = vmatpush.msra.mxu0 0.0
    %2344 = vmatpush.msra.mxu0 0.0
    %2345 = vmatpush.msra.mxu0 %v2328
    %2346 = vmatmul.f32.gmra.mxu0 %v1811
    %v2347 = vpop.f32.mrf.mxu0
    %v2348 = vadd.f32 0.0, %v2347
    %2349 = vmatmul.f32.gmra.mxu0 %v1814
    %v2350 = vpop.f32.mrf.mxu0
    %v2351 = vadd.f32 0.0, %v2350
    %2352 = vdwg.mxu0
    %v2353 = vrcp.pop %v2348
    %v2354 = vmul.f32 %v2348, %v2353
    %v2355 = vsub.f32 1.0, %v2354
    %v2356 = vmul.f32 %v2353, %v2355
    %v2357 = vadd.f32 %v2353, %v2356
    %vm2358 = vweird.f32 %v2348
    %vm2359 = vweird.f32 %v2353
    %vm2360 = vmor %vm2358, %vm2359
    %v2361 = vsel %vm2360, %v2353, %v2357
    %v2362 = vand.u32 2147483647, %v2348
    %vm2363 = vcmp.eq.f32.partialorder %v2362, 8.507059e+37
    %v2364 = vand.u32 %v2348, 2147483648
    %v2365 = vor.u32 1.1754944e-38, %v2364
    %v2366 = vsel %vm2363, %v2365, %v2361
    %v2367 = vmul.f32 %v2304, %v2366
    %v2368 = vrcp.pop %v2351
    %v2369 = vmul.f32 %v2351, %v2368
    %v2370 = vsub.f32 1.0, %v2369
    %v2371 = vmul.f32 %v2368, %v2370
    %v2372 = vadd.f32 %v2368, %v2371
    %vm2373 = vweird.f32 %v2351
    %vm2374 = vweird.f32 %v2368
    %vm2375 = vmor %vm2373, %vm2374
    %v2376 = vsel %vm2375, %v2368, %v2372
    %v2377 = vand.u32 2147483647, %v2351
    %vm2378 = vcmp.eq.f32.partialorder %v2377, 8.507059e+37
    %v2379 = vand.u32 %v2351, 2147483648
    %v2380 = vor.u32 1.1754944e-38, %v2379
    %v2381 = vsel %vm2378, %v2380, %v2376
    %v2382 = vmul.f32 %v2306, %v2381
    %2384 = vset.pattern.permute.xlu0 0
    %2385 = vperm.xlu0 %2384, %v2367
    %v2386 = vpop.permute.xlu0 %2385
    %2389 = vset.pattern.permute.xlu0 0
    %2390 = vperm.xlu0 %2389, %v2382
    %v2391 = vpop.permute.xlu0 %2390
    %v2393 = vmul.f32 %v1727, %v2386
    %v2394 = vmul.f32 %v1730, %v2391
    %2395 = vmatpush.msra.mxu0 0.0
    %2396 = vmatpush.msra.mxu0 0.0
    %2397 = vmatpush.msra.mxu0 0.0
    %2398 = vmatpush.msra.mxu0 0.0
    %2399 = vmatpush.msra.mxu0 0.0
    %2400 = vmatpush.msra.mxu0 0.0
    %2401 = vmatpush.msra.mxu0 0.0
    %2402 = vmatpush.msra.mxu0 0.0
    %2403 = vmatpush.msra.mxu0 0.0
    %2404 = vmatpush.msra.mxu0 0.0
    %2405 = vmatpush.msra.mxu0 0.0
    %2406 = vmatpush.msra.mxu0 0.0
    %2407 = vmatpush.msra.mxu0 0.0
    %2408 = vmatpush.msra.mxu0 0.0
    %2409 = vmatpush.msra.mxu0 %v2394
    %2410 = vmatpush.msra.mxu0 %v2393
    %2411 = vmatmul.f32.gmra.mxu0 %v1676
    %v2412 = vpop.f32.mrf.mxu0
    %v2413 = vadd.f32 %v1976, %v2412
    %2414 = vdwg.mxu0
    %vm2415 = vcmp.gt.f32.partialorder %v2413, 0.0
    %v2416 = vmul.f32 %v2413, 1.442695
    %v2417 = vpow.pop %v2416
    %v2418 = vsub.f32 %v2417, 1.0
    %v2419 = vsel %vm2415, %v2413, %v2418
    %v2421 = vsel %vm122, %v2419, 0
    %2423 = vmatpush.msra.mxu0 0.0
    %2424 = vmatpush.msra.mxu0 0.0
    %2425 = vmatpush.msra.mxu0 0.0
    %2426 = vmatpush.msra.mxu0 0.0
    %2427 = vmatpush.msra.mxu0 0.0
    %2428 = vmatpush.msra.mxu0 0.0
    %2429 = vmatpush.msra.mxu0 0.0
    %2430 = vmatpush.msra.mxu0 0.0
    %2431 = vmatpush.msra.mxu0 0.0
    %2432 = vmatpush.msra.mxu0 0.0
    %2433 = vmatpush.msra.mxu0 0.0
    %2434 = vmatpush.msra.mxu0 0.0
    %2435 = vmatpush.msra.mxu0 %v2011
    %2436 = vmatpush.msra.mxu0 %v2008
    %2437 = vmatpush.msra.mxu0 %v2005
    %2438 = vmatpush.msra.mxu0 %v2002
    %2439 = vmatmul.f32.gmra.mxu0 %v2421
    %v2440 = vpop.f32.mrf.mxu0
    %v2441 = vadd.f32 %v2017, %v2440
    %2442 = vdwg.mxu0
    %2443 = vmatpush.msra.mxu0 0.0
    %2444 = vmatpush.msra.mxu0 0.0
    %2445 = vmatpush.msra.mxu0 0.0
    %2446 = vmatpush.msra.mxu0 0.0
    %2447 = vmatpush.msra.mxu0 0.0
    %2448 = vmatpush.msra.mxu0 0.0
    %2449 = vmatpush.msra.mxu0 0.0
    %2450 = vmatpush.msra.mxu0 0.0
    %2451 = vmatpush.msra.mxu0 0.0
    %2452 = vmatpush.msra.mxu0 0.0
    %2453 = vmatpush.msra.mxu0 0.0
    %2454 = vmatpush.msra.mxu0 0.0
    %2455 = vmatpush.msra.mxu0 %v2012
    %2456 = vmatpush.msra.mxu0 %v2009
    %2457 = vmatpush.msra.mxu0 %v2006
    %2458 = vmatpush.msra.mxu0 %v2003
    %2459 = vmatmul.f32.gmra.mxu0 %v2421
    %v2460 = vpop.f32.mrf.mxu0
    %v2461 = vadd.f32 %v2018, %v2460
    %2462 = vdwg.mxu0
    %2463 = vmatpush.msra.mxu0 0.0
    %2464 = vmatpush.msra.mxu0 0.0
    %2465 = vmatpush.msra.mxu0 0.0
    %2466 = vmatpush.msra.mxu0 0.0
    %2467 = vmatpush.msra.mxu0 0.0
    %2468 = vmatpush.msra.mxu0 0.0
    %2469 = vmatpush.msra.mxu0 0.0
    %2470 = vmatpush.msra.mxu0 0.0
    %2471 = vmatpush.msra.mxu0 0.0
    %2472 = vmatpush.msra.mxu0 0.0
    %2473 = vmatpush.msra.mxu0 0.0
    %2474 = vmatpush.msra.mxu0 0.0
    %2475 = vmatpush.msra.mxu0 %v2013
    %2476 = vmatpush.msra.mxu0 %v2010
    %2477 = vmatpush.msra.mxu0 %v2007
    %2478 = vmatpush.msra.mxu0 %v2004
    %2479 = vmatmul.f32.gmra.mxu0 %v2421
    %v2480 = vpop.f32.mrf.mxu0
    %v2481 = vadd.f32 %v2019, %v2480
    %2482 = vdwg.mxu0
    %2483 = vmatpush.msra.mxu0 0.0
    %2484 = vmatpush.msra.mxu0 0.0
    %2485 = vmatpush.msra.mxu0 0.0
    %2486 = vmatpush.msra.mxu0 0.0
    %2487 = vmatpush.msra.mxu0 0.0
    %2488 = vmatpush.msra.mxu0 0.0
    %2489 = vmatpush.msra.mxu0 0.0
    %2490 = vmatpush.msra.mxu0 0.0
    %2491 = vmatpush.msra.mxu0 0.0
    %2492 = vmatpush.msra.mxu0 0.0
    %2493 = vmatpush.msra.mxu0 0.0
    %2494 = vmatpush.msra.mxu0 0.0
    %2495 = vmatpush.msra.mxu0 %v2095
    %2496 = vmatpush.msra.mxu0 %v2092
    %2497 = vmatpush.msra.mxu0 %v2089
    %2498 = vmatpush.msra.mxu0 %v2086
    %2499 = vmatmul.f32.gmra.mxu0 %v2216
    %v2500 = vpop.f32.mrf.mxu0
    %v2501 = vadd.f32 %v2101, %v2500
    %2502 = vdwg.mxu0
    %2503 = vmatpush.msra.mxu0 0.0
    %2504 = vmatpush.msra.mxu0 0.0
    %2505 = vmatpush.msra.mxu0 0.0
    %2506 = vmatpush.msra.mxu0 0.0
    %2507 = vmatpush.msra.mxu0 0.0
    %2508 = vmatpush.msra.mxu0 0.0
    %2509 = vmatpush.msra.mxu0 0.0
    %2510 = vmatpush.msra.mxu0 0.0
    %2511 = vmatpush.msra.mxu0 0.0
    %2512 = vmatpush.msra.mxu0 0.0
    %2513 = vmatpush.msra.mxu0 0.0
    %2514 = vmatpush.msra.mxu0 0.0
    %2515 = vmatpush.msra.mxu0 %v2096
    %2516 = vmatpush.msra.mxu0 %v2093
    %2517 = vmatpush.msra.mxu0 %v2090
    %2518 = vmatpush.msra.mxu0 %v2087
    %2519 = vmatmul.f32.gmra.mxu0 %v2216
    %v2520 = vpop.f32.mrf.mxu0
    %v2521 = vadd.f32 %v2102, %v2520
    %2522 = vdwg.mxu0
    %2523 = vmatpush.msra.mxu0 0.0
    %2524 = vmatpush.msra.mxu0 0.0
    %2525 = vmatpush.msra.mxu0 0.0
    %2526 = vmatpush.msra.mxu0 0.0
    %2527 = vmatpush.msra.mxu0 0.0
    %2528 = vmatpush.msra.mxu0 0.0
    %2529 = vmatpush.msra.mxu0 0.0
    %2530 = vmatpush.msra.mxu0 0.0
    %2531 = vmatpush.msra.mxu0 0.0
    %2532 = vmatpush.msra.mxu0 0.0
    %2533 = vmatpush.msra.mxu0 0.0
    %2534 = vmatpush.msra.mxu0 0.0
    %2535 = vmatpush.msra.mxu0 %v2097
    %2536 = vmatpush.msra.mxu0 %v2094
    %2537 = vmatpush.msra.mxu0 %v2091
    %2538 = vmatpush.msra.mxu0 %v2088
    %2539 = vmatmul.f32.gmra.mxu0 %v2216
    %v2540 = vpop.f32.mrf.mxu0
    %v2541 = vadd.f32 %v2103, %v2540
    %2542 = vdwg.mxu0
    %v2543 = vadd.f32 %v2441, %v2501
    %v2544 = vxor.u32 %v2543, 2147483648
    %v2545 = vmul.f32 %v2544, 1.442695
    %v2546 = vpow.pop %v2545
    %v2547 = vadd.f32 %v2546, 1.0
    %v2548 = vrcp.pop %v2547
    %v2549 = vmul.f32 %v2547, %v2548
    %v2550 = vsub.f32 1.0, %v2549
    %v2551 = vmul.f32 %v2548, %v2550
    %v2552 = vadd.f32 %v2548, %v2551
    %vm2553 = vweird.f32 %v2547
    %vm2554 = vweird.f32 %v2548
    %vm2555 = vmor %vm2553, %vm2554
    %v2556 = vsel %vm2555, %v2548, %v2552
    %v2557 = vand.u32 2147483647, %v2547
    %vm2558 = vcmp.eq.f32.partialorder %v2557, 8.507059e+37
    %v2559 = vand.u32 %v2547, 2147483648
    %v2560 = vor.u32 1.1754944e-38, %v2559
    %v2561 = vsel %vm2558, %v2560, %v2556
    %v2562 = vmul.f32 1.0, %v2561
    %v2563 = vadd.f32 %v2461, %v2521
    %v2564 = vxor.u32 %v2563, 2147483648
    %v2565 = vmul.f32 %v2564, 1.442695
    %v2566 = vpow.pop %v2565
    %v2567 = vadd.f32 %v2566, 1.0
    %v2568 = vrcp.pop %v2567
    %v2569 = vmul.f32 %v2567, %v2568
    %v2570 = vsub.f32 1.0, %v2569
    %v2571 = vmul.f32 %v2568, %v2570
    %v2572 = vadd.f32 %v2568, %v2571
    %vm2573 = vweird.f32 %v2567
    %vm2574 = vweird.f32 %v2568
    %vm2575 = vmor %vm2573, %vm2574
    %v2576 = vsel %vm2575, %v2568, %v2572
    %v2577 = vand.u32 2147483647, %v2567
    %vm2578 = vcmp.eq.f32.partialorder %v2577, 8.507059e+37
    %v2579 = vand.u32 %v2567, 2147483648
    %v2580 = vor.u32 1.1754944e-38, %v2579
    %v2581 = vsel %vm2578, %v2580, %v2576
    %v2582 = vmul.f32 1.0, %v2581
    %v2583 = vmul.f32 %v2562, %v2541
    %v2584 = vadd.f32 %v2481, %v2583
    %v2585 = vtanh.pop %v2584
    %v2586 = vsub.f32 1.0, %v2582
    %v2587 = vmul.f32 %v2586, %v2585
    %v2588 = vmul.f32 %v2582, %v2214
    %v2589 = vadd.f32 %v2587, %v2588
    %v2590 = vmax.f32 %v2589, 0.0
    %v2591 = vld [vmem:[%s6 + $0x78] sm:$0x1]
    %v2592 = vperm.slane %v2591, 0
    %2593 = vrot.lane.b32.xlu0 %v392, 123
    %v2594 = vpop.permute.xlu0 %2593
    %2595 = vrot.lane.b32.xlu0 %v393, 123
    %v2596 = vpop.permute.xlu0 %2595
    %2597 = vrot.lane.b32.xlu0 %v394, 123
    %v2598 = vpop.permute.xlu0 %2597
    %2599 = vrot.lane.b32.xlu0 %v395, 123
    %v2600 = vpop.permute.xlu0 %2599
    %v2606 = vsel %vm122, %v2590, 0
    %2608 = vmatpush.msra.mxu0 0.0
    %2609 = vmatpush.msra.mxu0 0.0
    %2610 = vmatpush.msra.mxu0 0.0
    %2611 = vmatpush.msra.mxu0 0.0
    %2612 = vmatpush.msra.mxu0 0.0
    %2613 = vmatpush.msra.mxu0 0.0
    %2614 = vmatpush.msra.mxu0 0.0
    %2615 = vmatpush.msra.mxu0 0.0
    %2616 = vmatpush.msra.mxu0 0.0
    %2617 = vmatpush.msra.mxu0 0.0
    %2618 = vmatpush.msra.mxu0 0.0
    %2619 = vmatpush.msra.mxu0 0.0
    %2620 = vmatpush.msra.mxu0 %v2600
    %2621 = vmatpush.msra.mxu0 %v2598
    %2622 = vmatpush.msra.mxu0 %v2596
    %2623 = vmatpush.msra.mxu0 %v2594
    %2624 = vmatmul.f32.gmra.mxu0 %v2606
    %v2625 = vpop.f32.mrf.mxu0
    %v2626 = vadd.f32 %v2592, %v2625
    %2627 = vdwg.mxu0
    %vm2628 = vcmask 1024
    %2629 = vst.msk [vmem:[%s10] sm:$0x3] %vm2628, %v2626
    // Predicated region
    $region46: #{attentive_fp_forward.1} parent=1 // pred_check
      _
    $region47: #{attentive_fp_forward.1} parent=1 // pred_check_branch
      %2631 = sbr.rel (0) target = $region49
    $region48: #{attentive_fp_forward.1} parent=1 // pred_region
      _
    $region49: #{attentive_fp_forward.1} parent=1 // pred_fallthru
      _
    // Predicated region
    $region50: #{attentive_fp_forward.1} parent=1 // pred_check
      _
    $region51: #{attentive_fp_forward.1} parent=1 // pred_check_branch
      %2633 = sbr.rel (0) target = $region53
    $region52: #{attentive_fp_forward.1} parent=1 // pred_region
      _
    $region53: #{attentive_fp_forward.1} parent=1 // pred_fallthru
      _
    %2634 = vsyncpa [#allocation3], 1

</llo_original>
